<compile_context>
chip_gen: v7x
topology: tpu7x:2x2x1
jax: 0.10.0
libtpu: 0.0.40
codegen_flags: <defaults>
</compile_context>

<pallas_src>
import functools

import jax
import jax.numpy as jnp
from jax import lax
from jax.experimental import pallas as pl
from jax.experimental.pallas import tpu as pltpu

_LANES = 128
_MIB = 1024 * 1024


def _round_up(v, m):
    return -(-v // m) * m


def _tpu_vmem_capacity_bytes():
    """Physical VMEM per TensorCore; falls back to the smallest (v7x) if unknown."""
    try:
        return int(pltpu.get_tpu_info().vmem_capacity_bytes)
    except Exception:
        return 64 * _MIB


def _pick_rows_per_tile(B, H, W, N, Nhp, cd_bytes, vmem_cap, min_grid_steps=8):
    """Largest row-block that fits the per-step working-set budget while keeping
    enough grid steps for the DMA pipeline to hide HBM latency."""
    budget = min(vmem_cap // 4, 24 * _MIB)

    def working_set_bytes(th):
        tb, tbe = th * W, (th + 2) * W
        io = 4 * tb * N * 4                    # double-buffered in + out tiles
        h1 = tbe * Nhp * 4                     # f32 post-ReLU hidden
        shifted = 5 * tbe * Nhp * cd_bytes     # left/right + 3-wide cext
        acc = 2 * tb * Nhp * 4                 # conv3x3 accumulator / h2
        return io + h1 + shifted + acc

    divisors = [t for t in range(1, H + 1) if H % t == 0]
    fitting = [t for t in divisors if working_set_bytes(t) <= budget] or [1]
    deep = [t for t in fitting if B * (H // t) >= min_grid_steps]
    return max(deep) if deep else max(fitting)


def _residual_unit_kernel(xm_ref, xt_ref, xb_ref, w1_ref, b1_ref, w3_ref,
                          b3_ref, w2_ref, b2_ref, o_ref, *,
                          W, TH, R, compute_dtype):
    r = pl.program_id(1)
    TB = TH * W                       # flat spatial positions in this tile
    TBe = TB + 2 * W                  # + one halo image-row above / below
    cd = compute_dtype

    x = xm_ref[0]                                             # (TB, N)  f32
    # Halo rows; zeroed at the image top/bottom (conv3x3 'same' zero padding).
    top = xt_ref[0] * (r > 0).astype(jnp.float32)             # (W, N)
    bot = xb_ref[0] * (r < R - 1).astype(jnp.float32)         # (W, N)
    xext = jnp.concatenate([top, x, bot], axis=0)             # (TBe, N)

    # --- conv1x1 (N -> Nh) + ReLU on tile + halo rows (channel matmul, MXU) ---
    h1 = jnp.dot(xext.astype(cd), w1_ref[...],
                 preferred_element_type=jnp.float32) + b1_ref[...]
    h1 = jnp.maximum(h1, 0.0)                                 # (TBe, Nhp) f32
    Nhp = h1.shape[-1]

    # --- conv3x3 (stride 1, pad 1) ---
    # Horizontal taps via XLU rolls + narrow (TBe, 1) column masks; the single
    # wrapped row of each roll sits exactly where the mask is already zero, so
    # roll + mask reproduces the zero-padded shift.
    if W & (W - 1) == 0:
        col = lax.broadcasted_iota(jnp.int32, (TBe, 1), 0) & (W - 1)
    else:
        col = lax.broadcasted_iota(jnp.int32, (TBe, 1), 0) % W
    mask_l = (col > 0).astype(cd)            # kx=0 (ox=-1) invalid at column 0
    mask_r = (col < W - 1).astype(cd)        # kx=2 (ox=+1) invalid at column W-1

    h1c = h1.astype(cd)
    left = pltpu.roll(h1c, shift=1, axis=0) * mask_l          # win[q] = h1[q-1]
    right = pltpu.roll(h1c, shift=TBe - 1, axis=0) * mask_r   # win[q] = h1[q+1]

    # (TBe, 3*Nhp): lane-aligned concat [kx=0 | kx=1 | kx=2], matching w3 layout.
    cext = jnp.concatenate([left, h1c, right], axis=-1)

    # One fused matmul per kernel row (K = 3*Nhp); vertical shifts are
    # sublane-aligned static slices (offset ky*W, W % 8 == 0).  The accumulator
    # is initialised by the first matmul — no full-tile zero-fill.
    acc = jnp.dot(cext[0:TB, :], w3_ref[0], preferred_element_type=jnp.float32)
    for ky in (1, 2):
        acc = acc + jnp.dot(cext[ky * W:ky * W + TB, :], w3_ref[ky],
                            preferred_element_type=jnp.float32)
    h2 = jnp.maximum(acc + b3_ref[...], 0.0)                  # (TB, Nhp)

    # --- conv1x1 (Nh -> N) + bias + residual + ReLU ---
    out = jnp.dot(h2.astype(cd), w2_ref[...],
                  preferred_element_type=jnp.float32) + b2_ref[...] + x
    o_ref[0] = jnp.maximum(out, 0.0).astype(o_ref.dtype)


def residual_unit_pallas(x, params, *, data_format="NCHW", rows_per_tile=None,
                         compute_dtype=jnp.float32, vmem_limit_bytes=None):
    """ResidualUnit forward.

    x: (B, N, H, W) for data_format="NCHW" (PyTorch convention) or (B, H, W, N)
       for "NHWC" (zero-copy path — preferred when the whole network keeps
       activations channels-last).
    params: (w1 (N,Nh), b1 (1,Nh), w3 (9,Nh,Nh) [tap=ky*3+kx, cin, cout],
             b3 (1,Nh), w2 (Nh,N), b2 (1,N)).
    compute_dtype: jnp.float32 (exact) or jnp.bfloat16 (faster MXU on every
    generation; accumulation, biases and the residual stay f32).
    """
    w1, b1, w3, b3, w2, b2 = params
    if data_format == "NCHW":
        B, N, H, W = x.shape
        x_flat = jnp.transpose(x, (0, 2, 3, 1)).reshape(B, H * W, N)
    elif data_format == "NHWC":
        B, H, W, N = x.shape
        x_flat = x.reshape(B, H * W, N)
    else:
        raise ValueError(f"unknown data_format {data_format!r}")

    Nh = N // 2
    HW = H * W
    # TODO(synk): widths that are not a multiple of 8 would need padded rows or
    # Element-indexed halo blocks; TCM feature maps are power-of-two sized.
    assert W % 8 == 0, "kernel requires W % 8 == 0"

    # Only the hidden channel dim is lane-padded (VMEM intermediates); the HBM
    # input/output stay at true width N (full-dim last-axis blocks are legal).
    Nhp = _round_up(max(Nh, _LANES), _LANES)
    cd_bytes = jnp.dtype(compute_dtype).itemsize

    vmem_cap = _tpu_vmem_capacity_bytes()
    if vmem_limit_bytes is None:
        vmem_limit_bytes = 96 * _MIB if vmem_cap >= 100 * _MIB else 48 * _MIB

    if rows_per_tile is None:
        rows_per_tile = _pick_rows_per_tile(B, H, W, N, Nhp, cd_bytes, vmem_cap)
    TH = rows_per_tile
    assert H % TH == 0, "rows_per_tile must divide H"
    R = H // TH
    TB = TH * W

    # ---- parameter padding / re-layout (host side, once) ----
    def pad_cols(a, cols_to):
        return jnp.pad(a, ((0, 0), (0, cols_to - a.shape[1])))

    w1p = pad_cols(w1, Nhp).astype(compute_dtype)                       # (N, Nhp)
    b1p = pad_cols(b1, Nhp).astype(jnp.float32)                         # (1, Nhp)
    w3p = jnp.pad(w3.reshape(3, 3, Nh, Nh),
                  ((0, 0), (0, 0), (0, Nhp - Nh), (0, Nhp - Nh)))
    w3p = w3p.reshape(3, 3 * Nhp, Nhp).astype(compute_dtype)            # (3,3Nhp,Nhp)
    b3p = pad_cols(b3, Nhp).astype(jnp.float32)                         # (1, Nhp)
    w2p = jnp.pad(w2, ((0, Nhp - Nh), (0, 0))).astype(compute_dtype)    # (Nhp, N)
    b2p = b2.astype(jnp.float32)                                        # (1, N)

    kernel = functools.partial(_residual_unit_kernel, W=W, TH=TH, R=R,
                               compute_dtype=compute_dtype)

    # Halo rows fetched via two extra single-image-row BlockSpecs on x
    # (block index == image-row index since their HW block size is W).
    tile_map = lambda b, r: (b, r, 0)
    top_map = lambda b, r: (b, jnp.maximum(r * TH - 1, 0), 0)
    bot_map = lambda b, r: (b, jnp.minimum((r + 1) * TH, H - 1), 0)
    const2 = lambda b, r: (0, 0)
    const3 = lambda b, r: (0, 0, 0)

    wbytes = sum(int(a.size) * a.dtype.itemsize
                 for a in (w1p, b1p, w3p, b3p, w2p, b2p))
    cost = pl.CostEstimate(
        flops=2 * B * HW * (N * Nhp + 9 * Nhp * Nhp + Nhp * N),
        transcendentals=0,
        bytes_accessed=2 * B * HW * N * 4 + wbytes)

    def run(single_buffer_weights):
        wkw = ({"pipeline_mode": pl.Buffered(1)} if single_buffer_weights else {})
        in_specs = [
            pl.BlockSpec((1, TB, N), tile_map),                 # x tile
            pl.BlockSpec((1, W, N), top_map),                   # top halo row
            pl.BlockSpec((1, W, N), bot_map),                   # bottom halo row
            pl.BlockSpec((N, Nhp), const2, **wkw),              # w1
            pl.BlockSpec((1, Nhp), const2, **wkw),              # b1
            pl.BlockSpec((3, 3 * Nhp, Nhp), const3, **wkw),     # w3 (fused taps)
            pl.BlockSpec((1, Nhp), const2, **wkw),              # b3
            pl.BlockSpec((Nhp, N), const2, **wkw),              # w2
            pl.BlockSpec((1, N), const2, **wkw),                # b2
        ]
        return pl.pallas_call(
            kernel,
            out_shape=jax.ShapeDtypeStruct((B, HW, N), jnp.float32),
            grid_spec=pltpu.PrefetchScalarGridSpec(
                num_scalar_prefetch=0,
                grid=(B, R),
                in_specs=in_specs,
                out_specs=pl.BlockSpec((1, TB, N), tile_map)),
            compiler_params=pltpu.CompilerParams(
                dimension_semantics=("parallel", "parallel"),
                vmem_limit_bytes=vmem_limit_bytes),
            cost_estimate=cost,
        )(x_flat, x_flat, x_flat, w1p, b1p, w3p, b3p, w2p, b2p)

    try:
        # Loop-invariant weights/biases don't need double buffers.
        out_flat = run(True)
    except Exception:
        # Fallback: default double-buffered specs (previously validated config).
        out_flat = run(False)

    if data_format == "NCHW":
        return jnp.transpose(out_flat.reshape(B, H, W, N), (0, 3, 1, 2))
    return out_flat.reshape(B, H, W, N)


def residual_unit_ref(x, params):
    """Pure-JAX NCHW reference matching nn.Conv2d semantics."""
    w1, b1, w3, b3, w2, b2 = params
    N = x.shape[1]
    Nh = N // 2
    dn = ("NCHW", "OIHW", "NCHW")
    k1 = jnp.transpose(w1)[:, :, None, None]                        # (Nh, N, 1, 1)
    k3 = jnp.transpose(w3.reshape(3, 3, Nh, Nh), (3, 2, 0, 1))      # (Nh, Nh, 3, 3)
    k2 = jnp.transpose(w2)[:, :, None, None]                        # (N, Nh, 1, 1)

    h = lax.conv_general_dilated(x, k1, (1, 1), "VALID", dimension_numbers=dn)
    h = jax.nn.relu(h + b1.reshape(1, Nh, 1, 1))
    h = lax.conv_general_dilated(h, k3, (1, 1), ((1, 1), (1, 1)),
                                 dimension_numbers=dn)
    h = jax.nn.relu(h + b3.reshape(1, Nh, 1, 1))
    h = lax.conv_general_dilated(h, k2, (1, 1), "VALID", dimension_numbers=dn)
    h = h + b2.reshape(1, N, 1, 1)
    return jax.nn.relu(h + x)


def make_params(key, N):
    Nh = N // 2
    ks = jax.random.split(key, 6)
    w1 = 0.3 * jax.random.normal(ks[0], (N, Nh), jnp.float32)       # x @ w1
    b1 = 0.1 * jax.random.normal(ks[1], (1, Nh), jnp.float32)
    w3 = 0.3 * jax.random.normal(ks[2], (9, Nh, Nh), jnp.float32)   # [tap, cin, cout]
    b3 = 0.1 * jax.random.normal(ks[3], (1, Nh), jnp.float32)
    w2 = 0.3 * jax.random.normal(ks[4], (Nh, N), jnp.float32)       # h @ w2
    b2 = 0.1 * jax.random.normal(ks[5], (1, N), jnp.float32)
    return (w1, b1, w3, b3, w2, b2)


if __name__ == "__main__":
    B, N, H, W = 2, 4, 16, 16
    root = jax.random.PRNGKey(0)
    k_x, k_p = jax.random.split(root)

    x = jax.random.normal(k_x, (B, N, H, W), jnp.float32)
    params = make_params(k_p, N)

    ref = jax.block_until_ready(residual_unit_ref(x, params))

    # Auto-selected row tiling (exercises halo rows + boundary masks), f32 MXU.
    out_auto = jax.block_until_ready(residual_unit_pallas(x, params))
    assert out_auto.shape == (B, N, H, W)
    assert jnp.allclose(out_auto, ref, atol=1e-4, rtol=1e-4), (
        float(jnp.max(jnp.abs(out_auto - ref))))

    # Whole-image tile (R=1 boundary path), f32.
    out_whole = jax.block_until_ready(
        residual_unit_pallas(x, params, rows_per_tile=H))
    assert jnp.allclose(out_whole, ref, atol=1e-4, rtol=1e-4), (
        float(jnp.max(jnp.abs(out_whole - ref))))

    # Channels-last (zero-copy layout) path.
    out_nhwc = jax.block_until_ready(
        residual_unit_pallas(jnp.transpose(x, (0, 2, 3, 1)), params,
                             data_format="NHWC"))
    assert jnp.allclose(jnp.transpose(out_nhwc, (0, 3, 1, 2)), ref,
                        atol=1e-4, rtol=1e-4)

    # bf16 MXU operands (f32 accumulation) — throughput mode on all generations.
    out_bf16 = jax.block_until_ready(
        residual_unit_pallas(x, params, compute_dtype=jnp.bfloat16))
    assert jnp.allclose(out_bf16, ref, atol=1e-1, rtol=1e-1), (
        float(jnp.max(jnp.abs(out_bf16 - ref))))

    print("KERNEL_OK")
</pallas_src>

<mosaic_0001>
module attributes {stable_mosaic.version = 11 : i64} {
  func.func @_residual_unit_kernel(%arg0: i32, %arg1: i32, %arg2: memref<1x64x4xf32, #tpu.memory_space<vmem>>, %arg3: memref<1x16x4xf32, #tpu.memory_space<vmem>>, %arg4: memref<1x16x4xf32, #tpu.memory_space<vmem>>, %arg5: memref<4x128xf32, #tpu.memory_space<vmem>>, %arg6: memref<1x128xf32, #tpu.memory_space<vmem>>, %arg7: memref<3x384x128xf32, #tpu.memory_space<vmem>>, %arg8: memref<1x128xf32, #tpu.memory_space<vmem>>, %arg9: memref<128x4xf32, #tpu.memory_space<vmem>>, %arg10: memref<1x4xf32, #tpu.memory_space<vmem>>, %arg11: memref<1x64x4xf32, #tpu.memory_space<vmem>>) attributes {dimension_semantics = [#tpu.dimension_semantics<parallel>, #tpu.dimension_semantics<parallel>], iteration_bounds = array<i64: 2, 4>, scalar_prefetch = 0 : i64, scratch_operands = 0 : i64, tpu.core_type = #tpu.core_type<tc>, window_params = [{transform_indices = @transform_0, window_bounds = array<i64: 1, 64, 4>}, {transform_indices = @transform_1, window_bounds = array<i64: 1, 16, 4>}, {transform_indices = @transform_2, window_bounds = array<i64: 1, 16, 4>}, {pipeline_mode = #tpu.pipeline_mode<synchronous>, transform_indices = @transform_3, window_bounds = array<i64: 4, 128>}, {pipeline_mode = #tpu.pipeline_mode<synchronous>, transform_indices = @transform_4, window_bounds = array<i64: 1, 128>}, {pipeline_mode = #tpu.pipeline_mode<synchronous>, transform_indices = @transform_5, window_bounds = array<i64: 3, 384, 128>}, {pipeline_mode = #tpu.pipeline_mode<synchronous>, transform_indices = @transform_6, window_bounds = array<i64: 1, 128>}, {pipeline_mode = #tpu.pipeline_mode<synchronous>, transform_indices = @transform_7, window_bounds = array<i64: 128, 4>}, {pipeline_mode = #tpu.pipeline_mode<synchronous>, transform_indices = @transform_8, window_bounds = array<i64: 1, 4>}, {transform_indices = @transform_9, window_bounds = array<i64: 1, 64, 4>}]} {
    %c0 = arith.constant 0 : index
    %c0_0 = arith.constant 0 : index
    %c0_1 = arith.constant 0 : index
    %0 = vector.load %arg2[%c0, %c0_0, %c0_1] : memref<1x64x4xf32, #tpu.memory_space<vmem>>, vector<1x64x4xf32>
    %1 = vector.shape_cast %0 : vector<1x64x4xf32> to vector<64x4xf32>
    %c0_2 = arith.constant 0 : index
    %c0_3 = arith.constant 0 : index
    %c0_4 = arith.constant 0 : index
    %2 = vector.load %arg3[%c0_2, %c0_3, %c0_4] : memref<1x16x4xf32, #tpu.memory_space<vmem>>, vector<1x16x4xf32>
    %3 = vector.shape_cast %2 : vector<1x16x4xf32> to vector<16x4xf32>
    %c0_i32 = arith.constant 0 : i32
    %4 = arith.cmpi sgt, %arg1, %c0_i32 : i32
    %5 = arith.extui %4 : i1 to i32
    %6 = arith.sitofp %5 : i32 to f32
    %7 = vector.broadcast %6 : f32 to vector<16x4xf32>
    %8 = arith.mulf %3, %7 : vector<16x4xf32>
    %c0_5 = arith.constant 0 : index
    %c0_6 = arith.constant 0 : index
    %c0_7 = arith.constant 0 : index
    %9 = vector.load %arg4[%c0_5, %c0_6, %c0_7] : memref<1x16x4xf32, #tpu.memory_space<vmem>>, vector<1x16x4xf32>
    %10 = vector.shape_cast %9 : vector<1x16x4xf32> to vector<16x4xf32>
    %c3_i32 = arith.constant 3 : i32
    %11 = arith.cmpi slt, %arg1, %c3_i32 : i32
    %12 = arith.extui %11 : i1 to i32
    %13 = arith.sitofp %12 : i32 to f32
    %14 = vector.broadcast %13 : f32 to vector<16x4xf32>
    %15 = arith.mulf %10, %14 : vector<16x4xf32>
    %16 = tpu.concatenate %8, %1, %15 in 0 : vector<16x4xf32>, vector<64x4xf32>, vector<16x4xf32> -> vector<96x4xf32>
    %c0_8 = arith.constant 0 : index
    %c0_9 = arith.constant 0 : index
    %17 = vector.load %arg5[%c0_8, %c0_9] : memref<4x128xf32, #tpu.memory_space<vmem>>, vector<4x128xf32>
    %cst = arith.constant dense<0.000000e+00> : vector<96x128xf32>
    %18 = tpu.matmul %16, %17, %cst {dimension_numbers = #tpu.dot_dimension_numbers<[1], [0], [0], [1], [0, 0, 1, 1], [], []>} : vector<96x4xf32>, vector<4x128xf32>, vector<96x128xf32> -> vector<96x128xf32>
    %c0_10 = arith.constant 0 : index
    %c0_11 = arith.constant 0 : index
    %19 = vector.load %arg6[%c0_10, %c0_11] : memref<1x128xf32, #tpu.memory_space<vmem>>, vector<1x128xf32>
    %20 = vector.broadcast %19 : vector<1x128xf32> to vector<96x128xf32>
    %21 = arith.addf %18, %20 : vector<96x128xf32>
    %cst_12 = arith.constant 0.000000e+00 : f32
    %22 = vector.broadcast %cst_12 : f32 to vector<96x128xf32>
    %23 = arith.maximumf %21, %22 : vector<96x128xf32>
    %24 = tpu.iota {dimensions = array<i32: 0>} : vector<96x1xi32>
    %c15_i32 = arith.constant 15 : i32
    %25 = vector.broadcast %c15_i32 : i32 to vector<96x1xi32>
    %26 = arith.andi %24, %25 : vector<96x1xi32>
    %c0_i32_13 = arith.constant 0 : i32
    %27 = vector.broadcast %c0_i32_13 : i32 to vector<96x1xi32>
    %28 = arith.cmpi sgt, %26, %27 : vector<96x1xi32>
    %29 = arith.extui %28 : vector<96x1xi1> to vector<96x1xi32>
    %30 = arith.sitofp %29 : vector<96x1xi32> to vector<96x1xf32>
    %c15_i32_14 = arith.constant 15 : i32
    %31 = vector.broadcast %c15_i32_14 : i32 to vector<96x1xi32>
    %32 = arith.cmpi slt, %26, %31 : vector<96x1xi32>
    %33 = arith.extui %32 : vector<96x1xi1> to vector<96x1xi32>
    %34 = arith.sitofp %33 : vector<96x1xi32> to vector<96x1xf32>
    %c1_i32 = arith.constant 1 : i32
    %35 = tpu.dynamic_rotate %23 by %c1_i32 dim 0 : vector<96x128xf32>, i32 -> vector<96x128xf32>
    %36 = vector.broadcast %30 : vector<96x1xf32> to vector<96x128xf32>
    %37 = arith.mulf %35, %36 : vector<96x128xf32>
    %c95_i32 = arith.constant 95 : i32
    %38 = tpu.dynamic_rotate %23 by %c95_i32 dim 0 : vector<96x128xf32>, i32 -> vector<96x128xf32>
    %39 = vector.broadcast %34 : vector<96x1xf32> to vector<96x128xf32>
    %40 = arith.mulf %38, %39 : vector<96x128xf32>
    %41 = tpu.concatenate %37, %23, %40 in 1 : vector<96x128xf32>, vector<96x128xf32>, vector<96x128xf32> -> vector<96x384xf32>
    %42 = vector.extract_strided_slice %41 {offsets = [0, 0], sizes = [64, 384], strides = [1, 1]} : vector<96x384xf32> to vector<64x384xf32>
    %c0_15 = arith.constant 0 : index
    %c0_16 = arith.constant 0 : index
    %c0_17 = arith.constant 0 : index
    %43 = vector.load %arg7[%c0_15, %c0_16, %c0_17] : memref<3x384x128xf32, #tpu.memory_space<vmem>>, vector<1x384x128xf32>
    %44 = vector.shape_cast %43 : vector<1x384x128xf32> to vector<384x128xf32>
    %cst_18 = arith.constant dense<0.000000e+00> : vector<64x128xf32>
    %45 = tpu.matmul %42, %44, %cst_18 {dimension_numbers = #tpu.dot_dimension_numbers<[1], [0], [0], [1], [0, 0, 1, 1], [], []>} : vector<64x384xf32>, vector<384x128xf32>, vector<64x128xf32> -> vector<64x128xf32>
    %46 = vector.extract_strided_slice %41 {offsets = [16, 0], sizes = [64, 384], strides = [1, 1]} : vector<96x384xf32> to vector<64x384xf32>
    %c1 = arith.constant 1 : index
    %c0_19 = arith.constant 0 : index
    %c0_20 = arith.constant 0 : index
    %47 = vector.load %arg7[%c1, %c0_19, %c0_20] : memref<3x384x128xf32, #tpu.memory_space<vmem>>, vector<1x384x128xf32>
    %48 = vector.shape_cast %47 : vector<1x384x128xf32> to vector<384x128xf32>
    %cst_21 = arith.constant dense<0.000000e+00> : vector<64x128xf32>
    %49 = tpu.matmul %46, %48, %cst_21 {dimension_numbers = #tpu.dot_dimension_numbers<[1], [0], [0], [1], [0, 0, 1, 1], [], []>} : vector<64x384xf32>, vector<384x128xf32>, vector<64x128xf32> -> vector<64x128xf32>
    %50 = arith.addf %45, %49 : vector<64x128xf32>
    %51 = vector.extract_strided_slice %41 {offsets = [32, 0], sizes = [64, 384], strides = [1, 1]} : vector<96x384xf32> to vector<64x384xf32>
    %c2 = arith.constant 2 : index
    %c0_22 = arith.constant 0 : index
    %c0_23 = arith.constant 0 : index
    %52 = vector.load %arg7[%c2, %c0_22, %c0_23] : memref<3x384x128xf32, #tpu.memory_space<vmem>>, vector<1x384x128xf32>
    %53 = vector.shape_cast %52 : vector<1x384x128xf32> to vector<384x128xf32>
    %cst_24 = arith.constant dense<0.000000e+00> : vector<64x128xf32>
    %54 = tpu.matmul %51, %53, %cst_24 {dimension_numbers = #tpu.dot_dimension_numbers<[1], [0], [0], [1], [0, 0, 1, 1], [], []>} : vector<64x384xf32>, vector<384x128xf32>, vector<64x128xf32> -> vector<64x128xf32>
    %55 = arith.addf %50, %54 : vector<64x128xf32>
    %c0_25 = arith.constant 0 : index
    %c0_26 = arith.constant 0 : index
    %56 = vector.load %arg8[%c0_25, %c0_26] : memref<1x128xf32, #tpu.memory_space<vmem>>, vector<1x128xf32>
    %57 = vector.broadcast %56 : vector<1x128xf32> to vector<64x128xf32>
    %58 = arith.addf %55, %57 : vector<64x128xf32>
    %cst_27 = arith.constant 0.000000e+00 : f32
    %59 = vector.broadcast %cst_27 : f32 to vector<64x128xf32>
    %60 = arith.maximumf %58, %59 : vector<64x128xf32>
    %c0_28 = arith.constant 0 : index
    %c0_29 = arith.constant 0 : index
    %61 = vector.load %arg9[%c0_28, %c0_29] : memref<128x4xf32, #tpu.memory_space<vmem>>, vector<128x4xf32>
    %cst_30 = arith.constant dense<0.000000e+00> : vector<64x4xf32>
    %62 = tpu.matmul %60, %61, %cst_30 {dimension_numbers = #tpu.dot_dimension_numbers<[1], [0], [0], [1], [0, 0, 1, 1], [], []>} : vector<64x128xf32>, vector<128x4xf32>, vector<64x4xf32> -> vector<64x4xf32>
    %c0_31 = arith.constant 0 : index
    %c0_32 = arith.constant 0 : index
    %63 = vector.load %arg10[%c0_31, %c0_32] : memref<1x4xf32, #tpu.memory_space<vmem>>, vector<1x4xf32>
    %64 = vector.broadcast %63 : vector<1x4xf32> to vector<64x4xf32>
    %65 = arith.addf %62, %64 : vector<64x4xf32>
    %66 = arith.addf %65, %1 : vector<64x4xf32>
    %cst_33 = arith.constant 0.000000e+00 : f32
    %67 = vector.broadcast %cst_33 : f32 to vector<64x4xf32>
    %68 = arith.maximumf %66, %67 : vector<64x4xf32>
    %c0_34 = arith.constant 0 : index
    %c0_35 = arith.constant 0 : index
    %c0_36 = arith.constant 0 : index
    %69 = vector.load %arg11[%c0_34, %c0_35, %c0_36] : memref<1x64x4xf32, #tpu.memory_space<vmem>>, vector<1x64x4xf32>
    %70 = vector.shape_cast %69 : vector<1x64x4xf32> to vector<64x4xf32>
    %71 = vector.shape_cast %68 : vector<64x4xf32> to vector<1x64x4xf32>
    tpu.vector_store %arg11[%c0_34, %c0_35, %c0_36], %71 {strides = array<i32>} : memref<1x64x4xf32, #tpu.memory_space<vmem>>, vector<1x64x4xf32>,
    return
  }
  func.func @transform_0(%arg0: i32, %arg1: i32) -> (i32, i32, i32) {
    %c0_i32 = arith.constant 0 : i32
    %c0_i32_0 = arith.constant 0 : i32
    return %arg0, %arg1, %c0_i32 : i32, i32, i32
  }
  func.func @transform_1(%arg0: i32, %arg1: i32) -> (i32, i32, i32) {
    %c4_i32 = arith.constant 4 : i32
    %0 = arith.muli %arg1, %c4_i32 : i32
    %c1_i32 = arith.constant 1 : i32
    %1 = arith.subi %0, %c1_i32 : i32
    %c0_i32 = arith.constant 0 : i32
    %2 = arith.maxsi %1, %c0_i32 : i32
    %c0_i32_0 = arith.constant 0 : i32
    %c0_i32_1 = arith.constant 0 : i32
    return %arg0, %2, %c0_i32_0 : i32, i32, i32
  }
  func.func @transform_2(%arg0: i32, %arg1: i32) -> (i32, i32, i32) {
    %c1_i32 = arith.constant 1 : i32
    %0 = arith.addi %arg1, %c1_i32 : i32
    %c4_i32 = arith.constant 4 : i32
    %1 = arith.muli %0, %c4_i32 : i32
    %c15_i32 = arith.constant 15 : i32
    %2 = arith.minsi %1, %c15_i32 : i32
    %c0_i32 = arith.constant 0 : i32
    %c0_i32_0 = arith.constant 0 : i32
    return %arg0, %2, %c0_i32 : i32, i32, i32
  }
  func.func @transform_3(%arg0: i32, %arg1: i32) -> (i32, i32) {
    %c0_i32 = arith.constant 0 : i32
    %c0_i32_0 = arith.constant 0 : i32
    %c0_i32_1 = arith.constant 0 : i32
    return %c0_i32, %c0_i32_0 : i32, i32
  }
  func.func @transform_4(%arg0: i32, %arg1: i32) -> (i32, i32) {
    %c0_i32 = arith.constant 0 : i32
    %c0_i32_0 = arith.constant 0 : i32
    %c0_i32_1 = arith.constant 0 : i32
    return %c0_i32, %c0_i32_0 : i32, i32
  }
  func.func @transform_5(%arg0: i32, %arg1: i32) -> (i32, i32, i32) {
    %c0_i32 = arith.constant 0 : i32
    %c0_i32_0 = arith.constant 0 : i32
    %c0_i32_1 = arith.constant 0 : i32
    %c0_i32_2 = arith.constant 0 : i32
    return %c0_i32, %c0_i32_0, %c0_i32_1 : i32, i32, i32
  }
  func.func @transform_6(%arg0: i32, %arg1: i32) -> (i32, i32) {
    %c0_i32 = arith.constant 0 : i32
    %c0_i32_0 = arith.constant 0 : i32
    %c0_i32_1 = arith.constant 0 : i32
    return %c0_i32, %c0_i32_0 : i32, i32
  }
  func.func @transform_7(%arg0: i32, %arg1: i32) -> (i32, i32) {
    %c0_i32 = arith.constant 0 : i32
    %c0_i32_0 = arith.constant 0 : i32
    %c0_i32_1 = arith.constant 0 : i32
    return %c0_i32, %c0_i32_0 : i32, i32
  }
  func.func @transform_8(%arg0: i32, %arg1: i32) -> (i32, i32) {
    %c0_i32 = arith.constant 0 : i32
    %c0_i32_0 = arith.constant 0 : i32
    %c0_i32_1 = arith.constant 0 : i32
    return %c0_i32, %c0_i32_0 : i32, i32
  }
  func.func @transform_9(%arg0: i32, %arg1: i32) -> (i32, i32, i32) {
    %c0_i32 = arith.constant 0 : i32
    %c0_i32_0 = arith.constant 0 : i32
    return %arg0, %arg1, %c0_i32 : i32, i32, i32
  }
}

module attributes {stable_mosaic.version = 11 : i64} {
  func.func @_residual_unit_kernel(%arg0: i32, %arg1: i32, %arg2: memref<1x64x4xf32, #tpu.memory_space<vmem>>, %arg3: memref<1x16x4xf32, #tpu.memory_space<vmem>>, %arg4: memref<1x16x4xf32, #tpu.memory_space<vmem>>, %arg5: memref<4x128xf32, #tpu.memory_space<vmem>>, %arg6: memref<1x128xf32, #tpu.memory_space<vmem>>, %arg7: memref<3x384x128xf32, #tpu.memory_space<vmem>>, %arg8: memref<1x128xf32, #tpu.memory_space<vmem>>, %arg9: memref<128x4xf32, #tpu.memory_space<vmem>>, %arg10: memref<1x4xf32, #tpu.memory_space<vmem>>, %arg11: memref<1x64x4xf32, #tpu.memory_space<vmem>>) attributes {dimension_semantics = [#tpu.dimension_semantics<parallel>, #tpu.dimension_semantics<parallel>], iteration_bounds = array<i64: 2, 4>, scalar_prefetch = 0 : i64, scratch_operands = 0 : i64, tpu.core_type = #tpu.core_type<tc>, window_params = [{transform_indices = @transform_0, window_bounds = array<i64: 1, 64, 4>}, {transform_indices = @transform_1, window_bounds = array<i64: 1, 16, 4>}, {transform_indices = @transform_2, window_bounds = array<i64: 1, 16, 4>}, {pipeline_mode = #tpu.pipeline_mode<synchronous>, transform_indices = @transform_3, window_bounds = array<i64: 4, 128>}, {pipeline_mode = #tpu.pipeline_mode<synchronous>, transform_indices = @transform_4, window_bounds = array<i64: 1, 128>}, {pipeline_mode = #tpu.pipeline_mode<synchronous>, transform_indices = @transform_5, window_bounds = array<i64: 3, 384, 128>}, {pipeline_mode = #tpu.pipeline_mode<synchronous>, transform_indices = @transform_6, window_bounds = array<i64: 1, 128>}, {pipeline_mode = #tpu.pipeline_mode<synchronous>, transform_indices = @transform_7, window_bounds = array<i64: 128, 4>}, {pipeline_mode = #tpu.pipeline_mode<synchronous>, transform_indices = @transform_8, window_bounds = array<i64: 1, 4>}, {transform_indices = @transform_9, window_bounds = array<i64: 1, 64, 4>}]} {
    %c0 = arith.constant 0 : index
    %c0_0 = arith.constant 0 : index
    %c0_1 = arith.constant 0 : index
    %0 = vector.load %arg2[%c0, %c0_0, %c0_1] : memref<1x64x4xf32, #tpu.memory_space<vmem>>, vector<1x64x4xf32>
    %1 = vector.shape_cast %0 : vector<1x64x4xf32> to vector<64x4xf32>
    %c0_2 = arith.constant 0 : index
    %c0_3 = arith.constant 0 : index
    %c0_4 = arith.constant 0 : index
    %2 = vector.load %arg3[%c0_2, %c0_3, %c0_4] : memref<1x16x4xf32, #tpu.memory_space<vmem>>, vector<1x16x4xf32>
    %3 = vector.shape_cast %2 : vector<1x16x4xf32> to vector<16x4xf32>
    %c0_i32 = arith.constant 0 : i32
    %4 = arith.cmpi sgt, %arg1, %c0_i32 : i32
    %5 = arith.extui %4 : i1 to i32
    %6 = arith.sitofp %5 : i32 to f32
    %7 = vector.broadcast %6 : f32 to vector<16x4xf32>
    %8 = arith.mulf %3, %7 : vector<16x4xf32>
    %c0_5 = arith.constant 0 : index
    %c0_6 = arith.constant 0 : index
    %c0_7 = arith.constant 0 : index
    %9 = vector.load %arg4[%c0_5, %c0_6, %c0_7] : memref<1x16x4xf32, #tpu.memory_space<vmem>>, vector<1x16x4xf32>
    %10 = vector.shape_cast %9 : vector<1x16x4xf32> to vector<16x4xf32>
    %c3_i32 = arith.constant 3 : i32
    %11 = arith.cmpi slt, %arg1, %c3_i32 : i32
    %12 = arith.extui %11 : i1 to i32
    %13 = arith.sitofp %12 : i32 to f32
    %14 = vector.broadcast %13 : f32 to vector<16x4xf32>
    %15 = arith.mulf %10, %14 : vector<16x4xf32>
    %16 = tpu.concatenate %8, %1, %15 in 0 : vector<16x4xf32>, vector<64x4xf32>, vector<16x4xf32> -> vector<96x4xf32>
    %c0_8 = arith.constant 0 : index
    %c0_9 = arith.constant 0 : index
    %17 = vector.load %arg5[%c0_8, %c0_9] : memref<4x128xf32, #tpu.memory_space<vmem>>, vector<4x128xf32>
    %cst = arith.constant dense<0.000000e+00> : vector<96x128xf32>
    %18 = tpu.matmul %16, %17, %cst {dimension_numbers = #tpu.dot_dimension_numbers<[1], [0], [0], [1], [0, 0, 1, 1], [], []>} : vector<96x4xf32>, vector<4x128xf32>, vector<96x128xf32> -> vector<96x128xf32>
    %c0_10 = arith.constant 0 : index
    %c0_11 = arith.constant 0 : index
    %19 = vector.load %arg6[%c0_10, %c0_11] : memref<1x128xf32, #tpu.memory_space<vmem>>, vector<1x128xf32>
    %20 = vector.broadcast %19 : vector<1x128xf32> to vector<96x128xf32>
    %21 = arith.addf %18, %20 : vector<96x128xf32>
    %cst_12 = arith.constant 0.000000e+00 : f32
    %22 = vector.broadcast %cst_12 : f32 to vector<96x128xf32>
    %23 = arith.maximumf %21, %22 : vector<96x128xf32>
    %24 = tpu.iota {dimensions = array<i32: 0>} : vector<96x1xi32>
    %c15_i32 = arith.constant 15 : i32
    %25 = vector.broadcast %c15_i32 : i32 to vector<96x1xi32>
    %26 = arith.andi %24, %25 : vector<96x1xi32>
    %c0_i32_13 = arith.constant 0 : i32
    %27 = vector.broadcast %c0_i32_13 : i32 to vector<96x1xi32>
    %28 = arith.cmpi sgt, %26, %27 : vector<96x1xi32>
    %29 = arith.extui %28 : vector<96x1xi1> to vector<96x1xi32>
    %30 = arith.sitofp %29 : vector<96x1xi32> to vector<96x1xf32>
    %c15_i32_14 = arith.constant 15 : i32
    %31 = vector.broadcast %c15_i32_14 : i32 to vector<96x1xi32>
    %32 = arith.cmpi slt, %26, %31 : vector<96x1xi32>
    %33 = arith.extui %32 : vector<96x1xi1> to vector<96x1xi32>
    %34 = arith.sitofp %33 : vector<96x1xi32> to vector<96x1xf32>
    %c1_i32 = arith.constant 1 : i32
    %35 = tpu.dynamic_rotate %23 by %c1_i32 dim 0 : vector<96x128xf32>, i32 -> vector<96x128xf32>
    %36 = vector.broadcast %30 : vector<96x1xf32> to vector<96x128xf32>
    %37 = arith.mulf %35, %36 : vector<96x128xf32>
    %c95_i32 = arith.constant 95 : i32
    %38 = tpu.dynamic_rotate %23 by %c95_i32 dim 0 : vector<96x128xf32>, i32 -> vector<96x128xf32>
    %39 = vector.broadcast %34 : vector<96x1xf32> to vector<96x128xf32>
    %40 = arith.mulf %38, %39 : vector<96x128xf32>
    %41 = tpu.concatenate %37, %23, %40 in 1 : vector<96x128xf32>, vector<96x128xf32>, vector<96x128xf32> -> vector<96x384xf32>
    %42 = vector.extract_strided_slice %41 {offsets = [0, 0], sizes = [64, 384], strides = [1, 1]} : vector<96x384xf32> to vector<64x384xf32>
    %c0_15 = arith.constant 0 : index
    %c0_16 = arith.constant 0 : index
    %c0_17 = arith.constant 0 : index
    %43 = vector.load %arg7[%c0_15, %c0_16, %c0_17] : memref<3x384x128xf32, #tpu.memory_space<vmem>>, vector<1x384x128xf32>
    %44 = vector.shape_cast %43 : vector<1x384x128xf32> to vector<384x128xf32>
    %cst_18 = arith.constant dense<0.000000e+00> : vector<64x128xf32>
    %45 = tpu.matmul %42, %44, %cst_18 {dimension_numbers = #tpu.dot_dimension_numbers<[1], [0], [0], [1], [0, 0, 1, 1], [], []>} : vector<64x384xf32>, vector<384x128xf32>, vector<64x128xf32> -> vector<64x128xf32>
    %46 = vector.extract_strided_slice %41 {offsets = [16, 0], sizes = [64, 384], strides = [1, 1]} : vector<96x384xf32> to vector<64x384xf32>
    %c1 = arith.constant 1 : index
    %c0_19 = arith.constant 0 : index
    %c0_20 = arith.constant 0 : index
    %47 = vector.load %arg7[%c1, %c0_19, %c0_20] : memref<3x384x128xf32, #tpu.memory_space<vmem>>, vector<1x384x128xf32>
    %48 = vector.shape_cast %47 : vector<1x384x128xf32> to vector<384x128xf32>
    %cst_21 = arith.constant dense<0.000000e+00> : vector<64x128xf32>
    %49 = tpu.matmul %46, %48, %cst_21 {dimension_numbers = #tpu.dot_dimension_numbers<[1], [0], [0], [1], [0, 0, 1, 1], [], []>} : vector<64x384xf32>, vector<384x128xf32>, vector<64x128xf32> -> vector<64x128xf32>
    %50 = arith.addf %45, %49 : vector<64x128xf32>
    %51 = vector.extract_strided_slice %41 {offsets = [32, 0], sizes = [64, 384], strides = [1, 1]} : vector<96x384xf32> to vector<64x384xf32>
    %c2 = arith.constant 2 : index
    %c0_22 = arith.constant 0 : index
    %c0_23 = arith.constant 0 : index
    %52 = vector.load %arg7[%c2, %c0_22, %c0_23] : memref<3x384x128xf32, #tpu.memory_space<vmem>>, vector<1x384x128xf32>
    %53 = vector.shape_cast %52 : vector<1x384x128xf32> to vector<384x128xf32>
    %cst_24 = arith.constant dense<0.000000e+00> : vector<64x128xf32>
    %54 = tpu.matmul %51, %53, %cst_24 {dimension_numbers = #tpu.dot_dimension_numbers<[1], [0], [0], [1], [0, 0, 1, 1], [], []>} : vector<64x384xf32>, vector<384x128xf32>, vector<64x128xf32> -> vector<64x128xf32>
    %55 = arith.addf %50, %54 : vector<64x128xf32>
    %c0_25 = arith.constant 0 : index
    %c0_26 = arith.constant 0 : index
    %56 = vector.load %arg8[%c0_25, %c0_26] : memref<1x128xf32, #tpu.memory_space<vmem>>, vector<1x128xf32>
    %57 = vector.broadcast %56 : vector<1x128xf32> to vector<64x128xf32>
    %58 = arith.addf %55, %57 : vector<64x128xf32>
    %cst_27 = arith.constant 0.000000e+00 : f32
    %59 = vector.broadcast %cst_27 : f32 to vector<64x128xf32>
    %60 = arith.maximumf %58, %59 : vector<64x128xf32>
    %c0_28 = arith.constant 0 : index
    %c0_29 = arith.constant 0 : index
    %61 = vector.load %arg9[%c0_28, %c0_29] : memref<128x4xf32, #tpu.memory_space<vmem>>, vector<128x4xf32>
    %cst_30 = arith.constant dense<0.000000e+00> : vector<64x4xf32>
    %62 = tpu.matmul %60, %61, %cst_30 {dimension_numbers = #tpu.dot_dimension_numbers<[1], [0], [0], [1], [0, 0, 1, 1], [], []>} : vector<64x128xf32>, vector<128x4xf32>, vector<64x4xf32> -> vector<64x4xf32>
    %c0_31 = arith.constant 0 : index
    %c0_32 = arith.constant 0 : index
    %63 = vector.load %arg10[%c0_31, %c0_32] : memref<1x4xf32, #tpu.memory_space<vmem>>, vector<1x4xf32>
    %64 = vector.broadcast %63 : vector<1x4xf32> to vector<64x4xf32>
    %65 = arith.addf %62, %64 : vector<64x4xf32>
    %66 = arith.addf %65, %1 : vector<64x4xf32>
    %cst_33 = arith.constant 0.000000e+00 : f32
    %67 = vector.broadcast %cst_33 : f32 to vector<64x4xf32>
    %68 = arith.maximumf %66, %67 : vector<64x4xf32>
    %c0_34 = arith.constant 0 : index
    %c0_35 = arith.constant 0 : index
    %c0_36 = arith.constant 0 : index
    %69 = vector.load %arg11[%c0_34, %c0_35, %c0_36] : memref<1x64x4xf32, #tpu.memory_space<vmem>>, vector<1x64x4xf32>
    %70 = vector.shape_cast %69 : vector<1x64x4xf32> to vector<64x4xf32>
    %71 = vector.shape_cast %68 : vector<64x4xf32> to vector<1x64x4xf32>
    tpu.vector_store %arg11[%c0_34, %c0_35, %c0_36], %71 {strides = array<i32>} : memref<1x64x4xf32, #tpu.memory_space<vmem>>, vector<1x64x4xf32>,
    return
  }
  func.func @transform_0(%arg0: i32, %arg1: i32) -> (i32, i32, i32) {
    %c0_i32 = arith.constant 0 : i32
    %c0_i32_0 = arith.constant 0 : i32
    return %arg0, %arg1, %c0_i32 : i32, i32, i32
  }
  func.func @transform_1(%arg0: i32, %arg1: i32) -> (i32, i32, i32) {
    %c4_i32 = arith.constant 4 : i32
    %0 = arith.muli %arg1, %c4_i32 : i32
    %c1_i32 = arith.constant 1 : i32
    %1 = arith.subi %0, %c1_i32 : i32
    %c0_i32 = arith.constant 0 : i32
    %2 = arith.maxsi %1, %c0_i32 : i32
    %c0_i32_0 = arith.constant 0 : i32
    %c0_i32_1 = arith.constant 0 : i32
    return %arg0, %2, %c0_i32_0 : i32, i32, i32
  }
  func.func @transform_2(%arg0: i32, %arg1: i32) -> (i32, i32, i32) {
    %c1_i32 = arith.constant 1 : i32
    %0 = arith.addi %arg1, %c1_i32 : i32
    %c4_i32 = arith.constant 4 : i32
    %1 = arith.muli %0, %c4_i32 : i32
    %c15_i32 = arith.constant 15 : i32
    %2 = arith.minsi %1, %c15_i32 : i32
    %c0_i32 = arith.constant 0 : i32
    %c0_i32_0 = arith.constant 0 : i32
    return %arg0, %2, %c0_i32 : i32, i32, i32
  }
  func.func @transform_3(%arg0: i32, %arg1: i32) -> (i32, i32) {
    %c0_i32 = arith.constant 0 : i32
    %c0_i32_0 = arith.constant 0 : i32
    %c0_i32_1 = arith.constant 0 : i32
    return %c0_i32, %c0_i32_0 : i32, i32
  }
  func.func @transform_4(%arg0: i32, %arg1: i32) -> (i32, i32) {
    %c0_i32 = arith.constant 0 : i32
    %c0_i32_0 = arith.constant 0 : i32
    %c0_i32_1 = arith.constant 0 : i32
    return %c0_i32, %c0_i32_0 : i32, i32
  }
  func.func @transform_5(%arg0: i32, %arg1: i32) -> (i32, i32, i32) {
    %c0_i32 = arith.constant 0 : i32
    %c0_i32_0 = arith.constant 0 : i32
    %c0_i32_1 = arith.constant 0 : i32
    %c0_i32_2 = arith.constant 0 : i32
    return %c0_i32, %c0_i32_0, %c0_i32_1 : i32, i32, i32
  }
  func.func @transform_6(%arg0: i32, %arg1: i32) -> (i32, i32) {
    %c0_i32 = arith.constant 0 : i32
    %c0_i32_0 = arith.constant 0 : i32
    %c0_i32_1 = arith.constant 0 : i32
    return %c0_i32, %c0_i32_0 : i32, i32
  }
  func.func @transform_7(%arg0: i32, %arg1: i32) -> (i32, i32) {
    %c0_i32 = arith.constant 0 : i32
    %c0_i32_0 = arith.constant 0 : i32
    %c0_i32_1 = arith.constant 0 : i32
    return %c0_i32, %c0_i32_0 : i32, i32
  }
  func.func @transform_8(%arg0: i32, %arg1: i32) -> (i32, i32) {
    %c0_i32 = arith.constant 0 : i32
    %c0_i32_0 = arith.constant 0 : i32
    %c0_i32_1 = arith.constant 0 : i32
    return %c0_i32, %c0_i32_0 : i32, i32
  }
  func.func @transform_9(%arg0: i32, %arg1: i32) -> (i32, i32, i32) {
    %c0_i32 = arith.constant 0 : i32
    %c0_i32_0 = arith.constant 0 : i32
    return %arg0, %arg1, %c0_i32 : i32, i32, i32
  }
}

</mosaic_0001>

<llo_original>
// kernel: tpu_custom_call.1
$region0: #{tpu_custom_call.1}
  #allocation0 [shape = 'u32[]', space=smem, size = 0x4, offset = 0x4, fixed_abs, tag = 'smem constant byte address 0x4 - core index']
  #allocation1 [shape = 'u32[144,128]{1,0:T(1,128)}', space=vmem, size = 0x12000, scoped, tag = 'internal scratch']
  %s0 = inlined_call_operand.vmem [shape: f32[2,256,4], index: 0, kind: input, shape index: {}]
  %s1 = inlined_call_operand.vmem [shape: f32[2,256,4], index: 1, kind: input, shape index: {}]
  %s2 = inlined_call_operand.vmem [shape: f32[2,256,4], index: 2, kind: input, shape index: {}]
  %s3 = inlined_call_operand.vmem [shape: f32[4,128], index: 3, kind: input, shape index: {}]
  %s4 = inlined_call_operand.vmem [shape: f32[1,128], index: 4, kind: input, shape index: {}]
  %s5 = inlined_call_operand.vmem [shape: f32[3,384,128], index: 5, kind: input, shape index: {}]
  %s6 = inlined_call_operand.vmem [shape: f32[1,128], index: 6, kind: input, shape index: {}]
  %s7 = inlined_call_operand.vmem [shape: f32[128,4], index: 7, kind: input, shape index: {}]
  %s8 = inlined_call_operand.vmem [shape: f32[1,4], index: 8, kind: input, shape index: {}]
  %s9 = inlined_call_operand.vmem [shape: f32[2,256,4], index: 9, kind: output, shape index: {}]
  %s10 = sld [smem:[#allocation0]]
  $region69: #{tpu_custom_call.1} parent=0
    _
  %s12 = ssub.s32 1, %s10
  %s13 = scalar_select 0, %s12, %s10
  loop: start=0, step=1, limit=10
  $region2: #{tpu_custom_call.1} parent=0 // loop_pre_header
    _
  $region3: #{tpu_custom_call.1} parent=0 // loop_header
    %s15 = sphi 0, %s19
    %p16 = scmp.ge.s32.totalorder %s15, 10
    %s22 = sphi 0, %s34
    %s23 = sphi 0, %s30
    %s24 = sphi 0, %s22
    %s25 = sphi 0, %s23
    %s26 = sphi 0, %s24
    %s27 = sphi 0, %s25
    %s39 = sphi 0, %s41
    %s42 = sphi 0, %s39
    %s43 = sphi 0, %s42
    %s59 = sphi 0, %s43
    %s75 = sphi 0, %s77
    %s78 = sphi 0, %s75
    %s79 = sphi 0, %s78
    %s95 = sphi 0, %s79
    %s111 = sphi 0, %s113
    %s114 = sphi 0, %s111
    %s115 = sphi 0, %s114
    %s131 = sphi 0, %s115
    %s135 = sphi 0, %s135
    %s137 = sphi 0, %s135
    %s138 = sphi 0, %s137
    %s152 = sphi 0, %s138
    %s156 = sphi 0, %s156
    %s158 = sphi 0, %s156
    %s159 = sphi 0, %s158
    %s173 = sphi 0, %s159
    %s177 = sphi 0, %s177
    %s179 = sphi 0, %s177
    %s180 = sphi 0, %s179
    %s194 = sphi 0, %s180
    %s198 = sphi 0, %s198
    %s200 = sphi 0, %s198
    %s201 = sphi 0, %s200
    %s215 = sphi 0, %s201
    %s219 = sphi 0, %s219
    %s221 = sphi 0, %s219
    %s222 = sphi 0, %s221
    %s236 = sphi 0, %s222
    %s240 = sphi 0, %s240
    %s242 = sphi 0, %s240
    %s243 = sphi 0, %s242
    %s257 = sphi 0, %s243
    %s265 = sphi 0, %s267
    %s268 = sphi 0, %s265
    %s269 = sphi 0, %s268
    %s285 = sphi 0, %s269
  $region4: #{tpu_custom_call.1} parent=0 // loop_header_branch
    %18 = sbr.rel (%p16) target = $region8
  $region5: #{tpu_custom_call.1} parent=0 // loop_body
    %s20 = ssub.s32 %s15, 1
    %s21 = ssub.s32 %s15, 2
    %s28 = sadd.s32 1, %s23
    %p29 = scmp.ge.s32.totalorder %s28, 4
    %s30 = scalar_select %p29, 0, %s28
    %s31 = sadd.s32 1, %s22
    %s32 = scalar_select %p29, %s31, %s22
    %p33 = scmp.ge.s32.totalorder %s32, 2
    %s34 = scalar_select %p33, 0, %s32
    %s35 = ssub.s32 %s22, %s34
    %s36 = ssub.s32 %s23, %s30
    %s37 = sor.u32 %s35, %s36
    %p38 = scmp.eq.s32.totalorder %s37, 0
    %s40 = sadd.s32 %s39, 1
    %s41 = scalar_select %p38, %s39, %s40
    %p44 = pneg %p38
    %p45 = scmp.eq.s32.totalorder %s15, 7
    %p46 = por %p44, %p45
    %p47 = scmp.ne.s32.totalorder %s39, %s42
    %p48 = scmp.eq.s32.totalorder %s15, 0
    %p49 = por %p47, %p48
    %p50 = scmp.ne.s32.totalorder %s39, %s42
    %p51 = scmp.eq.s32.totalorder %s20, 7
    %p52 = por %p50, %p51
    %p53 = scmp.ne.s32.totalorder %s42, %s43
    %p54 = scmp.eq.s32.totalorder %s20, 0
    %p55 = por %p53, %p54
    %p56 = scmp.ne.s32.totalorder %s42, %s43
    %p57 = scmp.eq.s32.totalorder %s21, 7
    %p58 = por %p56, %p57
    %p60 = scmp.ne.s32.totalorder %s43, %s59
    %p61 = scmp.eq.s32.totalorder %s21, 0
    %p62 = por %p60, %p61
    %s63 = smul.u32 %s23, 4
    %s64 = ssub.s32 %s63, 1
    %p65 = scmp.gt.s32.totalorder %s64, 0
    %s66 = scalar_select %p65, %s64, 0
    %s67 = smul.u32 %s30, 4
    %s68 = ssub.s32 %s67, 1
    %p69 = scmp.gt.s32.totalorder %s68, 0
    %s70 = scalar_select %p69, %s68, 0
    %s71 = ssub.s32 %s22, %s34
    %s72 = ssub.s32 %s66, %s70
    %s73 = sor.u32 %s71, %s72
    %p74 = scmp.eq.s32.totalorder %s73, 0
    %s76 = sadd.s32 %s75, 1
    %s77 = scalar_select %p74, %s75, %s76
    %p80 = pneg %p74
    %p81 = scmp.eq.s32.totalorder %s15, 7
    %p82 = por %p80, %p81
    %p83 = scmp.ne.s32.totalorder %s75, %s78
    %p84 = scmp.eq.s32.totalorder %s15, 0
    %p85 = por %p83, %p84
    %p86 = scmp.ne.s32.totalorder %s75, %s78
    %p87 = scmp.eq.s32.totalorder %s20, 7
    %p88 = por %p86, %p87
    %p89 = scmp.ne.s32.totalorder %s78, %s79
    %p90 = scmp.eq.s32.totalorder %s20, 0
    %p91 = por %p89, %p90
    %p92 = scmp.ne.s32.totalorder %s78, %s79
    %p93 = scmp.eq.s32.totalorder %s21, 7
    %p94 = por %p92, %p93
    %p96 = scmp.ne.s32.totalorder %s79, %s95
    %p97 = scmp.eq.s32.totalorder %s21, 0
    %p98 = por %p96, %p97
    %s99 = sadd.s32 %s23, 1
    %s100 = smul.u32 %s99, 4
    %p101 = scmp.lt.s32.totalorder %s100, 15
    %s102 = scalar_select %p101, %s100, 15
    %s103 = sadd.s32 %s30, 1
    %s104 = smul.u32 %s103, 4
    %p105 = scmp.lt.s32.totalorder %s104, 15
    %s106 = scalar_select %p105, %s104, 15
    %s107 = ssub.s32 %s22, %s34
    %s108 = ssub.s32 %s102, %s106
    %s109 = sor.u32 %s107, %s108
    %p110 = scmp.eq.s32.totalorder %s109, 0
    %s112 = sadd.s32 %s111, 1
    %s113 = scalar_select %p110, %s111, %s112
    %p116 = pneg %p110
    %p117 = scmp.eq.s32.totalorder %s15, 7
    %p118 = por %p116, %p117
    %p119 = scmp.ne.s32.totalorder %s111, %s114
    %p120 = scmp.eq.s32.totalorder %s15, 0
    %p121 = por %p119, %p120
    %p122 = scmp.ne.s32.totalorder %s111, %s114
    %p123 = scmp.eq.s32.totalorder %s20, 7
    %p124 = por %p122, %p123
    %p125 = scmp.ne.s32.totalorder %s114, %s115
    %p126 = scmp.eq.s32.totalorder %s20, 0
    %p127 = por %p125, %p126
    %p128 = scmp.ne.s32.totalorder %s114, %s115
    %p129 = scmp.eq.s32.totalorder %s21, 7
    %p130 = por %p128, %p129
    %p132 = scmp.ne.s32.totalorder %s115, %s131
    %p133 = scmp.eq.s32.totalorder %s21, 0
    %p134 = por %p132, %p133
    %s136 = sadd.s32 %s135, 1
    %p139 = scmp.eq.s32.totalorder %s15, 7
    %p140 = scmp.ne.s32.totalorder %s135, %s137
    %p141 = scmp.eq.s32.totalorder %s15, 0
    %p142 = por %p140, %p141
    %p143 = scmp.ne.s32.totalorder %s135, %s137
    %p144 = scmp.eq.s32.totalorder %s20, 7
    %p145 = por %p143, %p144
    %p146 = scmp.ne.s32.totalorder %s137, %s138
    %p147 = scmp.eq.s32.totalorder %s20, 0
    %p148 = por %p146, %p147
    %p149 = scmp.ne.s32.totalorder %s137, %s138
    %p150 = scmp.eq.s32.totalorder %s21, 7
    %p151 = por %p149, %p150
    %p153 = scmp.ne.s32.totalorder %s138, %s152
    %p154 = scmp.eq.s32.totalorder %s21, 0
    %p155 = por %p153, %p154
    %s157 = sadd.s32 %s156, 1
    %p160 = scmp.eq.s32.totalorder %s15, 7
    %p161 = scmp.ne.s32.totalorder %s156, %s158
    %p162 = scmp.eq.s32.totalorder %s15, 0
    %p163 = por %p161, %p162
    %p164 = scmp.ne.s32.totalorder %s156, %s158
    %p165 = scmp.eq.s32.totalorder %s20, 7
    %p166 = por %p164, %p165
    %p167 = scmp.ne.s32.totalorder %s158, %s159
    %p168 = scmp.eq.s32.totalorder %s20, 0
    %p169 = por %p167, %p168
    %p170 = scmp.ne.s32.totalorder %s158, %s159
    %p171 = scmp.eq.s32.totalorder %s21, 7
    %p172 = por %p170, %p171
    %p174 = scmp.ne.s32.totalorder %s159, %s173
    %p175 = scmp.eq.s32.totalorder %s21, 0
    %p176 = por %p174, %p175
    %s178 = sadd.s32 %s177, 1
    %p181 = scmp.eq.s32.totalorder %s15, 7
    %p182 = scmp.ne.s32.totalorder %s177, %s179
    %p183 = scmp.eq.s32.totalorder %s15, 0
    %p184 = por %p182, %p183
    %p185 = scmp.ne.s32.totalorder %s177, %s179
    %p186 = scmp.eq.s32.totalorder %s20, 7
    %p187 = por %p185, %p186
    %p188 = scmp.ne.s32.totalorder %s179, %s180
    %p189 = scmp.eq.s32.totalorder %s20, 0
    %p190 = por %p188, %p189
    %p191 = scmp.ne.s32.totalorder %s179, %s180
    %p192 = scmp.eq.s32.totalorder %s21, 7
    %p193 = por %p191, %p192
    %p195 = scmp.ne.s32.totalorder %s180, %s194
    %p196 = scmp.eq.s32.totalorder %s21, 0
    %p197 = por %p195, %p196
    %s199 = sadd.s32 %s198, 1
    %p202 = scmp.eq.s32.totalorder %s15, 7
    %p203 = scmp.ne.s32.totalorder %s198, %s200
    %p204 = scmp.eq.s32.totalorder %s15, 0
    %p205 = por %p203, %p204
    %p206 = scmp.ne.s32.totalorder %s198, %s200
    %p207 = scmp.eq.s32.totalorder %s20, 7
    %p208 = por %p206, %p207
    %p209 = scmp.ne.s32.totalorder %s200, %s201
    %p210 = scmp.eq.s32.totalorder %s20, 0
    %p211 = por %p209, %p210
    %p212 = scmp.ne.s32.totalorder %s200, %s201
    %p213 = scmp.eq.s32.totalorder %s21, 7
    %p214 = por %p212, %p213
    %p216 = scmp.ne.s32.totalorder %s201, %s215
    %p217 = scmp.eq.s32.totalorder %s21, 0
    %p218 = por %p216, %p217
    %s220 = sadd.s32 %s219, 1
    %p223 = scmp.eq.s32.totalorder %s15, 7
    %p224 = scmp.ne.s32.totalorder %s219, %s221
    %p225 = scmp.eq.s32.totalorder %s15, 0
    %p226 = por %p224, %p225
    %p227 = scmp.ne.s32.totalorder %s219, %s221
    %p228 = scmp.eq.s32.totalorder %s20, 7
    %p229 = por %p227, %p228
    %p230 = scmp.ne.s32.totalorder %s221, %s222
    %p231 = scmp.eq.s32.totalorder %s20, 0
    %p232 = por %p230, %p231
    %p233 = scmp.ne.s32.totalorder %s221, %s222
    %p234 = scmp.eq.s32.totalorder %s21, 7
    %p235 = por %p233, %p234
    %p237 = scmp.ne.s32.totalorder %s222, %s236
    %p238 = scmp.eq.s32.totalorder %s21, 0
    %p239 = por %p237, %p238
    %s241 = sadd.s32 %s240, 1
    %p244 = scmp.eq.s32.totalorder %s15, 7
    %p245 = scmp.ne.s32.totalorder %s240, %s242
    %p246 = scmp.eq.s32.totalorder %s15, 0
    %p247 = por %p245, %p246
    %p248 = scmp.ne.s32.totalorder %s240, %s242
    %p249 = scmp.eq.s32.totalorder %s20, 7
    %p250 = por %p248, %p249
    %p251 = scmp.ne.s32.totalorder %s242, %s243
    %p252 = scmp.eq.s32.totalorder %s20, 0
    %p253 = por %p251, %p252
    %p254 = scmp.ne.s32.totalorder %s242, %s243
    %p255 = scmp.eq.s32.totalorder %s21, 7
    %p256 = por %p254, %p255
    %p258 = scmp.ne.s32.totalorder %s243, %s257
    %p259 = scmp.eq.s32.totalorder %s21, 0
    %p260 = por %p258, %p259
    %s261 = ssub.s32 %s22, %s34
    %s262 = ssub.s32 %s23, %s30
    %s263 = sor.u32 %s261, %s262
    %p264 = scmp.eq.s32.totalorder %s263, 0
    %s266 = sadd.s32 %s265, 1
    %s267 = scalar_select %p264, %s265, %s266
    %p270 = pneg %p264
    %p271 = scmp.eq.s32.totalorder %s15, 7
    %p272 = por %p270, %p271
    %p273 = scmp.ne.s32.totalorder %s265, %s268
    %p274 = scmp.eq.s32.totalorder %s15, 0
    %p275 = por %p273, %p274
    %p276 = scmp.ne.s32.totalorder %s265, %s268
    %p277 = scmp.eq.s32.totalorder %s20, 7
    %p278 = por %p276, %p277
    %p279 = scmp.ne.s32.totalorder %s268, %s269
    %p280 = scmp.eq.s32.totalorder %s20, 0
    %p281 = por %p279, %p280
    %p282 = scmp.ne.s32.totalorder %s268, %s269
    %p283 = scmp.eq.s32.totalorder %s21, 7
    %p284 = por %p282, %p283
    %p286 = scmp.ne.s32.totalorder %s269, %s285
    %p287 = scmp.eq.s32.totalorder %s21, 0
    %p288 = por %p286, %p287
    %p289 = scmp.le.s32.totalorder 1, %s15
    %p290 = scmp.lt.s32.totalorder %s15, 9
    %p291 = pnand %p289, %p290
    %p292 = pneg %p291
    // Predicated region
    $region9: #{tpu_custom_call.1} parent=5 // pred_check
      _
    $region10: #{tpu_custom_call.1} parent=5 // pred_check_branch
      %294 = sbr.rel (%p291) target = $region12
    $region11: #{tpu_custom_call.1} parent=5 // pred_region
      %s295 = ssub.s32 %s15, 1
      // Predicated region
      $region13: #{tpu_custom_call.1} parent=11 // pred_check
        %p296 = pneg %p148
      $region14: #{tpu_custom_call.1} parent=11 // pred_check_branch
        %298 = sbr.rel (%p296) target = $region16
      $region15: #{tpu_custom_call.1} parent=11 // pred_region
        _
      $region16: #{tpu_custom_call.1} parent=11 // pred_fallthru
        _
      // Predicated region
      $region17: #{tpu_custom_call.1} parent=11 // pred_check
        %p299 = pneg %p169
      $region18: #{tpu_custom_call.1} parent=11 // pred_check_branch
        %301 = sbr.rel (%p299) target = $region20
      $region19: #{tpu_custom_call.1} parent=11 // pred_region
        _
      $region20: #{tpu_custom_call.1} parent=11 // pred_fallthru
        _
      // Predicated region
      $region21: #{tpu_custom_call.1} parent=11 // pred_check
        %p302 = pneg %p190
      $region22: #{tpu_custom_call.1} parent=11 // pred_check_branch
        %304 = sbr.rel (%p302) target = $region24
      $region23: #{tpu_custom_call.1} parent=11 // pred_region
        _
      $region24: #{tpu_custom_call.1} parent=11 // pred_fallthru
        _
      // Predicated region
      $region25: #{tpu_custom_call.1} parent=11 // pred_check
        %p305 = pneg %p211
      $region26: #{tpu_custom_call.1} parent=11 // pred_check_branch
        %307 = sbr.rel (%p305) target = $region28
      $region27: #{tpu_custom_call.1} parent=11 // pred_region
        _
      $region28: #{tpu_custom_call.1} parent=11 // pred_fallthru
        _
      // Predicated region
      $region29: #{tpu_custom_call.1} parent=11 // pred_check
        %p308 = pneg %p232
      $region30: #{tpu_custom_call.1} parent=11 // pred_check_branch
        %310 = sbr.rel (%p308) target = $region32
      $region31: #{tpu_custom_call.1} parent=11 // pred_region
        _
      $region32: #{tpu_custom_call.1} parent=11 // pred_fallthru
        _
      // Predicated region
      $region33: #{tpu_custom_call.1} parent=11 // pred_check
        %p311 = pneg %p253
      $region34: #{tpu_custom_call.1} parent=11 // pred_check_branch
        %313 = sbr.rel (%p311) target = $region36
      $region35: #{tpu_custom_call.1} parent=11 // pred_region
        _
      $region36: #{tpu_custom_call.1} parent=11 // pred_fallthru
        _
    $region12: #{tpu_custom_call.1} parent=5 // pred_fallthru
      _
    %p314 = scmp.lt.s32.totalorder %s15, 8
    // Predicated region
    $region37: #{tpu_custom_call.1} parent=5 // pred_check
      %p315 = pneg %p314
    $region38: #{tpu_custom_call.1} parent=5 // pred_check_branch
      %317 = sbr.rel (%p315) target = $region40
    $region39: #{tpu_custom_call.1} parent=5 // pred_region
      // Predicated region
      $region41: #{tpu_custom_call.1} parent=39 // pred_check
        %p318 = pneg %p49
      $region42: #{tpu_custom_call.1} parent=39 // pred_check_branch
        %320 = sbr.rel (%p318) target = $region44
      $region43: #{tpu_custom_call.1} parent=39 // pred_region
        %s321 = smul.u32 8, %s23
        %p322 = scmp.lt.s32.totalorder %s22, 1
        %s323 = scalar_select %p322, %s22, 1
        %p324 = scmp.lt.s32.totalorder %s321, 31
        %s325 = scalar_select %p324, %s321, 31
        %s326 = smul.addr %s323, 32
        %s327 = sadd.s32 %s325, %s326
        %s328 = smul.addr %s327, 8
        %s329 = scalar_lea.vmem %s0, %s328
        %s330 = smul.u32 8, %s23
      $region44: #{tpu_custom_call.1} parent=39 // pred_fallthru
        _
      // Predicated region
      $region45: #{tpu_custom_call.1} parent=39 // pred_check
        %p331 = pneg %p85
      $region46: #{tpu_custom_call.1} parent=39 // pred_check_branch
        %333 = sbr.rel (%p331) target = $region48
      $region47: #{tpu_custom_call.1} parent=39 // pred_region
        %s334 = smul.u32 %s23, 4
        %s335 = ssub.s32 %s334, 1
        %p336 = scmp.gt.s32.totalorder %s335, 0
        %s337 = scalar_select %p336, %s335, 0
        %s338 = smul.u32 2, %s337
        %p339 = scmp.lt.s32.totalorder %s22, 1
        %s340 = scalar_select %p339, %s22, 1
        %p341 = scmp.lt.s32.totalorder %s338, 31
        %s342 = scalar_select %p341, %s338, 31
        %s343 = smul.addr %s340, 32
        %s344 = sadd.s32 %s342, %s343
        %s345 = smul.addr %s344, 8
        %s346 = scalar_lea.vmem %s1, %s345
        %s347 = smul.u32 %s23, 4
        %s348 = ssub.s32 %s347, 1
        %p349 = scmp.gt.s32.totalorder %s348, 0
        %s350 = scalar_select %p349, %s348, 0
        %s351 = smul.u32 2, %s350
      $region48: #{tpu_custom_call.1} parent=39 // pred_fallthru
        _
      // Predicated region
      $region49: #{tpu_custom_call.1} parent=39 // pred_check
        %p352 = pneg %p121
      $region50: #{tpu_custom_call.1} parent=39 // pred_check_branch
        %354 = sbr.rel (%p352) target = $region52
      $region51: #{tpu_custom_call.1} parent=39 // pred_region
        %s355 = sadd.s32 %s23, 1
        %s356 = smul.u32 %s355, 4
        %p357 = scmp.lt.s32.totalorder %s356, 15
        %s358 = scalar_select %p357, %s356, 15
        %s359 = smul.u32 2, %s358
        %p360 = scmp.lt.s32.totalorder %s22, 1
        %s361 = scalar_select %p360, %s22, 1
        %p362 = scmp.lt.s32.totalorder %s359, 31
        %s363 = scalar_select %p362, %s359, 31
        %s364 = smul.addr %s361, 32
        %s365 = sadd.s32 %s363, %s364
        %s366 = smul.addr %s365, 8
        %s367 = scalar_lea.vmem %s2, %s366
        %s368 = sadd.s32 %s23, 1
        %s369 = smul.u32 %s368, 4
        %p370 = scmp.lt.s32.totalorder %s369, 15
        %s371 = scalar_select %p370, %s369, 15
        %s372 = smul.u32 2, %s371
      $region52: #{tpu_custom_call.1} parent=39 // pred_fallthru
        _
    $region40: #{tpu_custom_call.1} parent=5 // pred_fallthru
      _
    %p373 = scmp.le.s32.totalorder 1, %s15
    %p374 = scmp.lt.s32.totalorder %s15, 9
    %p375 = pnand %p373, %p374
    %p376 = pneg %p375
    // Predicated region
    $region53: #{tpu_custom_call.1} parent=5 // pred_check
      _
    $region54: #{tpu_custom_call.1} parent=5 // pred_check_branch
      %378 = sbr.rel (%p375) target = $region56
    $region55: #{tpu_custom_call.1} parent=5 // pred_region
      %s379 = ssub.s32 %s15, 1
      %s380 = smul.u32 8, %s25
      %p381 = scmp.lt.s32.totalorder %s24, 1
      %s382 = scalar_select %p381, %s24, 1
      %p383 = scmp.lt.s32.totalorder %s380, 31
      %s384 = scalar_select %p383, %s380, 31
      %s385 = smul.addr %s382, 32
      %s386 = sadd.s32 %s384, %s385
      %s387 = smul.addr %s386, 8
      %s388 = scalar_lea.vmem %s0, %s387
      %p389 = pneg %p55
      %p390 = pneg %p52
      %s391 = smul.u32 %s25, 4
      %s392 = ssub.s32 %s391, 1
      %p393 = scmp.gt.s32.totalorder %s392, 0
      %s394 = scalar_select %p393, %s392, 0
      %s395 = smul.u32 2, %s394
      %p396 = scmp.lt.s32.totalorder %s24, 1
      %s397 = scalar_select %p396, %s24, 1
      %p398 = scmp.lt.s32.totalorder %s395, 31
      %s399 = scalar_select %p398, %s395, 31
      %s400 = smul.addr %s397, 32
      %s401 = sadd.s32 %s399, %s400
      %s402 = smul.addr %s401, 8
      %s403 = scalar_lea.vmem %s1, %s402
      %p404 = pneg %p91
      %p405 = pneg %p88
      %s406 = sadd.s32 %s25, 1
      %s407 = smul.u32 %s406, 4
      %p408 = scmp.lt.s32.totalorder %s407, 15
      %s409 = scalar_select %p408, %s407, 15
      %s410 = smul.u32 2, %s409
      %p411 = scmp.lt.s32.totalorder %s24, 1
      %s412 = scalar_select %p411, %s24, 1
      %p413 = scmp.lt.s32.totalorder %s410, 31
      %s414 = scalar_select %p413, %s410, 31
      %s415 = smul.addr %s412, 32
      %s416 = sadd.s32 %s414, %s415
      %s417 = smul.addr %s416, 8
      %s418 = scalar_lea.vmem %s2, %s417
      %p419 = pneg %p127
      %p420 = pneg %p124
      %p421 = pneg %p148
      %p422 = pneg %p145
      %p423 = pneg %p169
      %p424 = pneg %p166
      %p425 = pneg %p190
      %p426 = pneg %p187
      %p427 = pneg %p211
      %p428 = pneg %p208
      %p429 = pneg %p232
      %p430 = pneg %p229
      %p431 = pneg %p253
      %p432 = pneg %p250
      %p433 = pneg %p281
      %p434 = pneg %p278
      %s435 = smul.u32 8, %s25
      %p436 = scmp.lt.s32.totalorder %s24, 1
      %s437 = scalar_select %p436, %s24, 1
      %p438 = scmp.lt.s32.totalorder %s435, 31
      %s439 = scalar_select %p438, %s435, 31
      %s440 = smul.addr %s437, 32
      %s441 = sadd.s32 %s439, %s440
      %s442 = smul.addr %s441, 8
      %s443 = scalar_lea.vmem %s9, %s442
      %s444 = smul.u32 8, %s25
      %p445 = scmp.lt.s32.totalorder %s24, 1
      %s446 = scalar_select %p445, %s24, 1
      %p447 = scmp.lt.s32.totalorder %s444, 31
      %s448 = scalar_select %p447, %s444, 31
      %s449 = smul.addr %s446, 32
      %s450 = sadd.s32 %s448, %s449
      %s451 = smul.addr %s450, 8
      %s452 = scalar_lea.vmem %s0, %s451
      %s453 = smul.u32 8, %s25
      %s454 = smul.u32 %s25, 4
      %s455 = ssub.s32 %s454, 1
      %p456 = scmp.gt.s32.totalorder %s455, 0
      %s457 = scalar_select %p456, %s455, 0
      %s458 = smul.u32 2, %s457
      %p459 = scmp.lt.s32.totalorder %s24, 1
      %s460 = scalar_select %p459, %s24, 1
      %p461 = scmp.lt.s32.totalorder %s458, 31
      %s462 = scalar_select %p461, %s458, 31
      %s463 = smul.addr %s460, 32
      %s464 = sadd.s32 %s462, %s463
      %s465 = smul.addr %s464, 8
      %s466 = scalar_lea.vmem %s1, %s465
      %s467 = smul.u32 %s25, 4
      %s468 = ssub.s32 %s467, 1
      %p469 = scmp.gt.s32.totalorder %s468, 0
      %s470 = scalar_select %p469, %s468, 0
      %s471 = smul.u32 2, %s470
      %s472 = sadd.s32 %s25, 1
      %s473 = smul.u32 %s472, 4
      %p474 = scmp.lt.s32.totalorder %s473, 15
      %s475 = scalar_select %p474, %s473, 15
      %s476 = smul.u32 2, %s475
      %p477 = scmp.lt.s32.totalorder %s24, 1
      %s478 = scalar_select %p477, %s24, 1
      %p479 = scmp.lt.s32.totalorder %s476, 31
      %s480 = scalar_select %p479, %s476, 31
      %s481 = smul.addr %s478, 32
      %s482 = sadd.s32 %s480, %s481
      %s483 = smul.addr %s482, 8
      %s484 = scalar_lea.vmem %s2, %s483
      %s485 = sadd.s32 %s25, 1
      %s486 = smul.u32 %s485, 4
      %p487 = scmp.lt.s32.totalorder %s486, 15
      %s488 = scalar_select %p487, %s486, 15
      %s489 = smul.u32 2, %s488
      %s490 = smul.u32 8, %s25
      %p491 = scmp.lt.s32.totalorder %s24, 1
      %s492 = scalar_select %p491, %s24, 1
      %p493 = scmp.lt.s32.totalorder %s490, 31
      %s494 = scalar_select %p493, %s490, 31
      %s495 = smul.addr %s492, 32
      %s496 = sadd.s32 %s494, %s495
      %s497 = smul.addr %s496, 8
      %s498 = scalar_lea.vmem %s9, %s497
      %s499 = smul.u32 8, %s25
      %v500 = vld [vmem:[%s452] sm:$0xff]
      %v501 = vld [vmem:[%s452 + $0x8] sm:$0xff]
      %v502 = vld [vmem:[%s452 + $0x10] sm:$0xff]
      %v503 = vld [vmem:[%s452 + $0x18] sm:$0xff]
      %v504 = vld [vmem:[%s452 + $0x20] sm:$0xff]
      %v505 = vld [vmem:[%s452 + $0x28] sm:$0xff]
      %v506 = vld [vmem:[%s452 + $0x30] sm:$0xff]
      %v507 = vld [vmem:[%s452 + $0x38] sm:$0xff]
      %v508 = vld [vmem:[%s466] sm:$0xff]
      %v509 = vld [vmem:[%s466 + $0x8] sm:$0xff]
      %p510 = scmp.gt.s32.totalorder %s25, 0
      %s511 = scalar_select %p510, 1, 0
      %s512 = scvt.s32.f32 %s511
      %v513 = vstv %s512
      %v514 = vmul.f32 %v508, %v513
      %v515 = vmul.f32 %v509, %v513
      %v516 = vld [vmem:[%s484] sm:$0xff]
      %v517 = vld [vmem:[%s484 + $0x8] sm:$0xff]
      %p518 = scmp.lt.s32.totalorder %s25, 3
      %s519 = scalar_select %p518, 1, 0
      %s520 = scvt.s32.f32 %s519
      %v521 = vstv %s520
      %v522 = vmul.f32 %v516, %v521
      %v523 = vmul.f32 %v517, %v521
      %v524 = vld [vmem:[%s3] sm:$0xf]
      %v525 = vld [vmem:[%s4] sm:$0x1]
      %v527 = vlaneseq
      %v528 = vshrl.u32 %v527, 7
      %v529 = vsub.s32 0, %v528
      %v530 = vrot.slane %v525, %v529
      %vm532 = vcmask 31744
      %v534 = vsel %vm532, %v514, 0
      %v537 = vsel %vm532, %v515, 0
      %v540 = vsel %vm532, %v500, 0
      %v543 = vsel %vm532, %v501, 0
      %v546 = vsel %vm532, %v502, 0
      %v549 = vsel %vm532, %v503, 0
      %v552 = vsel %vm532, %v504, 0
      %v555 = vsel %vm532, %v505, 0
      %v558 = vsel %vm532, %v506, 0
      %v561 = vsel %vm532, %v507, 0
      %v564 = vsel %vm532, %v522, 0
      %v567 = vsel %vm532, %v523, 0
      %vm569 = vcmask 1043456
      %v571 = vsel %vm569, %v524, 0
      %573 = vmatprep.subr.mxu0 0.0
      %574 = vmatpush1.msra.mxu0 %v571
      %575 = vmatprep.subr.mxu0 0.0
      %576 = vmatpush1.msra.mxu0 0.0
      %577 = vmatprep.subr.mxu0 0.0
      %578 = vmatpush1.msra.mxu0 0.0
      %579 = vmatprep.subr.mxu0 0.0
      %580 = vmatpush1.msra.mxu0 0.0
      %581 = vmatprep.subr.mxu0 0.0
      %582 = vmatpush1.msra.mxu0 0.0
      %583 = vmatprep.subr.mxu0 0.0
      %584 = vmatpush1.msra.mxu0 0.0
      %585 = vmatprep.subr.mxu0 0.0
      %586 = vmatpush1.msra.mxu0 0.0
      %587 = vmatprep.subr.mxu0 0.0
      %588 = vmatpush1.msra.mxu0 0.0
      %589 = vmatprep.subr.mxu0 0.0
      %590 = vmatpush1.msra.mxu0 0.0
      %591 = vmatprep.subr.mxu0 0.0
      %592 = vmatpush1.msra.mxu0 0.0
      %593 = vmatprep.subr.mxu0 0.0
      %594 = vmatpush1.msra.mxu0 0.0
      %595 = vmatprep.subr.mxu0 0.0
      %596 = vmatpush1.msra.mxu0 0.0
      %597 = vmatprep.subr.mxu0 0.0
      %598 = vmatpush1.msra.mxu0 0.0
      %599 = vmatprep.subr.mxu0 0.0
      %600 = vmatpush1.msra.mxu0 0.0
      %601 = vmatprep.subr.mxu0 0.0
      %602 = vmatpush1.msra.mxu0 0.0
      %603 = vmatprep.subr.mxu0 0.0
      %604 = vmatpush1.msra.mxu0 0.0
      %605 = vmatprep.subr.mxu0 0.0
      %606 = vmatpush1.msra.mxu0 0.0
      %607 = vmatprep.subr.mxu0 0.0
      %608 = vmatpush1.msra.mxu0 0.0
      %609 = vmatprep.subr.mxu0 0.0
      %610 = vmatpush1.msra.mxu0 0.0
      %611 = vmatprep.subr.mxu0 0.0
      %612 = vmatpush1.msra.mxu0 0.0
      %613 = vmatprep.subr.mxu0 0.0
      %614 = vmatpush1.msra.mxu0 0.0
      %615 = vmatprep.subr.mxu0 0.0
      %616 = vmatpush1.msra.mxu0 0.0
      %617 = vmatprep.subr.mxu0 0.0
      %618 = vmatpush1.msra.mxu0 0.0
      %619 = vmatprep.subr.mxu0 0.0
      %620 = vmatpush1.msra.mxu0 0.0
      %621 = vmatprep.subr.mxu0 0.0
      %622 = vmatpush1.msra.mxu0 0.0
      %623 = vmatprep.subr.mxu0 0.0
      %624 = vmatpush1.msra.mxu0 0.0
      %625 = vmatprep.subr.mxu0 0.0
      %626 = vmatpush1.msra.mxu0 0.0
      %627 = vmatprep.subr.mxu0 0.0
      %628 = vmatpush1.msra.mxu0 0.0
      %629 = vmatprep.subr.mxu0 0.0
      %630 = vmatpush1.msra.mxu0 0.0
      %631 = vmatprep.subr.mxu0 0.0
      %632 = vmatpush1.msra.mxu0 0.0
      %633 = vmatprep.subr.mxu0 0.0
      %634 = vmatpush1.msra.mxu0 0.0
      %635 = vmatprep.subr.mxu0 0.0
      %636 = vmatpush1.msra.mxu0 0.0
      %637 = vmatprep.mubr.f32.mxu0 0.0
      %638 = vmatmul.mubr.f32.gmra.mrb[0].mxu0 %v534
      %v639 = vpop.f32.mrb[0].mxu0
      %v640 = vadd.f32 %v530, %v639
      %v641 = vpop.f32.mrb[0].mxu0
      %642 = vmatprep.mubr.f32.mxu0 0.0
      %643 = vmatmul.mubr.f32.gmra.mrb[0].mxu0 %v537
      %v644 = vpop.f32.mrb[0].mxu0
      %v645 = vadd.f32 %v530, %v644
      %v646 = vpop.f32.mrb[0].mxu0
      %647 = vmatprep.mubr.f32.mxu0 0.0
      %648 = vmatmul.mubr.f32.gmra.mrb[0].mxu0 %v540
      %v649 = vpop.f32.mrb[0].mxu0
      %v650 = vadd.f32 %v530, %v649
      %v651 = vpop.f32.mrb[0].mxu0
      %652 = vmatprep.mubr.f32.mxu0 0.0
      %653 = vmatmul.mubr.f32.gmra.mrb[0].mxu0 %v543
      %v654 = vpop.f32.mrb[0].mxu0
      %v655 = vadd.f32 %v530, %v654
      %v656 = vpop.f32.mrb[0].mxu0
      %657 = vmatprep.mubr.f32.mxu0 0.0
      %658 = vmatmul.mubr.f32.gmra.mrb[0].mxu0 %v546
      %v659 = vpop.f32.mrb[0].mxu0
      %v660 = vadd.f32 %v530, %v659
      %v661 = vpop.f32.mrb[0].mxu0
      %662 = vmatprep.mubr.f32.mxu0 0.0
      %663 = vmatmul.mubr.f32.gmra.mrb[0].mxu0 %v549
      %v664 = vpop.f32.mrb[0].mxu0
      %v665 = vadd.f32 %v530, %v664
      %v666 = vpop.f32.mrb[0].mxu0
      %667 = vmatprep.mubr.f32.mxu0 0.0
      %668 = vmatmul.mubr.f32.gmra.mrb[0].mxu0 %v552
      %v669 = vpop.f32.mrb[0].mxu0
      %v670 = vadd.f32 %v530, %v669
      %v671 = vpop.f32.mrb[0].mxu0
      %672 = vmatprep.mubr.f32.mxu0 0.0
      %673 = vmatmul.mubr.f32.gmra.mrb[0].mxu0 %v555
      %v674 = vpop.f32.mrb[0].mxu0
      %v675 = vadd.f32 %v530, %v674
      %v676 = vpop.f32.mrb[0].mxu0
      %677 = vmatprep.mubr.f32.mxu0 0.0
      %678 = vmatmul.mubr.f32.gmra.mrb[0].mxu0 %v558
      %v679 = vpop.f32.mrb[0].mxu0
      %v680 = vadd.f32 %v530, %v679
      %v681 = vpop.f32.mrb[0].mxu0
      %682 = vmatprep.mubr.f32.mxu0 0.0
      %683 = vmatmul.mubr.f32.gmra.mrb[0].mxu0 %v561
      %v684 = vpop.f32.mrb[0].mxu0
      %v685 = vadd.f32 %v530, %v684
      %v686 = vpop.f32.mrb[0].mxu0
      %687 = vmatprep.mubr.f32.mxu0 0.0
      %688 = vmatmul.mubr.f32.gmra.mrb[0].mxu0 %v564
      %v689 = vpop.f32.mrb[0].mxu0
      %v690 = vadd.f32 %v530, %v689
      %v691 = vpop.f32.mrb[0].mxu0
      %692 = vmatprep.mubr.f32.mxu0 0.0
      %693 = vmatmul.mubr.f32.gmra.mrb[0].mxu0 %v567
      %v694 = vpop.f32.mrb[0].mxu0
      %v695 = vadd.f32 %v530, %v694
      %v696 = vpop.f32.mrb[0].mxu0
      %697 = vdwg.mxu0
      %v698 = vmax.f32 %v640, 0.0
      %v699 = vmax.f32 %v645, 0.0
      %v700 = vmax.f32 %v650, 0.0
      %v701 = vmax.f32 %v655, 0.0
      %v702 = vmax.f32 %v660, 0.0
      %v703 = vmax.f32 %v665, 0.0
      %v704 = vmax.f32 %v670, 0.0
      %v705 = vmax.f32 %v675, 0.0
      %v706 = vmax.f32 %v680, 0.0
      %v707 = vmax.f32 %v685, 0.0
      %v708 = vmax.f32 %v690, 0.0
      %v709 = vmax.f32 %v695, 0.0
      %v710 = vlaneseq
      %v711 = vshrl.u32 %v710, 7
      %v712 = vadd.s32 %v711, 8
      %v713 = vadd.s32 %v711, 16
      %v714 = vadd.s32 %v711, 24
      %v715 = vadd.s32 %v711, 32
      %v716 = vadd.s32 %v711, 40
      %v717 = vadd.s32 %v711, 48
      %v718 = vadd.s32 %v711, 56
      %v719 = vadd.s32 %v711, 64
      %v720 = vadd.s32 %v711, 72
      %v721 = vadd.s32 %v711, 80
      %v722 = vadd.s32 %v711, 88
      %v723 = vand.u32 %v711, 15
      %v724 = vand.u32 %v712, 15
      %v725 = vand.u32 %v713, 15
      %v726 = vand.u32 %v714, 15
      %v727 = vand.u32 %v715, 15
      %v728 = vand.u32 %v716, 15
      %v729 = vand.u32 %v717, 15
      %v730 = vand.u32 %v718, 15
      %v731 = vand.u32 %v719, 15
      %v732 = vand.u32 %v720, 15
      %v733 = vand.u32 %v721, 15
      %v734 = vand.u32 %v722, 15
      %vm735 = vcmp.gt.s32.totalorder %v723, 0
      %vm736 = vcmp.gt.s32.totalorder %v724, 0
      %vm737 = vcmp.gt.s32.totalorder %v725, 0
      %vm738 = vcmp.gt.s32.totalorder %v726, 0
      %vm739 = vcmp.gt.s32.totalorder %v727, 0
      %vm740 = vcmp.gt.s32.totalorder %v728, 0
      %vm741 = vcmp.gt.s32.totalorder %v729, 0
      %vm742 = vcmp.gt.s32.totalorder %v730, 0
      %vm743 = vcmp.gt.s32.totalorder %v731, 0
      %vm744 = vcmp.gt.s32.totalorder %v732, 0
      %vm745 = vcmp.gt.s32.totalorder %v733, 0
      %vm746 = vcmp.gt.s32.totalorder %v734, 0
      %v747 = vsel %vm735, 1, 0
      %v748 = vsel %vm736, 1, 0
      %v749 = vsel %vm737, 1, 0
      %v750 = vsel %vm738, 1, 0
      %v751 = vsel %vm739, 1, 0
      %v752 = vsel %vm740, 1, 0
      %v753 = vsel %vm741, 1, 0
      %v754 = vsel %vm742, 1, 0
      %v755 = vsel %vm743, 1, 0
      %v756 = vsel %vm744, 1, 0
      %v757 = vsel %vm745, 1, 0
      %v758 = vsel %vm746, 1, 0
      %v759 = vcvt.s32.f32 %v747
      %v760 = vcvt.s32.f32 %v748
      %v761 = vcvt.s32.f32 %v749
      %v762 = vcvt.s32.f32 %v750
      %v763 = vcvt.s32.f32 %v751
      %v764 = vcvt.s32.f32 %v752
      %v765 = vcvt.s32.f32 %v753
      %v766 = vcvt.s32.f32 %v754
      %v767 = vcvt.s32.f32 %v755
      %v768 = vcvt.s32.f32 %v756
      %v769 = vcvt.s32.f32 %v757
      %v770 = vcvt.s32.f32 %v758
      %vm771 = vcmp.lt.s32.totalorder %v723, 15
      %vm772 = vcmp.lt.s32.totalorder %v724, 15
      %vm773 = vcmp.lt.s32.totalorder %v725, 15
      %vm774 = vcmp.lt.s32.totalorder %v726, 15
      %vm775 = vcmp.lt.s32.totalorder %v727, 15
      %vm776 = vcmp.lt.s32.totalorder %v728, 15
      %vm777 = vcmp.lt.s32.totalorder %v729, 15
      %vm778 = vcmp.lt.s32.totalorder %v730, 15
      %vm779 = vcmp.lt.s32.totalorder %v731, 15
      %vm780 = vcmp.lt.s32.totalorder %v732, 15
      %vm781 = vcmp.lt.s32.totalorder %v733, 15
      %vm782 = vcmp.lt.s32.totalorder %v734, 15
      %v783 = vsel %vm771, 1, 0
      %v784 = vsel %vm772, 1, 0
      %v785 = vsel %vm773, 1, 0
      %v786 = vsel %vm774, 1, 0
      %v787 = vsel %vm775, 1, 0
      %v788 = vsel %vm776, 1, 0
      %v789 = vsel %vm777, 1, 0
      %v790 = vsel %vm778, 1, 0
      %v791 = vsel %vm779, 1, 0
      %v792 = vsel %vm780, 1, 0
      %v793 = vsel %vm781, 1, 0
      %v794 = vsel %vm782, 1, 0
      %v795 = vcvt.s32.f32 %v783
      %v796 = vcvt.s32.f32 %v784
      %v797 = vcvt.s32.f32 %v785
      %v798 = vcvt.s32.f32 %v786
      %v799 = vcvt.s32.f32 %v787
      %v800 = vcvt.s32.f32 %v788
      %v801 = vcvt.s32.f32 %v789
      %v802 = vcvt.s32.f32 %v790
      %v803 = vcvt.s32.f32 %v791
      %v804 = vcvt.s32.f32 %v792
      %v805 = vcvt.s32.f32 %v793
      %v806 = vcvt.s32.f32 %v794
      %v807 = vrot.slane %v698, 7
      %v808 = vrot.slane %v699, 7
      %v809 = vrot.slane %v700, 7
      %v810 = vrot.slane %v701, 7
      %v811 = vrot.slane %v702, 7
      %v812 = vrot.slane %v703, 7
      %v813 = vrot.slane %v704, 7
      %v814 = vrot.slane %v705, 7
      %v815 = vrot.slane %v706, 7
      %v816 = vrot.slane %v707, 7
      %v817 = vrot.slane %v708, 7
      %v818 = vrot.slane %v709, 7
      %vm819 = vcmp.lt.s32.totalorder %v711, 1
      %v820 = vsel %vm819, %v817, %v818
      %v821 = vsel %vm819, %v816, %v817
      %v822 = vsel %vm819, %v815, %v816
      %v823 = vsel %vm819, %v814, %v815
      %v824 = vsel %vm819, %v813, %v814
      %v825 = vsel %vm819, %v812, %v813
      %v826 = vsel %vm819, %v811, %v812
      %v827 = vsel %vm819, %v810, %v811
      %v828 = vsel %vm819, %v809, %v810
      %v829 = vsel %vm819, %v808, %v809
      %v830 = vsel %vm819, %v807, %v808
      %v831 = vsel %vm819, %v818, %v807
      %v832 = vmul.f32 %v831, %v759
      %v833 = vmul.f32 %v830, %v760
      %v834 = vmul.f32 %v829, %v761
      %v835 = vmul.f32 %v828, %v762
      %v836 = vmul.f32 %v827, %v763
      %v837 = vmul.f32 %v826, %v764
      %v838 = vmul.f32 %v825, %v765
      %v839 = vmul.f32 %v824, %v766
      %v840 = vmul.f32 %v823, %v767
      %v841 = vmul.f32 %v822, %v768
      %v842 = vmul.f32 %v821, %v769
      %v843 = vmul.f32 %v820, %v770
      %v844 = vrot.slane %v698, 1
      %v845 = vrot.slane %v699, 1
      %v846 = vrot.slane %v700, 1
      %v847 = vrot.slane %v701, 1
      %v848 = vrot.slane %v702, 1
      %v849 = vrot.slane %v703, 1
      %v850 = vrot.slane %v704, 1
      %v851 = vrot.slane %v705, 1
      %v852 = vrot.slane %v706, 1
      %v853 = vrot.slane %v707, 1
      %v854 = vrot.slane %v708, 1
      %v855 = vrot.slane %v709, 1
      %vm856 = vcmp.lt.s32.totalorder %v711, 7
      %v857 = vsel %vm856, %v854, %v855
      %v858 = vsel %vm856, %v853, %v854
      %v859 = vsel %vm856, %v852, %v853
      %v860 = vsel %vm856, %v851, %v852
      %v861 = vsel %vm856, %v850, %v851
      %v862 = vsel %vm856, %v849, %v850
      %v863 = vsel %vm856, %v848, %v849
      %v864 = vsel %vm856, %v847, %v848
      %v865 = vsel %vm856, %v846, %v847
      %v866 = vsel %vm856, %v845, %v846
      %v867 = vsel %vm856, %v844, %v845
      %v868 = vsel %vm856, %v855, %v844
      %v869 = vmul.f32 %v867, %v795
      %v870 = vmul.f32 %v866, %v796
      %v871 = vmul.f32 %v865, %v797
      %v872 = vmul.f32 %v864, %v798
      %v873 = vmul.f32 %v863, %v799
      %v874 = vmul.f32 %v862, %v800
      %v875 = vmul.f32 %v861, %v801
      %v876 = vmul.f32 %v860, %v802
      %v877 = vmul.f32 %v859, %v803
      %v878 = vmul.f32 %v858, %v804
      %v879 = vmul.f32 %v857, %v805
      %v880 = vmul.f32 %v868, %v806
      %v881 = vld [vmem:[%s5] sm:$0xff]
      %v882 = vld [vmem:[%s5 + $0x8] sm:$0xff]
      %v883 = vld [vmem:[%s5 + $0x10] sm:$0xff]
      %v884 = vld [vmem:[%s5 + $0x18] sm:$0xff]
      %v885 = vld [vmem:[%s5 + $0x20] sm:$0xff]
      %v886 = vld [vmem:[%s5 + $0x28] sm:$0xff]
      %v887 = vld [vmem:[%s5 + $0x30] sm:$0xff]
      %v888 = vld [vmem:[%s5 + $0x38] sm:$0xff]
      %v889 = vld [vmem:[%s5 + $0x40] sm:$0xff]
      %v890 = vld [vmem:[%s5 + $0x48] sm:$0xff]
      %v891 = vld [vmem:[%s5 + $0x50] sm:$0xff]
      %v892 = vld [vmem:[%s5 + $0x58] sm:$0xff]
      %v893 = vld [vmem:[%s5 + $0x60] sm:$0xff]
      %v894 = vld [vmem:[%s5 + $0x68] sm:$0xff]
      %v895 = vld [vmem:[%s5 + $0x70] sm:$0xff]
      %v896 = vld [vmem:[%s5 + $0x78] sm:$0xff]
      %v897 = vld [vmem:[%s5 + $0x80] sm:$0xff]
      %v898 = vld [vmem:[%s5 + $0x88] sm:$0xff]
      %v899 = vld [vmem:[%s5 + $0x90] sm:$0xff]
      %v900 = vld [vmem:[%s5 + $0x98] sm:$0xff]
      %v901 = vld [vmem:[%s5 + $0xa0] sm:$0xff]
      %v902 = vld [vmem:[%s5 + $0xa8] sm:$0xff]
      %v903 = vld [vmem:[%s5 + $0xb0] sm:$0xff]
      %v904 = vld [vmem:[%s5 + $0xb8] sm:$0xff]
      %v905 = vld [vmem:[%s5 + $0xc0] sm:$0xff]
      %v906 = vld [vmem:[%s5 + $0xc8] sm:$0xff]
      %v907 = vld [vmem:[%s5 + $0xd0] sm:$0xff]
      %v908 = vld [vmem:[%s5 + $0xd8] sm:$0xff]
      %v909 = vld [vmem:[%s5 + $0xe0] sm:$0xff]
      %v910 = vld [vmem:[%s5 + $0xe8] sm:$0xff]
      %v911 = vld [vmem:[%s5 + $0xf0] sm:$0xff]
      %v912 = vld [vmem:[%s5 + $0xf8] sm:$0xff]
      %v913 = vld [vmem:[%s5 + $0x100] sm:$0xff]
      %v914 = vld [vmem:[%s5 + $0x108] sm:$0xff]
      %v915 = vld [vmem:[%s5 + $0x110] sm:$0xff]
      %v916 = vld [vmem:[%s5 + $0x118] sm:$0xff]
      %v917 = vld [vmem:[%s5 + $0x120] sm:$0xff]
      %v918 = vld [vmem:[%s5 + $0x128] sm:$0xff]
      %v919 = vld [vmem:[%s5 + $0x130] sm:$0xff]
      %v920 = vld [vmem:[%s5 + $0x138] sm:$0xff]
      %v921 = vld [vmem:[%s5 + $0x140] sm:$0xff]
      %v922 = vld [vmem:[%s5 + $0x148] sm:$0xff]
      %v923 = vld [vmem:[%s5 + $0x150] sm:$0xff]
      %v924 = vld [vmem:[%s5 + $0x158] sm:$0xff]
      %v925 = vld [vmem:[%s5 + $0x160] sm:$0xff]
      %v926 = vld [vmem:[%s5 + $0x168] sm:$0xff]
      %v927 = vld [vmem:[%s5 + $0x170] sm:$0xff]
      %v928 = vld [vmem:[%s5 + $0x178] sm:$0xff]
      %s929 = scalar_lea.vmem %s5, 384
      %v930 = vld [vmem:[%s929] sm:$0xff]
      %v931 = vld [vmem:[%s929 + $0x8] sm:$0xff]
      %v932 = vld [vmem:[%s929 + $0x10] sm:$0xff]
      %v933 = vld [vmem:[%s929 + $0x18] sm:$0xff]
      %v934 = vld [vmem:[%s929 + $0x20] sm:$0xff]
      %v935 = vld [vmem:[%s929 + $0x28] sm:$0xff]
      %v936 = vld [vmem:[%s929 + $0x30] sm:$0xff]
      %v937 = vld [vmem:[%s929 + $0x38] sm:$0xff]
      %v938 = vld [vmem:[%s929 + $0x40] sm:$0xff]
      %v939 = vld [vmem:[%s929 + $0x48] sm:$0xff]
      %v940 = vld [vmem:[%s929 + $0x50] sm:$0xff]
      %v941 = vld [vmem:[%s929 + $0x58] sm:$0xff]
      %v942 = vld [vmem:[%s929 + $0x60] sm:$0xff]
      %v943 = vld [vmem:[%s929 + $0x68] sm:$0xff]
      %v944 = vld [vmem:[%s929 + $0x70] sm:$0xff]
      %v945 = vld [vmem:[%s929 + $0x78] sm:$0xff]
      %v946 = vld [vmem:[%s929 + $0x80] sm:$0xff]
      %v947 = vld [vmem:[%s929 + $0x88] sm:$0xff]
      %v948 = vld [vmem:[%s929 + $0x90] sm:$0xff]
      %v949 = vld [vmem:[%s929 + $0x98] sm:$0xff]
      %v950 = vld [vmem:[%s929 + $0xa0] sm:$0xff]
      %v951 = vld [vmem:[%s929 + $0xa8] sm:$0xff]
      %v952 = vld [vmem:[%s929 + $0xb0] sm:$0xff]
      %v953 = vld [vmem:[%s929 + $0xb8] sm:$0xff]
      %v954 = vld [vmem:[%s929 + $0xc0] sm:$0xff]
      %v955 = vld [vmem:[%s929 + $0xc8] sm:$0xff]
      %v956 = vld [vmem:[%s929 + $0xd0] sm:$0xff]
      %v957 = vld [vmem:[%s929 + $0xd8] sm:$0xff]
      %v958 = vld [vmem:[%s929 + $0xe0] sm:$0xff]
      %v959 = vld [vmem:[%s929 + $0xe8] sm:$0xff]
      %v960 = vld [vmem:[%s929 + $0xf0] sm:$0xff]
      %v961 = vld [vmem:[%s929 + $0xf8] sm:$0xff]
      %v962 = vld [vmem:[%s929 + $0x100] sm:$0xff]
      %v963 = vld [vmem:[%s929 + $0x108] sm:$0xff]
      %v964 = vld [vmem:[%s929 + $0x110] sm:$0xff]
      %v965 = vld [vmem:[%s929 + $0x118] sm:$0xff]
      %v966 = vld [vmem:[%s929 + $0x120] sm:$0xff]
      %v967 = vld [vmem:[%s929 + $0x128] sm:$0xff]
      %v968 = vld [vmem:[%s929 + $0x130] sm:$0xff]
      %v969 = vld [vmem:[%s929 + $0x138] sm:$0xff]
      %v970 = vld [vmem:[%s929 + $0x140] sm:$0xff]
      %v971 = vld [vmem:[%s929 + $0x148] sm:$0xff]
      %v972 = vld [vmem:[%s929 + $0x150] sm:$0xff]
      %v973 = vld [vmem:[%s929 + $0x158] sm:$0xff]
      %v974 = vld [vmem:[%s929 + $0x160] sm:$0xff]
      %v975 = vld [vmem:[%s929 + $0x168] sm:$0xff]
      %v976 = vld [vmem:[%s929 + $0x170] sm:$0xff]
      %v977 = vld [vmem:[%s929 + $0x178] sm:$0xff]
      %978 = vmatprep.subr.mxu0 0.0
      %979 = vmatpush1.msra.mxu0 %v930
      %980 = vmatprep.subr.mxu0 0.0
      %981 = vmatpush1.msra.mxu0 %v931
      %982 = vmatprep.subr.mxu0 0.0
      %983 = vmatpush1.msra.mxu0 %v932
      %984 = vmatprep.subr.mxu0 0.0
      %985 = vmatpush1.msra.mxu0 %v933
      %986 = vmatprep.subr.mxu0 0.0
      %987 = vmatpush1.msra.mxu0 %v934
      %988 = vmatprep.subr.mxu0 0.0
      %989 = vmatpush1.msra.mxu0 %v935
      %990 = vmatprep.subr.mxu0 0.0
      %991 = vmatpush1.msra.mxu0 %v936
      %992 = vmatprep.subr.mxu0 0.0
      %993 = vmatpush1.msra.mxu0 %v937
      %994 = vmatprep.subr.mxu0 0.0
      %995 = vmatpush1.msra.mxu0 %v938
      %996 = vmatprep.subr.mxu0 0.0
      %997 = vmatpush1.msra.mxu0 %v939
      %998 = vmatprep.subr.mxu0 0.0
      %999 = vmatpush1.msra.mxu0 %v940
      %1000 = vmatprep.subr.mxu0 0.0
      %1001 = vmatpush1.msra.mxu0 %v941
      %1002 = vmatprep.subr.mxu0 0.0
      %1003 = vmatpush1.msra.mxu0 %v942
      %1004 = vmatprep.subr.mxu0 0.0
      %1005 = vmatpush1.msra.mxu0 %v943
      %1006 = vmatprep.subr.mxu0 0.0
      %1007 = vmatpush1.msra.mxu0 %v944
      %1008 = vmatprep.subr.mxu0 0.0
      %1009 = vmatpush1.msra.mxu0 %v945
      %1010 = vmatprep.subr.mxu0 0.0
      %1011 = vmatpush1.msra.mxu0 %v946
      %1012 = vmatprep.subr.mxu0 0.0
      %1013 = vmatpush1.msra.mxu0 %v947
      %1014 = vmatprep.subr.mxu0 0.0
      %1015 = vmatpush1.msra.mxu0 %v948
      %1016 = vmatprep.subr.mxu0 0.0
      %1017 = vmatpush1.msra.mxu0 %v949
      %1018 = vmatprep.subr.mxu0 0.0
      %1019 = vmatpush1.msra.mxu0 %v950
      %1020 = vmatprep.subr.mxu0 0.0
      %1021 = vmatpush1.msra.mxu0 %v951
      %1022 = vmatprep.subr.mxu0 0.0
      %1023 = vmatpush1.msra.mxu0 %v952
      %1024 = vmatprep.subr.mxu0 0.0
      %1025 = vmatpush1.msra.mxu0 %v953
      %1026 = vmatprep.subr.mxu0 0.0
      %1027 = vmatpush1.msra.mxu0 %v954
      %1028 = vmatprep.subr.mxu0 0.0
      %1029 = vmatpush1.msra.mxu0 %v955
      %1030 = vmatprep.subr.mxu0 0.0
      %1031 = vmatpush1.msra.mxu0 %v956
      %1032 = vmatprep.subr.mxu0 0.0
      %1033 = vmatpush1.msra.mxu0 %v957
      %1034 = vmatprep.subr.mxu0 0.0
      %1035 = vmatpush1.msra.mxu0 %v958
      %1036 = vmatprep.subr.mxu0 0.0
      %1037 = vmatpush1.msra.mxu0 %v959
      %1038 = vmatprep.subr.mxu0 0.0
      %1039 = vmatpush1.msra.mxu0 %v960
      %1040 = vmatprep.subr.mxu0 0.0
      %1041 = vmatpush1.msra.mxu0 %v961
      %1042 = vmatprep.mubr.f32.mxu0 %v700
      %1043 = vmatmul.mubr.f32.gmra.mrb[0].mxu0 %v834
      %v1044 = vpop.f32.mrb[0].mxu0
      %v1045 = vadd.f32 0.0, %v1044
      %v1046 = vpop.f32.mrb[0].mxu0
      %1047 = vmatprep.mubr.f32.mxu0 %v701
      %1048 = vmatmul.mubr.f32.gmra.mrb[0].mxu0 %v835
      %v1049 = vpop.f32.mrb[0].mxu0
      %v1050 = vadd.f32 0.0, %v1049
      %v1051 = vpop.f32.mrb[0].mxu0
      %1052 = vmatprep.mubr.f32.mxu0 %v702
      %1053 = vmatmul.mubr.f32.gmra.mrb[0].mxu0 %v836
      %v1054 = vpop.f32.mrb[0].mxu0
      %v1055 = vadd.f32 0.0, %v1054
      %v1056 = vpop.f32.mrb[0].mxu0
      %1057 = vmatprep.mubr.f32.mxu0 %v703
      %1058 = vmatmul.mubr.f32.gmra.mrb[0].mxu0 %v837
      %v1059 = vpop.f32.mrb[0].mxu0
      %v1060 = vadd.f32 0.0, %v1059
      %v1061 = vpop.f32.mrb[0].mxu0
      %1062 = vmatprep.mubr.f32.mxu0 %v704
      %1063 = vmatmul.mubr.f32.gmra.mrb[0].mxu0 %v838
      %v1064 = vpop.f32.mrb[0].mxu0
      %v1065 = vadd.f32 0.0, %v1064
      %v1066 = vpop.f32.mrb[0].mxu0
      %1067 = vmatprep.mubr.f32.mxu0 %v705
      %1068 = vmatmul.mubr.f32.gmra.mrb[0].mxu0 %v839
      %v1069 = vpop.f32.mrb[0].mxu0
      %v1070 = vadd.f32 0.0, %v1069
      %v1071 = vpop.f32.mrb[0].mxu0
      %1072 = vmatprep.mubr.f32.mxu0 %v706
      %1073 = vmatmul.mubr.f32.gmra.mrb[0].mxu0 %v840
      %v1074 = vpop.f32.mrb[0].mxu0
      %v1075 = vadd.f32 0.0, %v1074
      %v1076 = vpop.f32.mrb[0].mxu0
      %1077 = vmatprep.mubr.f32.mxu0 %v707
      %1078 = vmatmul.mubr.f32.gmra.mrb[0].mxu0 %v841
      %v1079 = vpop.f32.mrb[0].mxu0
      %v1080 = vadd.f32 0.0, %v1079
      %v1081 = vpop.f32.mrb[0].mxu0
      %1082 = vdwg.mxu0
      %1083 = vmatprep.subr.mxu0 0.0
      %1084 = vmatpush1.msra.mxu0 %v962
      %1085 = vmatprep.subr.mxu0 0.0
      %1086 = vmatpush1.msra.mxu0 %v963
      %1087 = vmatprep.subr.mxu0 0.0
      %1088 = vmatpush1.msra.mxu0 %v964
      %1089 = vmatprep.subr.mxu0 0.0
      %1090 = vmatpush1.msra.mxu0 %v965
      %1091 = vmatprep.subr.mxu0 0.0
      %1092 = vmatpush1.msra.mxu0 %v966
      %1093 = vmatprep.subr.mxu0 0.0
      %1094 = vmatpush1.msra.mxu0 %v967
      %1095 = vmatprep.subr.mxu0 0.0
      %1096 = vmatpush1.msra.mxu0 %v968
      %1097 = vmatprep.subr.mxu0 0.0
      %1098 = vmatpush1.msra.mxu0 %v969
      %1099 = vmatprep.subr.mxu0 0.0
      %1100 = vmatpush1.msra.mxu0 %v970
      %1101 = vmatprep.subr.mxu0 0.0
      %1102 = vmatpush1.msra.mxu0 %v971
      %1103 = vmatprep.subr.mxu0 0.0
      %1104 = vmatpush1.msra.mxu0 %v972
      %1105 = vmatprep.subr.mxu0 0.0
      %1106 = vmatpush1.msra.mxu0 %v973
      %1107 = vmatprep.subr.mxu0 0.0
      %1108 = vmatpush1.msra.mxu0 %v974
      %1109 = vmatprep.subr.mxu0 0.0
      %1110 = vmatpush1.msra.mxu0 %v975
      %1111 = vmatprep.subr.mxu0 0.0
      %1112 = vmatpush1.msra.mxu0 %v976
      %1113 = vmatprep.subr.mxu0 0.0
      %1114 = vmatpush1.msra.mxu0 %v977
      %1115 = vmatprep.subr.mxu0 0.0
      %1116 = vmatpush1.msra.mxu0 0.0
      %1117 = vmatprep.subr.mxu0 0.0
      %1118 = vmatpush1.msra.mxu0 0.0
      %1119 = vmatprep.subr.mxu0 0.0
      %1120 = vmatpush1.msra.mxu0 0.0
      %1121 = vmatprep.subr.mxu0 0.0
      %1122 = vmatpush1.msra.mxu0 0.0
      %1123 = vmatprep.subr.mxu0 0.0
      %1124 = vmatpush1.msra.mxu0 0.0
      %1125 = vmatprep.subr.mxu0 0.0
      %1126 = vmatpush1.msra.mxu0 0.0
      %1127 = vmatprep.subr.mxu0 0.0
      %1128 = vmatpush1.msra.mxu0 0.0
      %1129 = vmatprep.subr.mxu0 0.0
      %1130 = vmatpush1.msra.mxu0 0.0
      %1131 = vmatprep.subr.mxu0 0.0
      %1132 = vmatpush1.msra.mxu0 0.0
      %1133 = vmatprep.subr.mxu0 0.0
      %1134 = vmatpush1.msra.mxu0 0.0
      %1135 = vmatprep.subr.mxu0 0.0
      %1136 = vmatpush1.msra.mxu0 0.0
      %1137 = vmatprep.subr.mxu0 0.0
      %1138 = vmatpush1.msra.mxu0 0.0
      %1139 = vmatprep.subr.mxu0 0.0
      %1140 = vmatpush1.msra.mxu0 0.0
      %1141 = vmatprep.subr.mxu0 0.0
      %1142 = vmatpush1.msra.mxu0 0.0
      %1143 = vmatprep.subr.mxu0 0.0
      %1144 = vmatpush1.msra.mxu0 0.0
      %1145 = vmatprep.subr.mxu0 0.0
      %1146 = vmatpush1.msra.mxu0 0.0
      %1147 = vmatprep.mubr.f32.mxu0 0.0
      %1148 = vmatmul.mubr.f32.gmra.mrb[0].mxu0 %v871
      %v1149 = vpop.f32.mrb[0].mxu0
      %v1150 = vadd.f32 %v1045, %v1149
      %v1151 = vpop.f32.mrb[0].mxu0
      %1152 = vmatprep.mubr.f32.mxu0 0.0
      %1153 = vmatmul.mubr.f32.gmra.mrb[0].mxu0 %v872
      %v1154 = vpop.f32.mrb[0].mxu0
      %v1155 = vadd.f32 %v1050, %v1154
      %v1156 = vpop.f32.mrb[0].mxu0
      %1157 = vmatprep.mubr.f32.mxu0 0.0
      %1158 = vmatmul.mubr.f32.gmra.mrb[0].mxu0 %v873
      %v1159 = vpop.f32.mrb[0].mxu0
      %v1160 = vadd.f32 %v1055, %v1159
      %v1161 = vpop.f32.mrb[0].mxu0
      %1162 = vmatprep.mubr.f32.mxu0 0.0
      %1163 = vmatmul.mubr.f32.gmra.mrb[0].mxu0 %v874
      %v1164 = vpop.f32.mrb[0].mxu0
      %v1165 = vadd.f32 %v1060, %v1164
      %v1166 = vpop.f32.mrb[0].mxu0
      %1167 = vmatprep.mubr.f32.mxu0 0.0
      %1168 = vmatmul.mubr.f32.gmra.mrb[0].mxu0 %v875
      %v1169 = vpop.f32.mrb[0].mxu0
      %v1170 = vadd.f32 %v1065, %v1169
      %v1171 = vpop.f32.mrb[0].mxu0
      %1172 = vmatprep.mubr.f32.mxu0 0.0
      %1173 = vmatmul.mubr.f32.gmra.mrb[0].mxu0 %v876
      %v1174 = vpop.f32.mrb[0].mxu0
      %v1175 = vadd.f32 %v1070, %v1174
      %v1176 = vpop.f32.mrb[0].mxu0
      %1177 = vmatprep.mubr.f32.mxu0 0.0
      %1178 = vmatmul.mubr.f32.gmra.mrb[0].mxu0 %v877
      %v1179 = vpop.f32.mrb[0].mxu0
      %v1180 = vadd.f32 %v1075, %v1179
      %v1181 = vpop.f32.mrb[0].mxu0
      %1182 = vmatprep.mubr.f32.mxu0 0.0
      %1183 = vmatmul.mubr.f32.gmra.mrb[0].mxu0 %v878
      %v1184 = vpop.f32.mrb[0].mxu0
      %v1185 = vadd.f32 %v1080, %v1184
      %v1186 = vpop.f32.mrb[0].mxu0
      %1187 = vdwg.mxu0
      %1188 = vmatprep.subr.mxu0 0.0
      %1189 = vmatpush1.msra.mxu0 %v881
      %1190 = vmatprep.subr.mxu0 0.0
      %1191 = vmatpush1.msra.mxu0 %v882
      %1192 = vmatprep.subr.mxu0 0.0
      %1193 = vmatpush1.msra.mxu0 %v883
      %1194 = vmatprep.subr.mxu0 0.0
      %1195 = vmatpush1.msra.mxu0 %v884
      %1196 = vmatprep.subr.mxu0 0.0
      %1197 = vmatpush1.msra.mxu0 %v885
      %1198 = vmatprep.subr.mxu0 0.0
      %1199 = vmatpush1.msra.mxu0 %v886
      %1200 = vmatprep.subr.mxu0 0.0
      %1201 = vmatpush1.msra.mxu0 %v887
      %1202 = vmatprep.subr.mxu0 0.0
      %1203 = vmatpush1.msra.mxu0 %v888
      %1204 = vmatprep.subr.mxu0 0.0
      %1205 = vmatpush1.msra.mxu0 %v889
      %1206 = vmatprep.subr.mxu0 0.0
      %1207 = vmatpush1.msra.mxu0 %v890
      %1208 = vmatprep.subr.mxu0 0.0
      %1209 = vmatpush1.msra.mxu0 %v891
      %1210 = vmatprep.subr.mxu0 0.0
      %1211 = vmatpush1.msra.mxu0 %v892
      %1212 = vmatprep.subr.mxu0 0.0
      %1213 = vmatpush1.msra.mxu0 %v893
      %1214 = vmatprep.subr.mxu0 0.0
      %1215 = vmatpush1.msra.mxu0 %v894
      %1216 = vmatprep.subr.mxu0 0.0
      %1217 = vmatpush1.msra.mxu0 %v895
      %1218 = vmatprep.subr.mxu0 0.0
      %1219 = vmatpush1.msra.mxu0 %v896
      %1220 = vmatprep.subr.mxu0 0.0
      %1221 = vmatpush1.msra.mxu0 %v897
      %1222 = vmatprep.subr.mxu0 0.0
      %1223 = vmatpush1.msra.mxu0 %v898
      %1224 = vmatprep.subr.mxu0 0.0
      %1225 = vmatpush1.msra.mxu0 %v899
      %1226 = vmatprep.subr.mxu0 0.0
      %1227 = vmatpush1.msra.mxu0 %v900
      %1228 = vmatprep.subr.mxu0 0.0
      %1229 = vmatpush1.msra.mxu0 %v901
      %1230 = vmatprep.subr.mxu0 0.0
      %1231 = vmatpush1.msra.mxu0 %v902
      %1232 = vmatprep.subr.mxu0 0.0
      %1233 = vmatpush1.msra.mxu0 %v903
      %1234 = vmatprep.subr.mxu0 0.0
      %1235 = vmatpush1.msra.mxu0 %v904
      %1236 = vmatprep.subr.mxu0 0.0
      %1237 = vmatpush1.msra.mxu0 %v905
      %1238 = vmatprep.subr.mxu0 0.0
      %1239 = vmatpush1.msra.mxu0 %v906
      %1240 = vmatprep.subr.mxu0 0.0
      %1241 = vmatpush1.msra.mxu0 %v907
      %1242 = vmatprep.subr.mxu0 0.0
      %1243 = vmatpush1.msra.mxu0 %v908
      %1244 = vmatprep.subr.mxu0 0.0
      %1245 = vmatpush1.msra.mxu0 %v909
      %1246 = vmatprep.subr.mxu0 0.0
      %1247 = vmatpush1.msra.mxu0 %v910
      %1248 = vmatprep.subr.mxu0 0.0
      %1249 = vmatpush1.msra.mxu0 %v911
      %1250 = vmatprep.subr.mxu0 0.0
      %1251 = vmatpush1.msra.mxu0 %v912
      %1252 = vmatprep.mubr.f32.mxu0 %v698
      %1253 = vmatmul.mubr.f32.gmra.mrb[0].mxu0 %v832
      %v1254 = vpop.f32.mrb[0].mxu0
      %v1255 = vadd.f32 %v1150, %v1254
      %v1256 = vpop.f32.mrb[0].mxu0
      %1257 = vmatprep.mubr.f32.mxu0 %v699
      %1258 = vmatmul.mubr.f32.gmra.mrb[0].mxu0 %v833
      %v1259 = vpop.f32.mrb[0].mxu0
      %v1260 = vadd.f32 %v1155, %v1259
      %v1261 = vpop.f32.mrb[0].mxu0
      %1262 = vmatprep.mubr.f32.mxu0 %v700
      %1263 = vmatmul.mubr.f32.gmra.mrb[0].mxu0 %v834
      %v1264 = vpop.f32.mrb[0].mxu0
      %v1265 = vadd.f32 %v1160, %v1264
      %v1266 = vpop.f32.mrb[0].mxu0
      %1267 = vmatprep.mubr.f32.mxu0 %v701
      %1268 = vmatmul.mubr.f32.gmra.mrb[0].mxu0 %v835
      %v1269 = vpop.f32.mrb[0].mxu0
      %v1270 = vadd.f32 %v1165, %v1269
      %v1271 = vpop.f32.mrb[0].mxu0
      %1272 = vmatprep.mubr.f32.mxu0 %v702
      %1273 = vmatmul.mubr.f32.gmra.mrb[0].mxu0 %v836
      %v1274 = vpop.f32.mrb[0].mxu0
      %v1275 = vadd.f32 %v1170, %v1274
      %v1276 = vpop.f32.mrb[0].mxu0
      %1277 = vmatprep.mubr.f32.mxu0 %v703
      %1278 = vmatmul.mubr.f32.gmra.mrb[0].mxu0 %v837
      %v1279 = vpop.f32.mrb[0].mxu0
      %v1280 = vadd.f32 %v1175, %v1279
      %v1281 = vpop.f32.mrb[0].mxu0
      %1282 = vmatprep.mubr.f32.mxu0 %v704
      %1283 = vmatmul.mubr.f32.gmra.mrb[0].mxu0 %v838
      %v1284 = vpop.f32.mrb[0].mxu0
      %v1285 = vadd.f32 %v1180, %v1284
      %v1286 = vpop.f32.mrb[0].mxu0
      %1287 = vmatprep.mubr.f32.mxu0 %v705
      %1288 = vmatmul.mubr.f32.gmra.mrb[0].mxu0 %v839
      %v1289 = vpop.f32.mrb[0].mxu0
      %v1290 = vadd.f32 %v1185, %v1289
      %v1291 = vpop.f32.mrb[0].mxu0
      %1292 = vdwg.mxu0
      %1293 = vmatprep.subr.mxu0 0.0
      %1294 = vmatpush1.msra.mxu0 %v913
      %1295 = vmatprep.subr.mxu0 0.0
      %1296 = vmatpush1.msra.mxu0 %v914
      %1297 = vmatprep.subr.mxu0 0.0
      %1298 = vmatpush1.msra.mxu0 %v915
      %1299 = vmatprep.subr.mxu0 0.0
      %1300 = vmatpush1.msra.mxu0 %v916
      %1301 = vmatprep.subr.mxu0 0.0
      %1302 = vmatpush1.msra.mxu0 %v917
      %1303 = vmatprep.subr.mxu0 0.0
      %1304 = vmatpush1.msra.mxu0 %v918
      %1305 = vmatprep.subr.mxu0 0.0
      %1306 = vmatpush1.msra.mxu0 %v919
      %1307 = vmatprep.subr.mxu0 0.0
      %1308 = vmatpush1.msra.mxu0 %v920
      %1309 = vmatprep.subr.mxu0 0.0
      %1310 = vmatpush1.msra.mxu0 %v921
      %1311 = vmatprep.subr.mxu0 0.0
      %1312 = vmatpush1.msra.mxu0 %v922
      %1313 = vmatprep.subr.mxu0 0.0
      %1314 = vmatpush1.msra.mxu0 %v923
      %1315 = vmatprep.subr.mxu0 0.0
      %1316 = vmatpush1.msra.mxu0 %v924
      %1317 = vmatprep.subr.mxu0 0.0
      %1318 = vmatpush1.msra.mxu0 %v925
      %1319 = vmatprep.subr.mxu0 0.0
      %1320 = vmatpush1.msra.mxu0 %v926
      %1321 = vmatprep.subr.mxu0 0.0
      %1322 = vmatpush1.msra.mxu0 %v927
      %1323 = vmatprep.subr.mxu0 0.0
      %1324 = vmatpush1.msra.mxu0 %v928
      %1325 = vmatprep.subr.mxu0 0.0
      %1326 = vmatpush1.msra.mxu0 0.0
      %1327 = vmatprep.subr.mxu0 0.0
      %1328 = vmatpush1.msra.mxu0 0.0
      %1329 = vmatprep.subr.mxu0 0.0
      %1330 = vmatpush1.msra.mxu0 0.0
      %1331 = vmatprep.subr.mxu0 0.0
      %1332 = vmatpush1.msra.mxu0 0.0
      %1333 = vmatprep.subr.mxu0 0.0
      %1334 = vmatpush1.msra.mxu0 0.0
      %1335 = vmatprep.subr.mxu0 0.0
      %1336 = vmatpush1.msra.mxu0 0.0
      %1337 = vmatprep.subr.mxu0 0.0
      %1338 = vmatpush1.msra.mxu0 0.0
      %1339 = vmatprep.subr.mxu0 0.0
      %1340 = vmatpush1.msra.mxu0 0.0
      %1341 = vmatprep.subr.mxu0 0.0
      %1342 = vmatpush1.msra.mxu0 0.0
      %1343 = vmatprep.subr.mxu0 0.0
      %1344 = vmatpush1.msra.mxu0 0.0
      %1345 = vmatprep.subr.mxu0 0.0
      %1346 = vmatpush1.msra.mxu0 0.0
      %1347 = vmatprep.subr.mxu0 0.0
      %1348 = vmatpush1.msra.mxu0 0.0
      %1349 = vmatprep.subr.mxu0 0.0
      %1350 = vmatpush1.msra.mxu0 0.0
      %1351 = vmatprep.subr.mxu0 0.0
      %1352 = vmatpush1.msra.mxu0 0.0
      %1353 = vmatprep.subr.mxu0 0.0
      %1354 = vmatpush1.msra.mxu0 0.0
      %1355 = vmatprep.subr.mxu0 0.0
      %1356 = vmatpush1.msra.mxu0 0.0
      %1357 = vmatprep.mubr.f32.mxu0 0.0
      %1358 = vmatmul.mubr.f32.gmra.mrb[0].mxu0 %v869
      %v1359 = vpop.f32.mrb[0].mxu0
      %v1360 = vadd.f32 %v1255, %v1359
      %v1361 = vpop.f32.mrb[0].mxu0
      %1362 = vmatprep.mubr.f32.mxu0 0.0
      %1363 = vmatmul.mubr.f32.gmra.mrb[0].mxu0 %v870
      %v1364 = vpop.f32.mrb[0].mxu0
      %v1365 = vadd.f32 %v1260, %v1364
      %v1366 = vpop.f32.mrb[0].mxu0
      %1367 = vmatprep.mubr.f32.mxu0 0.0
      %1368 = vmatmul.mubr.f32.gmra.mrb[0].mxu0 %v871
      %v1369 = vpop.f32.mrb[0].mxu0
      %v1370 = vadd.f32 %v1265, %v1369
      %v1371 = vpop.f32.mrb[0].mxu0
      %1372 = vmatprep.mubr.f32.mxu0 0.0
      %1373 = vmatmul.mubr.f32.gmra.mrb[0].mxu0 %v872
      %v1374 = vpop.f32.mrb[0].mxu0
      %v1375 = vadd.f32 %v1270, %v1374
      %v1376 = vpop.f32.mrb[0].mxu0
      %1377 = vmatprep.mubr.f32.mxu0 0.0
      %1378 = vmatmul.mubr.f32.gmra.mrb[0].mxu0 %v873
      %v1379 = vpop.f32.mrb[0].mxu0
      %v1380 = vadd.f32 %v1275, %v1379
      %v1381 = vpop.f32.mrb[0].mxu0
      %1382 = vmatprep.mubr.f32.mxu0 0.0
      %1383 = vmatmul.mubr.f32.gmra.mrb[0].mxu0 %v874
      %v1384 = vpop.f32.mrb[0].mxu0
      %v1385 = vadd.f32 %v1280, %v1384
      %v1386 = vpop.f32.mrb[0].mxu0
      %1387 = vmatprep.mubr.f32.mxu0 0.0
      %1388 = vmatmul.mubr.f32.gmra.mrb[0].mxu0 %v875
      %v1389 = vpop.f32.mrb[0].mxu0
      %v1390 = vadd.f32 %v1285, %v1389
      %v1391 = vpop.f32.mrb[0].mxu0
      %1392 = vmatprep.mubr.f32.mxu0 0.0
      %1393 = vmatmul.mubr.f32.gmra.mrb[0].mxu0 %v876
      %v1394 = vpop.f32.mrb[0].mxu0
      %v1395 = vadd.f32 %v1290, %v1394
      %v1396 = vpop.f32.mrb[0].mxu0
      %1397 = vdwg.mxu0
      %s1398 = scalar_lea.vmem %s5, 768
      %v1399 = vld [vmem:[%s1398] sm:$0xff]
      %v1400 = vld [vmem:[%s1398 + $0x8] sm:$0xff]
      %v1401 = vld [vmem:[%s1398 + $0x10] sm:$0xff]
      %v1402 = vld [vmem:[%s1398 + $0x18] sm:$0xff]
      %v1403 = vld [vmem:[%s1398 + $0x20] sm:$0xff]
      %v1404 = vld [vmem:[%s1398 + $0x28] sm:$0xff]
      %v1405 = vld [vmem:[%s1398 + $0x30] sm:$0xff]
      %v1406 = vld [vmem:[%s1398 + $0x38] sm:$0xff]
      %v1407 = vld [vmem:[%s1398 + $0x40] sm:$0xff]
      %v1408 = vld [vmem:[%s1398 + $0x48] sm:$0xff]
      %v1409 = vld [vmem:[%s1398 + $0x50] sm:$0xff]
      %v1410 = vld [vmem:[%s1398 + $0x58] sm:$0xff]
      %v1411 = vld [vmem:[%s1398 + $0x60] sm:$0xff]
      %v1412 = vld [vmem:[%s1398 + $0x68] sm:$0xff]
      %v1413 = vld [vmem:[%s1398 + $0x70] sm:$0xff]
      %v1414 = vld [vmem:[%s1398 + $0x78] sm:$0xff]
      %v1415 = vld [vmem:[%s1398 + $0x80] sm:$0xff]
      %v1416 = vld [vmem:[%s1398 + $0x88] sm:$0xff]
      %v1417 = vld [vmem:[%s1398 + $0x90] sm:$0xff]
      %v1418 = vld [vmem:[%s1398 + $0x98] sm:$0xff]
      %v1419 = vld [vmem:[%s1398 + $0xa0] sm:$0xff]
      %v1420 = vld [vmem:[%s1398 + $0xa8] sm:$0xff]
      %v1421 = vld [vmem:[%s1398 + $0xb0] sm:$0xff]
      %v1422 = vld [vmem:[%s1398 + $0xb8] sm:$0xff]
      %v1423 = vld [vmem:[%s1398 + $0xc0] sm:$0xff]
      %v1424 = vld [vmem:[%s1398 + $0xc8] sm:$0xff]
      %v1425 = vld [vmem:[%s1398 + $0xd0] sm:$0xff]
      %v1426 = vld [vmem:[%s1398 + $0xd8] sm:$0xff]
      %v1427 = vld [vmem:[%s1398 + $0xe0] sm:$0xff]
      %v1428 = vld [vmem:[%s1398 + $0xe8] sm:$0xff]
      %v1429 = vld [vmem:[%s1398 + $0xf0] sm:$0xff]
      %v1430 = vld [vmem:[%s1398 + $0xf8] sm:$0xff]
      %v1431 = vld [vmem:[%s1398 + $0x100] sm:$0xff]
      %v1432 = vld [vmem:[%s1398 + $0x108] sm:$0xff]
      %v1433 = vld [vmem:[%s1398 + $0x110] sm:$0xff]
      %v1434 = vld [vmem:[%s1398 + $0x118] sm:$0xff]
      %v1435 = vld [vmem:[%s1398 + $0x120] sm:$0xff]
      %v1436 = vld [vmem:[%s1398 + $0x128] sm:$0xff]
      %v1437 = vld [vmem:[%s1398 + $0x130] sm:$0xff]
      %v1438 = vld [vmem:[%s1398 + $0x138] sm:$0xff]
      %v1439 = vld [vmem:[%s1398 + $0x140] sm:$0xff]
      %v1440 = vld [vmem:[%s1398 + $0x148] sm:$0xff]
      %v1441 = vld [vmem:[%s1398 + $0x150] sm:$0xff]
      %v1442 = vld [vmem:[%s1398 + $0x158] sm:$0xff]
      %v1443 = vld [vmem:[%s1398 + $0x160] sm:$0xff]
      %v1444 = vld [vmem:[%s1398 + $0x168] sm:$0xff]
      %v1445 = vld [vmem:[%s1398 + $0x170] sm:$0xff]
      %v1446 = vld [vmem:[%s1398 + $0x178] sm:$0xff]
      %1447 = vmatprep.subr.mxu0 0.0
      %1448 = vmatpush1.msra.mxu0 %v1399
      %1449 = vmatprep.subr.mxu0 0.0
      %1450 = vmatpush1.msra.mxu0 %v1400
      %1451 = vmatprep.subr.mxu0 0.0
      %1452 = vmatpush1.msra.mxu0 %v1401
      %1453 = vmatprep.subr.mxu0 0.0
      %1454 = vmatpush1.msra.mxu0 %v1402
      %1455 = vmatprep.subr.mxu0 0.0
      %1456 = vmatpush1.msra.mxu0 %v1403
      %1457 = vmatprep.subr.mxu0 0.0
      %1458 = vmatpush1.msra.mxu0 %v1404
      %1459 = vmatprep.subr.mxu0 0.0
      %1460 = vmatpush1.msra.mxu0 %v1405
      %1461 = vmatprep.subr.mxu0 0.0
      %1462 = vmatpush1.msra.mxu0 %v1406
      %1463 = vmatprep.subr.mxu0 0.0
      %1464 = vmatpush1.msra.mxu0 %v1407
      %1465 = vmatprep.subr.mxu0 0.0
      %1466 = vmatpush1.msra.mxu0 %v1408
      %1467 = vmatprep.subr.mxu0 0.0
      %1468 = vmatpush1.msra.mxu0 %v1409
      %1469 = vmatprep.subr.mxu0 0.0
      %1470 = vmatpush1.msra.mxu0 %v1410
      %1471 = vmatprep.subr.mxu0 0.0
      %1472 = vmatpush1.msra.mxu0 %v1411
      %1473 = vmatprep.subr.mxu0 0.0
      %1474 = vmatpush1.msra.mxu0 %v1412
      %1475 = vmatprep.subr.mxu0 0.0
      %1476 = vmatpush1.msra.mxu0 %v1413
      %1477 = vmatprep.subr.mxu0 0.0
      %1478 = vmatpush1.msra.mxu0 %v1414
      %1479 = vmatprep.subr.mxu0 0.0
      %1480 = vmatpush1.msra.mxu0 %v1415
      %1481 = vmatprep.subr.mxu0 0.0
      %1482 = vmatpush1.msra.mxu0 %v1416
      %1483 = vmatprep.subr.mxu0 0.0
      %1484 = vmatpush1.msra.mxu0 %v1417
      %1485 = vmatprep.subr.mxu0 0.0
      %1486 = vmatpush1.msra.mxu0 %v1418
      %1487 = vmatprep.subr.mxu0 0.0
      %1488 = vmatpush1.msra.mxu0 %v1419
      %1489 = vmatprep.subr.mxu0 0.0
      %1490 = vmatpush1.msra.mxu0 %v1420
      %1491 = vmatprep.subr.mxu0 0.0
      %1492 = vmatpush1.msra.mxu0 %v1421
      %1493 = vmatprep.subr.mxu0 0.0
      %1494 = vmatpush1.msra.mxu0 %v1422
      %1495 = vmatprep.subr.mxu0 0.0
      %1496 = vmatpush1.msra.mxu0 %v1423
      %1497 = vmatprep.subr.mxu0 0.0
      %1498 = vmatpush1.msra.mxu0 %v1424
      %1499 = vmatprep.subr.mxu0 0.0
      %1500 = vmatpush1.msra.mxu0 %v1425
      %1501 = vmatprep.subr.mxu0 0.0
      %1502 = vmatpush1.msra.mxu0 %v1426
      %1503 = vmatprep.subr.mxu0 0.0
      %1504 = vmatpush1.msra.mxu0 %v1427
      %1505 = vmatprep.subr.mxu0 0.0
      %1506 = vmatpush1.msra.mxu0 %v1428
      %1507 = vmatprep.subr.mxu0 0.0
      %1508 = vmatpush1.msra.mxu0 %v1429
      %1509 = vmatprep.subr.mxu0 0.0
      %1510 = vmatpush1.msra.mxu0 %v1430
      %1511 = vmatprep.mubr.f32.mxu0 %v702
      %1512 = vmatmul.mubr.f32.gmra.mrb[0].mxu0 %v836
      %v1513 = vpop.f32.mrb[0].mxu0
      %v1514 = vadd.f32 0.0, %v1513
      %v1515 = vpop.f32.mrb[0].mxu0
      %1516 = vmatprep.mubr.f32.mxu0 %v703
      %1517 = vmatmul.mubr.f32.gmra.mrb[0].mxu0 %v837
      %v1518 = vpop.f32.mrb[0].mxu0
      %v1519 = vadd.f32 0.0, %v1518
      %v1520 = vpop.f32.mrb[0].mxu0
      %1521 = vmatprep.mubr.f32.mxu0 %v704
      %1522 = vmatmul.mubr.f32.gmra.mrb[0].mxu0 %v838
      %v1523 = vpop.f32.mrb[0].mxu0
      %v1524 = vadd.f32 0.0, %v1523
      %v1525 = vpop.f32.mrb[0].mxu0
      %1526 = vmatprep.mubr.f32.mxu0 %v705
      %1527 = vmatmul.mubr.f32.gmra.mrb[0].mxu0 %v839
      %v1528 = vpop.f32.mrb[0].mxu0
      %v1529 = vadd.f32 0.0, %v1528
      %v1530 = vpop.f32.mrb[0].mxu0
      %1531 = vmatprep.mubr.f32.mxu0 %v706
      %1532 = vmatmul.mubr.f32.gmra.mrb[0].mxu0 %v840
      %v1533 = vpop.f32.mrb[0].mxu0
      %v1534 = vadd.f32 0.0, %v1533
      %v1535 = vpop.f32.mrb[0].mxu0
      %1536 = vmatprep.mubr.f32.mxu0 %v707
      %1537 = vmatmul.mubr.f32.gmra.mrb[0].mxu0 %v841
      %v1538 = vpop.f32.mrb[0].mxu0
      %v1539 = vadd.f32 0.0, %v1538
      %v1540 = vpop.f32.mrb[0].mxu0
      %1541 = vmatprep.mubr.f32.mxu0 %v708
      %1542 = vmatmul.mubr.f32.gmra.mrb[0].mxu0 %v842
      %v1543 = vpop.f32.mrb[0].mxu0
      %v1544 = vadd.f32 0.0, %v1543
      %v1545 = vpop.f32.mrb[0].mxu0
      %1546 = vmatprep.mubr.f32.mxu0 %v709
      %1547 = vmatmul.mubr.f32.gmra.mrb[0].mxu0 %v843
      %v1548 = vpop.f32.mrb[0].mxu0
      %v1549 = vadd.f32 0.0, %v1548
      %v1550 = vpop.f32.mrb[0].mxu0
      %1551 = vdwg.mxu0
      %1552 = vmatprep.subr.mxu0 0.0
      %1553 = vmatpush1.msra.mxu0 %v1431
      %1554 = vmatprep.subr.mxu0 0.0
      %1555 = vmatpush1.msra.mxu0 %v1432
      %1556 = vmatprep.subr.mxu0 0.0
      %1557 = vmatpush1.msra.mxu0 %v1433
      %1558 = vmatprep.subr.mxu0 0.0
      %1559 = vmatpush1.msra.mxu0 %v1434
      %1560 = vmatprep.subr.mxu0 0.0
      %1561 = vmatpush1.msra.mxu0 %v1435
      %1562 = vmatprep.subr.mxu0 0.0
      %1563 = vmatpush1.msra.mxu0 %v1436
      %1564 = vmatprep.subr.mxu0 0.0
      %1565 = vmatpush1.msra.mxu0 %v1437
      %1566 = vmatprep.subr.mxu0 0.0
      %1567 = vmatpush1.msra.mxu0 %v1438
      %1568 = vmatprep.subr.mxu0 0.0
      %1569 = vmatpush1.msra.mxu0 %v1439
      %1570 = vmatprep.subr.mxu0 0.0
      %1571 = vmatpush1.msra.mxu0 %v1440
      %1572 = vmatprep.subr.mxu0 0.0
      %1573 = vmatpush1.msra.mxu0 %v1441
      %1574 = vmatprep.subr.mxu0 0.0
      %1575 = vmatpush1.msra.mxu0 %v1442
      %1576 = vmatprep.subr.mxu0 0.0
      %1577 = vmatpush1.msra.mxu0 %v1443
      %1578 = vmatprep.subr.mxu0 0.0
      %1579 = vmatpush1.msra.mxu0 %v1444
      %1580 = vmatprep.subr.mxu0 0.0
      %1581 = vmatpush1.msra.mxu0 %v1445
      %1582 = vmatprep.subr.mxu0 0.0
      %1583 = vmatpush1.msra.mxu0 %v1446
      %1584 = vmatprep.subr.mxu0 0.0
      %1585 = vmatpush1.msra.mxu0 0.0
      %1586 = vmatprep.subr.mxu0 0.0
      %1587 = vmatpush1.msra.mxu0 0.0
      %1588 = vmatprep.subr.mxu0 0.0
      %1589 = vmatpush1.msra.mxu0 0.0
      %1590 = vmatprep.subr.mxu0 0.0
      %1591 = vmatpush1.msra.mxu0 0.0
      %1592 = vmatprep.subr.mxu0 0.0
      %1593 = vmatpush1.msra.mxu0 0.0
      %1594 = vmatprep.subr.mxu0 0.0
      %1595 = vmatpush1.msra.mxu0 0.0
      %1596 = vmatprep.subr.mxu0 0.0
      %1597 = vmatpush1.msra.mxu0 0.0
      %1598 = vmatprep.subr.mxu0 0.0
      %1599 = vmatpush1.msra.mxu0 0.0
      %1600 = vmatprep.subr.mxu0 0.0
      %1601 = vmatpush1.msra.mxu0 0.0
      %1602 = vmatprep.subr.mxu0 0.0
      %1603 = vmatpush1.msra.mxu0 0.0
      %1604 = vmatprep.subr.mxu0 0.0
      %1605 = vmatpush1.msra.mxu0 0.0
      %1606 = vmatprep.subr.mxu0 0.0
      %1607 = vmatpush1.msra.mxu0 0.0
      %1608 = vmatprep.subr.mxu0 0.0
      %1609 = vmatpush1.msra.mxu0 0.0
      %1610 = vmatprep.subr.mxu0 0.0
      %1611 = vmatpush1.msra.mxu0 0.0
      %1612 = vmatprep.subr.mxu0 0.0
      %1613 = vmatpush1.msra.mxu0 0.0
      %1614 = vmatprep.subr.mxu0 0.0
      %1615 = vmatpush1.msra.mxu0 0.0
      %1616 = vmatprep.mubr.f32.mxu0 0.0
      %1617 = vmatmul.mubr.f32.gmra.mrb[0].mxu0 %v873
      %v1618 = vpop.f32.mrb[0].mxu0
      %v1619 = vadd.f32 %v1514, %v1618
      %v1620 = vpop.f32.mrb[0].mxu0
      %1621 = vmatprep.mubr.f32.mxu0 0.0
      %1622 = vmatmul.mubr.f32.gmra.mrb[0].mxu0 %v874
      %v1623 = vpop.f32.mrb[0].mxu0
      %v1624 = vadd.f32 %v1519, %v1623
      %v1625 = vpop.f32.mrb[0].mxu0
      %1626 = vmatprep.mubr.f32.mxu0 0.0
      %1627 = vmatmul.mubr.f32.gmra.mrb[0].mxu0 %v875
      %v1628 = vpop.f32.mrb[0].mxu0
      %v1629 = vadd.f32 %v1524, %v1628
      %v1630 = vpop.f32.mrb[0].mxu0
      %1631 = vmatprep.mubr.f32.mxu0 0.0
      %1632 = vmatmul.mubr.f32.gmra.mrb[0].mxu0 %v876
      %v1633 = vpop.f32.mrb[0].mxu0
      %v1634 = vadd.f32 %v1529, %v1633
      %v1635 = vpop.f32.mrb[0].mxu0
      %1636 = vmatprep.mubr.f32.mxu0 0.0
      %1637 = vmatmul.mubr.f32.gmra.mrb[0].mxu0 %v877
      %v1638 = vpop.f32.mrb[0].mxu0
      %v1639 = vadd.f32 %v1534, %v1638
      %v1640 = vpop.f32.mrb[0].mxu0
      %1641 = vmatprep.mubr.f32.mxu0 0.0
      %1642 = vmatmul.mubr.f32.gmra.mrb[0].mxu0 %v878
      %v1643 = vpop.f32.mrb[0].mxu0
      %v1644 = vadd.f32 %v1539, %v1643
      %v1645 = vpop.f32.mrb[0].mxu0
      %1646 = vmatprep.mubr.f32.mxu0 0.0
      %1647 = vmatmul.mubr.f32.gmra.mrb[0].mxu0 %v879
      %v1648 = vpop.f32.mrb[0].mxu0
      %v1649 = vadd.f32 %v1544, %v1648
      %v1650 = vpop.f32.mrb[0].mxu0
      %1651 = vmatprep.mubr.f32.mxu0 0.0
      %1652 = vmatmul.mubr.f32.gmra.mrb[0].mxu0 %v880
      %v1653 = vpop.f32.mrb[0].mxu0
      %v1654 = vadd.f32 %v1549, %v1653
      %v1655 = vpop.f32.mrb[0].mxu0
      %1656 = vdwg.mxu0
      %v1657 = vadd.f32 %v1360, %v1619
      %v1658 = vadd.f32 %v1365, %v1624
      %v1659 = vadd.f32 %v1370, %v1629
      %v1660 = vadd.f32 %v1375, %v1634
      %v1661 = vadd.f32 %v1380, %v1639
      %v1662 = vadd.f32 %v1385, %v1644
      %v1663 = vadd.f32 %v1390, %v1649
      %v1664 = vadd.f32 %v1395, %v1654
      %v1665 = vld [vmem:[%s6] sm:$0x1]
      %v1667 = vlaneseq
      %v1668 = vshrl.u32 %v1667, 7
      %v1669 = vsub.s32 0, %v1668
      %v1670 = vrot.slane %v1665, %v1669
      %v1672 = vadd.f32 %v1657, %v1670
      %v1673 = vadd.f32 %v1658, %v1670
      %v1674 = vadd.f32 %v1659, %v1670
      %v1675 = vadd.f32 %v1660, %v1670
      %v1676 = vadd.f32 %v1661, %v1670
      %v1677 = vadd.f32 %v1662, %v1670
      %v1678 = vadd.f32 %v1663, %v1670
      %v1679 = vadd.f32 %v1664, %v1670
      %v1680 = vmax.f32 %v1672, 0.0
      %v1681 = vmax.f32 %v1673, 0.0
      %v1682 = vmax.f32 %v1674, 0.0
      %v1683 = vmax.f32 %v1675, 0.0
      %v1684 = vmax.f32 %v1676, 0.0
      %v1685 = vmax.f32 %v1677, 0.0
      %v1686 = vmax.f32 %v1678, 0.0
      %v1687 = vmax.f32 %v1679, 0.0
      %v1688 = vld [vmem:[%s7] sm:$0xff]
      %v1689 = vld [vmem:[%s7 + $0x8] sm:$0xff]
      %v1690 = vld [vmem:[%s7 + $0x10] sm:$0xff]
      %v1691 = vld [vmem:[%s7 + $0x18] sm:$0xff]
      %v1692 = vld [vmem:[%s7 + $0x20] sm:$0xff]
      %v1693 = vld [vmem:[%s7 + $0x28] sm:$0xff]
      %v1694 = vld [vmem:[%s7 + $0x30] sm:$0xff]
      %v1695 = vld [vmem:[%s7 + $0x38] sm:$0xff]
      %v1696 = vld [vmem:[%s7 + $0x40] sm:$0xff]
      %v1697 = vld [vmem:[%s7 + $0x48] sm:$0xff]
      %v1698 = vld [vmem:[%s7 + $0x50] sm:$0xff]
      %v1699 = vld [vmem:[%s7 + $0x58] sm:$0xff]
      %v1700 = vld [vmem:[%s7 + $0x60] sm:$0xff]
      %v1701 = vld [vmem:[%s7 + $0x68] sm:$0xff]
      %v1702 = vld [vmem:[%s7 + $0x70] sm:$0xff]
      %v1703 = vld [vmem:[%s7 + $0x78] sm:$0xff]
      %v1704 = vld [vmem:[%s8] sm:$0x1]
      %v1706 = vlaneseq
      %v1707 = vshrl.u32 %v1706, 7
      %v1708 = vsub.s32 0, %v1707
      %v1709 = vrot.slane %v1704, %v1708
      %1711 = vmatprep.subr.mxu0 0.0
      %1712 = vmatpush1.msra.mxu0 %v1688
      %1713 = vmatprep.subr.mxu0 0.0
      %1714 = vmatpush1.msra.mxu0 %v1689
      %1715 = vmatprep.subr.mxu0 0.0
      %1716 = vmatpush1.msra.mxu0 %v1690
      %1717 = vmatprep.subr.mxu0 0.0
      %1718 = vmatpush1.msra.mxu0 %v1691
      %1719 = vmatprep.subr.mxu0 0.0
      %1720 = vmatpush1.msra.mxu0 %v1692
      %1721 = vmatprep.subr.mxu0 0.0
      %1722 = vmatpush1.msra.mxu0 %v1693
      %1723 = vmatprep.subr.mxu0 0.0
      %1724 = vmatpush1.msra.mxu0 %v1694
      %1725 = vmatprep.subr.mxu0 0.0
      %1726 = vmatpush1.msra.mxu0 %v1695
      %1727 = vmatprep.subr.mxu0 0.0
      %1728 = vmatpush1.msra.mxu0 %v1696
      %1729 = vmatprep.subr.mxu0 0.0
      %1730 = vmatpush1.msra.mxu0 %v1697
      %1731 = vmatprep.subr.mxu0 0.0
      %1732 = vmatpush1.msra.mxu0 %v1698
      %1733 = vmatprep.subr.mxu0 0.0
      %1734 = vmatpush1.msra.mxu0 %v1699
      %1735 = vmatprep.subr.mxu0 0.0
      %1736 = vmatpush1.msra.mxu0 %v1700
      %1737 = vmatprep.subr.mxu0 0.0
      %1738 = vmatpush1.msra.mxu0 %v1701
      %1739 = vmatprep.subr.mxu0 0.0
      %1740 = vmatpush1.msra.mxu0 %v1702
      %1741 = vmatprep.subr.mxu0 0.0
      %1742 = vmatpush1.msra.mxu0 %v1703
      %1743 = vmatprep.subr.mxu0 0.0
      %1744 = vmatpush1.msra.mxu0 0.0
      %1745 = vmatprep.subr.mxu0 0.0
      %1746 = vmatpush1.msra.mxu0 0.0
      %1747 = vmatprep.subr.mxu0 0.0
      %1748 = vmatpush1.msra.mxu0 0.0
      %1749 = vmatprep.subr.mxu0 0.0
      %1750 = vmatpush1.msra.mxu0 0.0
      %1751 = vmatprep.subr.mxu0 0.0
      %1752 = vmatpush1.msra.mxu0 0.0
      %1753 = vmatprep.subr.mxu0 0.0
      %1754 = vmatpush1.msra.mxu0 0.0
      %1755 = vmatprep.subr.mxu0 0.0
      %1756 = vmatpush1.msra.mxu0 0.0
      %1757 = vmatprep.subr.mxu0 0.0
      %1758 = vmatpush1.msra.mxu0 0.0
      %1759 = vmatprep.subr.mxu0 0.0
      %1760 = vmatpush1.msra.mxu0 0.0
      %1761 = vmatprep.subr.mxu0 0.0
      %1762 = vmatpush1.msra.mxu0 0.0
      %1763 = vmatprep.subr.mxu0 0.0
      %1764 = vmatpush1.msra.mxu0 0.0
      %1765 = vmatprep.subr.mxu0 0.0
      %1766 = vmatpush1.msra.mxu0 0.0
      %1767 = vmatprep.subr.mxu0 0.0
      %1768 = vmatpush1.msra.mxu0 0.0
      %1769 = vmatprep.subr.mxu0 0.0
      %1770 = vmatpush1.msra.mxu0 0.0
      %1771 = vmatprep.subr.mxu0 0.0
      %1772 = vmatpush1.msra.mxu0 0.0
      %1773 = vmatprep.subr.mxu0 0.0
      %1774 = vmatpush1.msra.mxu0 0.0
      %1775 = vmatprep.mubr.f32.mxu0 0.0
      %1776 = vmatmul.mubr.f32.gmra.mrb[0].mxu0 %v1680
      %v1777 = vpop.f32.mrb[0].mxu0
      %v1778 = vadd.f32 %v1709, %v1777
      %v1779 = vpop.f32.mrb[0].mxu0
      %1780 = vmatprep.mubr.f32.mxu0 0.0
      %1781 = vmatmul.mubr.f32.gmra.mrb[0].mxu0 %v1681
      %v1782 = vpop.f32.mrb[0].mxu0
      %v1783 = vadd.f32 %v1709, %v1782
      %v1784 = vpop.f32.mrb[0].mxu0
      %1785 = vmatprep.mubr.f32.mxu0 0.0
      %1786 = vmatmul.mubr.f32.gmra.mrb[0].mxu0 %v1682
      %v1787 = vpop.f32.mrb[0].mxu0
      %v1788 = vadd.f32 %v1709, %v1787
      %v1789 = vpop.f32.mrb[0].mxu0
      %1790 = vmatprep.mubr.f32.mxu0 0.0
      %1791 = vmatmul.mubr.f32.gmra.mrb[0].mxu0 %v1683
      %v1792 = vpop.f32.mrb[0].mxu0
      %v1793 = vadd.f32 %v1709, %v1792
      %v1794 = vpop.f32.mrb[0].mxu0
      %1795 = vmatprep.mubr.f32.mxu0 0.0
      %1796 = vmatmul.mubr.f32.gmra.mrb[0].mxu0 %v1684
      %v1797 = vpop.f32.mrb[0].mxu0
      %v1798 = vadd.f32 %v1709, %v1797
      %v1799 = vpop.f32.mrb[0].mxu0
      %1800 = vmatprep.mubr.f32.mxu0 0.0
      %1801 = vmatmul.mubr.f32.gmra.mrb[0].mxu0 %v1685
      %v1802 = vpop.f32.mrb[0].mxu0
      %v1803 = vadd.f32 %v1709, %v1802
      %v1804 = vpop.f32.mrb[0].mxu0
      %1805 = vmatprep.mubr.f32.mxu0 0.0
      %1806 = vmatmul.mubr.f32.gmra.mrb[0].mxu0 %v1686
      %v1807 = vpop.f32.mrb[0].mxu0
      %v1808 = vadd.f32 %v1709, %v1807
      %v1809 = vpop.f32.mrb[0].mxu0
      %1810 = vmatprep.mubr.f32.mxu0 0.0
      %1811 = vmatmul.mubr.f32.gmra.mrb[0].mxu0 %v1687
      %v1812 = vpop.f32.mrb[0].mxu0
      %v1813 = vadd.f32 %v1709, %v1812
      %v1814 = vpop.f32.mrb[0].mxu0
      %1815 = vdwg.mxu0
      %v1816 = vadd.f32 %v1778, %v500
      %v1817 = vadd.f32 %v1783, %v501
      %v1818 = vadd.f32 %v1788, %v502
      %v1819 = vadd.f32 %v1793, %v503
      %v1820 = vadd.f32 %v1798, %v504
      %v1821 = vadd.f32 %v1803, %v505
      %v1822 = vadd.f32 %v1808, %v506
      %v1823 = vadd.f32 %v1813, %v507
      %v1824 = vmax.f32 %v1816, 0.0
      %v1825 = vmax.f32 %v1817, 0.0
      %v1826 = vmax.f32 %v1818, 0.0
      %v1827 = vmax.f32 %v1819, 0.0
      %v1828 = vmax.f32 %v1820, 0.0
      %v1829 = vmax.f32 %v1821, 0.0
      %v1830 = vmax.f32 %v1822, 0.0
      %v1831 = vmax.f32 %v1823, 0.0
      %1832 = vst.msk [vmem:[%s498] sm:$0xff] %vm532, %v1824
      %1833 = vst.msk [vmem:[%s498 + $0x8] sm:$0xff] %vm532, %v1825
      %1834 = vst.msk [vmem:[%s498 + $0x10] sm:$0xff] %vm532, %v1826
      %1835 = vst.msk [vmem:[%s498 + $0x18] sm:$0xff] %vm532, %v1827
      %1836 = vst.msk [vmem:[%s498 + $0x20] sm:$0xff] %vm532, %v1828
      %1837 = vst.msk [vmem:[%s498 + $0x28] sm:$0xff] %vm532, %v1829
      %1838 = vst.msk [vmem:[%s498 + $0x30] sm:$0xff] %vm532, %v1830
      %1839 = vst.msk [vmem:[%s498 + $0x38] sm:$0xff] %vm532, %v1831
      %s1840 = smul.u32 8, %s25
      %p1841 = scmp.lt.s32.totalorder %s24, 1
      %s1842 = scalar_select %p1841, %s24, 1
      %p1843 = scmp.lt.s32.totalorder %s1840, 31
      %s1844 = scalar_select %p1843, %s1840, 31
      %s1845 = smul.addr %s1842, 32
      %s1846 = sadd.s32 %s1844, %s1845
      %s1847 = smul.addr %s1846, 8
      %s1848 = scalar_lea.vmem %s9, %s1847
      // Predicated region
      $region57: #{tpu_custom_call.1} parent=55 // pred_check
        %p1849 = pneg %p278
      $region58: #{tpu_custom_call.1} parent=55 // pred_check_branch
        %1851 = sbr.rel (%p1849) target = $region60
      $region59: #{tpu_custom_call.1} parent=55 // pred_region
        %s1852 = smul.u32 8, %s25
      $region60: #{tpu_custom_call.1} parent=55 // pred_fallthru
        _
    $region56: #{tpu_custom_call.1} parent=5 // pred_fallthru
      _
    %p1853 = scmp.le.s32.totalorder 2, %s15
    // Predicated region
    $region61: #{tpu_custom_call.1} parent=5 // pred_check
      %p1854 = pneg %p1853
    $region62: #{tpu_custom_call.1} parent=5 // pred_check_branch
      %1856 = sbr.rel (%p1854) target = $region64
    $region63: #{tpu_custom_call.1} parent=5 // pred_region
      %s1857 = ssub.s32 %s15, 2
      // Predicated region
      $region65: #{tpu_custom_call.1} parent=63 // pred_check
        %p1858 = pneg %p284
      $region66: #{tpu_custom_call.1} parent=63 // pred_check_branch
        %1860 = sbr.rel (%p1858) target = $region68
      $region67: #{tpu_custom_call.1} parent=63 // pred_region
        %s1861 = smul.u32 8, %s27
        %p1862 = scmp.lt.s32.totalorder %s26, 1
        %s1863 = scalar_select %p1862, %s26, 1
        %p1864 = scmp.lt.s32.totalorder %s1861, 31
        %s1865 = scalar_select %p1864, %s1861, 31
        %s1866 = smul.addr %s1863, 32
        %s1867 = sadd.s32 %s1865, %s1866
        %s1868 = smul.addr %s1867, 8
        %s1869 = scalar_lea.vmem %s9, %s1868
      $region68: #{tpu_custom_call.1} parent=63 // pred_fallthru
        _
    $region64: #{tpu_custom_call.1} parent=5 // pred_fallthru
      _
  $region6: #{tpu_custom_call.1} parent=0 // loop_footer
    %s19 = sadd.s32 1, %s15
  $region7: #{tpu_custom_call.1} parent=0 // loop_footer_branch
    %14 = sbr.rel target = $region3
  $region8: #{tpu_custom_call.1} parent=0 // loop_exit
    _

// kernel: tpu_custom_call.1
$region0: #{tpu_custom_call.1}
  #allocation0 [shape = 'u32[]', space=smem, size = 0x4, offset = 0x4, fixed_abs, tag = 'smem constant byte address 0x4 - core index']
  #allocation1 [shape = 'u32[144,128]{1,0:T(1,128)}', space=vmem, size = 0x12000, scoped, tag = 'internal scratch']
  %s0 = inlined_call_operand.vmem [shape: f32[2,256,4], index: 0, kind: input, shape index: {}]
  %s1 = inlined_call_operand.vmem [shape: f32[2,256,4], index: 1, kind: input, shape index: {}]
  %s2 = inlined_call_operand.vmem [shape: f32[2,256,4], index: 2, kind: input, shape index: {}]
  %s3 = inlined_call_operand.vmem [shape: f32[4,128], index: 3, kind: input, shape index: {}]
  %s4 = inlined_call_operand.vmem [shape: f32[1,128], index: 4, kind: input, shape index: {}]
  %s5 = inlined_call_operand.vmem [shape: f32[3,384,128], index: 5, kind: input, shape index: {}]
  %s6 = inlined_call_operand.vmem [shape: f32[1,128], index: 6, kind: input, shape index: {}]
  %s7 = inlined_call_operand.vmem [shape: f32[128,4], index: 7, kind: input, shape index: {}]
  %s8 = inlined_call_operand.vmem [shape: f32[1,4], index: 8, kind: input, shape index: {}]
  %s9 = inlined_call_operand.vmem [shape: f32[2,256,4], index: 9, kind: output, shape index: {}]
  %s10 = sld [smem:[#allocation0]]
  $region69: #{tpu_custom_call.1} parent=0
    _
  %s12 = ssub.s32 1, %s10
  %s13 = scalar_select 0, %s12, %s10
  loop: start=0, step=1, limit=10
  $region2: #{tpu_custom_call.1} parent=0 // loop_pre_header
    _
  $region3: #{tpu_custom_call.1} parent=0 // loop_header
    %s15 = sphi 0, %s19
    %p16 = scmp.ge.s32.totalorder %s15, 10
    %s22 = sphi 0, %s34
    %s23 = sphi 0, %s30
    %s24 = sphi 0, %s22
    %s25 = sphi 0, %s23
    %s26 = sphi 0, %s24
    %s27 = sphi 0, %s25
    %s39 = sphi 0, %s41
    %s42 = sphi 0, %s39
    %s43 = sphi 0, %s42
    %s59 = sphi 0, %s43
    %s75 = sphi 0, %s77
    %s78 = sphi 0, %s75
    %s79 = sphi 0, %s78
    %s95 = sphi 0, %s79
    %s111 = sphi 0, %s113
    %s114 = sphi 0, %s111
    %s115 = sphi 0, %s114
    %s131 = sphi 0, %s115
    %s135 = sphi 0, %s135
    %s137 = sphi 0, %s135
    %s138 = sphi 0, %s137
    %s152 = sphi 0, %s138
    %s156 = sphi 0, %s156
    %s158 = sphi 0, %s156
    %s159 = sphi 0, %s158
    %s173 = sphi 0, %s159
    %s177 = sphi 0, %s177
    %s179 = sphi 0, %s177
    %s180 = sphi 0, %s179
    %s194 = sphi 0, %s180
    %s198 = sphi 0, %s198
    %s200 = sphi 0, %s198
    %s201 = sphi 0, %s200
    %s215 = sphi 0, %s201
    %s219 = sphi 0, %s219
    %s221 = sphi 0, %s219
    %s222 = sphi 0, %s221
    %s236 = sphi 0, %s222
    %s240 = sphi 0, %s240
    %s242 = sphi 0, %s240
    %s243 = sphi 0, %s242
    %s257 = sphi 0, %s243
    %s265 = sphi 0, %s267
    %s268 = sphi 0, %s265
    %s269 = sphi 0, %s268
    %s285 = sphi 0, %s269
  $region4: #{tpu_custom_call.1} parent=0 // loop_header_branch
    %18 = sbr.rel (%p16) target = $region8
  $region5: #{tpu_custom_call.1} parent=0 // loop_body
    %s20 = ssub.s32 %s15, 1
    %s21 = ssub.s32 %s15, 2
    %s28 = sadd.s32 1, %s23
    %p29 = scmp.ge.s32.totalorder %s28, 4
    %s30 = scalar_select %p29, 0, %s28
    %s31 = sadd.s32 1, %s22
    %s32 = scalar_select %p29, %s31, %s22
    %p33 = scmp.ge.s32.totalorder %s32, 2
    %s34 = scalar_select %p33, 0, %s32
    %s35 = ssub.s32 %s22, %s34
    %s36 = ssub.s32 %s23, %s30
    %s37 = sor.u32 %s35, %s36
    %p38 = scmp.eq.s32.totalorder %s37, 0
    %s40 = sadd.s32 %s39, 1
    %s41 = scalar_select %p38, %s39, %s40
    %p44 = pneg %p38
    %p45 = scmp.eq.s32.totalorder %s15, 7
    %p46 = por %p44, %p45
    %p47 = scmp.ne.s32.totalorder %s39, %s42
    %p48 = scmp.eq.s32.totalorder %s15, 0
    %p49 = por %p47, %p48
    %p50 = scmp.ne.s32.totalorder %s39, %s42
    %p51 = scmp.eq.s32.totalorder %s20, 7
    %p52 = por %p50, %p51
    %p53 = scmp.ne.s32.totalorder %s42, %s43
    %p54 = scmp.eq.s32.totalorder %s20, 0
    %p55 = por %p53, %p54
    %p56 = scmp.ne.s32.totalorder %s42, %s43
    %p57 = scmp.eq.s32.totalorder %s21, 7
    %p58 = por %p56, %p57
    %p60 = scmp.ne.s32.totalorder %s43, %s59
    %p61 = scmp.eq.s32.totalorder %s21, 0
    %p62 = por %p60, %p61
    %s63 = smul.u32 %s23, 4
    %s64 = ssub.s32 %s63, 1
    %p65 = scmp.gt.s32.totalorder %s64, 0
    %s66 = scalar_select %p65, %s64, 0
    %s67 = smul.u32 %s30, 4
    %s68 = ssub.s32 %s67, 1
    %p69 = scmp.gt.s32.totalorder %s68, 0
    %s70 = scalar_select %p69, %s68, 0
    %s71 = ssub.s32 %s22, %s34
    %s72 = ssub.s32 %s66, %s70
    %s73 = sor.u32 %s71, %s72
    %p74 = scmp.eq.s32.totalorder %s73, 0
    %s76 = sadd.s32 %s75, 1
    %s77 = scalar_select %p74, %s75, %s76
    %p80 = pneg %p74
    %p81 = scmp.eq.s32.totalorder %s15, 7
    %p82 = por %p80, %p81
    %p83 = scmp.ne.s32.totalorder %s75, %s78
    %p84 = scmp.eq.s32.totalorder %s15, 0
    %p85 = por %p83, %p84
    %p86 = scmp.ne.s32.totalorder %s75, %s78
    %p87 = scmp.eq.s32.totalorder %s20, 7
    %p88 = por %p86, %p87
    %p89 = scmp.ne.s32.totalorder %s78, %s79
    %p90 = scmp.eq.s32.totalorder %s20, 0
    %p91 = por %p89, %p90
    %p92 = scmp.ne.s32.totalorder %s78, %s79
    %p93 = scmp.eq.s32.totalorder %s21, 7
    %p94 = por %p92, %p93
    %p96 = scmp.ne.s32.totalorder %s79, %s95
    %p97 = scmp.eq.s32.totalorder %s21, 0
    %p98 = por %p96, %p97
    %s99 = sadd.s32 %s23, 1
    %s100 = smul.u32 %s99, 4
    %p101 = scmp.lt.s32.totalorder %s100, 15
    %s102 = scalar_select %p101, %s100, 15
    %s103 = sadd.s32 %s30, 1
    %s104 = smul.u32 %s103, 4
    %p105 = scmp.lt.s32.totalorder %s104, 15
    %s106 = scalar_select %p105, %s104, 15
    %s107 = ssub.s32 %s22, %s34
    %s108 = ssub.s32 %s102, %s106
    %s109 = sor.u32 %s107, %s108
    %p110 = scmp.eq.s32.totalorder %s109, 0
    %s112 = sadd.s32 %s111, 1
    %s113 = scalar_select %p110, %s111, %s112
    %p116 = pneg %p110
    %p117 = scmp.eq.s32.totalorder %s15, 7
    %p118 = por %p116, %p117
    %p119 = scmp.ne.s32.totalorder %s111, %s114
    %p120 = scmp.eq.s32.totalorder %s15, 0
    %p121 = por %p119, %p120
    %p122 = scmp.ne.s32.totalorder %s111, %s114
    %p123 = scmp.eq.s32.totalorder %s20, 7
    %p124 = por %p122, %p123
    %p125 = scmp.ne.s32.totalorder %s114, %s115
    %p126 = scmp.eq.s32.totalorder %s20, 0
    %p127 = por %p125, %p126
    %p128 = scmp.ne.s32.totalorder %s114, %s115
    %p129 = scmp.eq.s32.totalorder %s21, 7
    %p130 = por %p128, %p129
    %p132 = scmp.ne.s32.totalorder %s115, %s131
    %p133 = scmp.eq.s32.totalorder %s21, 0
    %p134 = por %p132, %p133
    %s136 = sadd.s32 %s135, 1
    %p139 = scmp.eq.s32.totalorder %s15, 7
    %p140 = scmp.ne.s32.totalorder %s135, %s137
    %p141 = scmp.eq.s32.totalorder %s15, 0
    %p142 = por %p140, %p141
    %p143 = scmp.ne.s32.totalorder %s135, %s137
    %p144 = scmp.eq.s32.totalorder %s20, 7
    %p145 = por %p143, %p144
    %p146 = scmp.ne.s32.totalorder %s137, %s138
    %p147 = scmp.eq.s32.totalorder %s20, 0
    %p148 = por %p146, %p147
    %p149 = scmp.ne.s32.totalorder %s137, %s138
    %p150 = scmp.eq.s32.totalorder %s21, 7
    %p151 = por %p149, %p150
    %p153 = scmp.ne.s32.totalorder %s138, %s152
    %p154 = scmp.eq.s32.totalorder %s21, 0
    %p155 = por %p153, %p154
    %s157 = sadd.s32 %s156, 1
    %p160 = scmp.eq.s32.totalorder %s15, 7
    %p161 = scmp.ne.s32.totalorder %s156, %s158
    %p162 = scmp.eq.s32.totalorder %s15, 0
    %p163 = por %p161, %p162
    %p164 = scmp.ne.s32.totalorder %s156, %s158
    %p165 = scmp.eq.s32.totalorder %s20, 7
    %p166 = por %p164, %p165
    %p167 = scmp.ne.s32.totalorder %s158, %s159
    %p168 = scmp.eq.s32.totalorder %s20, 0
    %p169 = por %p167, %p168
    %p170 = scmp.ne.s32.totalorder %s158, %s159
    %p171 = scmp.eq.s32.totalorder %s21, 7
    %p172 = por %p170, %p171
    %p174 = scmp.ne.s32.totalorder %s159, %s173
    %p175 = scmp.eq.s32.totalorder %s21, 0
    %p176 = por %p174, %p175
    %s178 = sadd.s32 %s177, 1
    %p181 = scmp.eq.s32.totalorder %s15, 7
    %p182 = scmp.ne.s32.totalorder %s177, %s179
    %p183 = scmp.eq.s32.totalorder %s15, 0
    %p184 = por %p182, %p183
    %p185 = scmp.ne.s32.totalorder %s177, %s179
    %p186 = scmp.eq.s32.totalorder %s20, 7
    %p187 = por %p185, %p186
    %p188 = scmp.ne.s32.totalorder %s179, %s180
    %p189 = scmp.eq.s32.totalorder %s20, 0
    %p190 = por %p188, %p189
    %p191 = scmp.ne.s32.totalorder %s179, %s180
    %p192 = scmp.eq.s32.totalorder %s21, 7
    %p193 = por %p191, %p192
    %p195 = scmp.ne.s32.totalorder %s180, %s194
    %p196 = scmp.eq.s32.totalorder %s21, 0
    %p197 = por %p195, %p196
    %s199 = sadd.s32 %s198, 1
    %p202 = scmp.eq.s32.totalorder %s15, 7
    %p203 = scmp.ne.s32.totalorder %s198, %s200
    %p204 = scmp.eq.s32.totalorder %s15, 0
    %p205 = por %p203, %p204
    %p206 = scmp.ne.s32.totalorder %s198, %s200
    %p207 = scmp.eq.s32.totalorder %s20, 7
    %p208 = por %p206, %p207
    %p209 = scmp.ne.s32.totalorder %s200, %s201
    %p210 = scmp.eq.s32.totalorder %s20, 0
    %p211 = por %p209, %p210
    %p212 = scmp.ne.s32.totalorder %s200, %s201
    %p213 = scmp.eq.s32.totalorder %s21, 7
    %p214 = por %p212, %p213
    %p216 = scmp.ne.s32.totalorder %s201, %s215
    %p217 = scmp.eq.s32.totalorder %s21, 0
    %p218 = por %p216, %p217
    %s220 = sadd.s32 %s219, 1
    %p223 = scmp.eq.s32.totalorder %s15, 7
    %p224 = scmp.ne.s32.totalorder %s219, %s221
    %p225 = scmp.eq.s32.totalorder %s15, 0
    %p226 = por %p224, %p225
    %p227 = scmp.ne.s32.totalorder %s219, %s221
    %p228 = scmp.eq.s32.totalorder %s20, 7
    %p229 = por %p227, %p228
    %p230 = scmp.ne.s32.totalorder %s221, %s222
    %p231 = scmp.eq.s32.totalorder %s20, 0
    %p232 = por %p230, %p231
    %p233 = scmp.ne.s32.totalorder %s221, %s222
    %p234 = scmp.eq.s32.totalorder %s21, 7
    %p235 = por %p233, %p234
    %p237 = scmp.ne.s32.totalorder %s222, %s236
    %p238 = scmp.eq.s32.totalorder %s21, 0
    %p239 = por %p237, %p238
    %s241 = sadd.s32 %s240, 1
    %p244 = scmp.eq.s32.totalorder %s15, 7
    %p245 = scmp.ne.s32.totalorder %s240, %s242
    %p246 = scmp.eq.s32.totalorder %s15, 0
    %p247 = por %p245, %p246
    %p248 = scmp.ne.s32.totalorder %s240, %s242
    %p249 = scmp.eq.s32.totalorder %s20, 7
    %p250 = por %p248, %p249
    %p251 = scmp.ne.s32.totalorder %s242, %s243
    %p252 = scmp.eq.s32.totalorder %s20, 0
    %p253 = por %p251, %p252
    %p254 = scmp.ne.s32.totalorder %s242, %s243
    %p255 = scmp.eq.s32.totalorder %s21, 7
    %p256 = por %p254, %p255
    %p258 = scmp.ne.s32.totalorder %s243, %s257
    %p259 = scmp.eq.s32.totalorder %s21, 0
    %p260 = por %p258, %p259
    %s261 = ssub.s32 %s22, %s34
    %s262 = ssub.s32 %s23, %s30
    %s263 = sor.u32 %s261, %s262
    %p264 = scmp.eq.s32.totalorder %s263, 0
    %s266 = sadd.s32 %s265, 1
    %s267 = scalar_select %p264, %s265, %s266
    %p270 = pneg %p264
    %p271 = scmp.eq.s32.totalorder %s15, 7
    %p272 = por %p270, %p271
    %p273 = scmp.ne.s32.totalorder %s265, %s268
    %p274 = scmp.eq.s32.totalorder %s15, 0
    %p275 = por %p273, %p274
    %p276 = scmp.ne.s32.totalorder %s265, %s268
    %p277 = scmp.eq.s32.totalorder %s20, 7
    %p278 = por %p276, %p277
    %p279 = scmp.ne.s32.totalorder %s268, %s269
    %p280 = scmp.eq.s32.totalorder %s20, 0
    %p281 = por %p279, %p280
    %p282 = scmp.ne.s32.totalorder %s268, %s269
    %p283 = scmp.eq.s32.totalorder %s21, 7
    %p284 = por %p282, %p283
    %p286 = scmp.ne.s32.totalorder %s269, %s285
    %p287 = scmp.eq.s32.totalorder %s21, 0
    %p288 = por %p286, %p287
    %p289 = scmp.le.s32.totalorder 1, %s15
    %p290 = scmp.lt.s32.totalorder %s15, 9
    %p291 = pnand %p289, %p290
    %p292 = pneg %p291
    // Predicated region
    $region9: #{tpu_custom_call.1} parent=5 // pred_check
      _
    $region10: #{tpu_custom_call.1} parent=5 // pred_check_branch
      %294 = sbr.rel (%p291) target = $region12
    $region11: #{tpu_custom_call.1} parent=5 // pred_region
      %s295 = ssub.s32 %s15, 1
      // Predicated region
      $region13: #{tpu_custom_call.1} parent=11 // pred_check
        %p296 = pneg %p148
      $region14: #{tpu_custom_call.1} parent=11 // pred_check_branch
        %298 = sbr.rel (%p296) target = $region16
      $region15: #{tpu_custom_call.1} parent=11 // pred_region
        _
      $region16: #{tpu_custom_call.1} parent=11 // pred_fallthru
        _
      // Predicated region
      $region17: #{tpu_custom_call.1} parent=11 // pred_check
        %p299 = pneg %p169
      $region18: #{tpu_custom_call.1} parent=11 // pred_check_branch
        %301 = sbr.rel (%p299) target = $region20
      $region19: #{tpu_custom_call.1} parent=11 // pred_region
        _
      $region20: #{tpu_custom_call.1} parent=11 // pred_fallthru
        _
      // Predicated region
      $region21: #{tpu_custom_call.1} parent=11 // pred_check
        %p302 = pneg %p190
      $region22: #{tpu_custom_call.1} parent=11 // pred_check_branch
        %304 = sbr.rel (%p302) target = $region24
      $region23: #{tpu_custom_call.1} parent=11 // pred_region
        _
      $region24: #{tpu_custom_call.1} parent=11 // pred_fallthru
        _
      // Predicated region
      $region25: #{tpu_custom_call.1} parent=11 // pred_check
        %p305 = pneg %p211
      $region26: #{tpu_custom_call.1} parent=11 // pred_check_branch
        %307 = sbr.rel (%p305) target = $region28
      $region27: #{tpu_custom_call.1} parent=11 // pred_region
        _
      $region28: #{tpu_custom_call.1} parent=11 // pred_fallthru
        _
      // Predicated region
      $region29: #{tpu_custom_call.1} parent=11 // pred_check
        %p308 = pneg %p232
      $region30: #{tpu_custom_call.1} parent=11 // pred_check_branch
        %310 = sbr.rel (%p308) target = $region32
      $region31: #{tpu_custom_call.1} parent=11 // pred_region
        _
      $region32: #{tpu_custom_call.1} parent=11 // pred_fallthru
        _
      // Predicated region
      $region33: #{tpu_custom_call.1} parent=11 // pred_check
        %p311 = pneg %p253
      $region34: #{tpu_custom_call.1} parent=11 // pred_check_branch
        %313 = sbr.rel (%p311) target = $region36
      $region35: #{tpu_custom_call.1} parent=11 // pred_region
        _
      $region36: #{tpu_custom_call.1} parent=11 // pred_fallthru
        _
    $region12: #{tpu_custom_call.1} parent=5 // pred_fallthru
      _
    %p314 = scmp.lt.s32.totalorder %s15, 8
    // Predicated region
    $region37: #{tpu_custom_call.1} parent=5 // pred_check
      %p315 = pneg %p314
    $region38: #{tpu_custom_call.1} parent=5 // pred_check_branch
      %317 = sbr.rel (%p315) target = $region40
    $region39: #{tpu_custom_call.1} parent=5 // pred_region
      // Predicated region
      $region41: #{tpu_custom_call.1} parent=39 // pred_check
        %p318 = pneg %p49
      $region42: #{tpu_custom_call.1} parent=39 // pred_check_branch
        %320 = sbr.rel (%p318) target = $region44
      $region43: #{tpu_custom_call.1} parent=39 // pred_region
        %s321 = smul.u32 8, %s23
        %p322 = scmp.lt.s32.totalorder %s22, 1
        %s323 = scalar_select %p322, %s22, 1
        %p324 = scmp.lt.s32.totalorder %s321, 31
        %s325 = scalar_select %p324, %s321, 31
        %s326 = smul.addr %s323, 32
        %s327 = sadd.s32 %s325, %s326
        %s328 = smul.addr %s327, 8
        %s329 = scalar_lea.vmem %s0, %s328
        %s330 = smul.u32 8, %s23
      $region44: #{tpu_custom_call.1} parent=39 // pred_fallthru
        _
      // Predicated region
      $region45: #{tpu_custom_call.1} parent=39 // pred_check
        %p331 = pneg %p85
      $region46: #{tpu_custom_call.1} parent=39 // pred_check_branch
        %333 = sbr.rel (%p331) target = $region48
      $region47: #{tpu_custom_call.1} parent=39 // pred_region
        %s334 = smul.u32 %s23, 4
        %s335 = ssub.s32 %s334, 1
        %p336 = scmp.gt.s32.totalorder %s335, 0
        %s337 = scalar_select %p336, %s335, 0
        %s338 = smul.u32 2, %s337
        %p339 = scmp.lt.s32.totalorder %s22, 1
        %s340 = scalar_select %p339, %s22, 1
        %p341 = scmp.lt.s32.totalorder %s338, 31
        %s342 = scalar_select %p341, %s338, 31
        %s343 = smul.addr %s340, 32
        %s344 = sadd.s32 %s342, %s343
        %s345 = smul.addr %s344, 8
        %s346 = scalar_lea.vmem %s1, %s345
        %s347 = smul.u32 %s23, 4
        %s348 = ssub.s32 %s347, 1
        %p349 = scmp.gt.s32.totalorder %s348, 0
        %s350 = scalar_select %p349, %s348, 0
        %s351 = smul.u32 2, %s350
      $region48: #{tpu_custom_call.1} parent=39 // pred_fallthru
        _
      // Predicated region
      $region49: #{tpu_custom_call.1} parent=39 // pred_check
        %p352 = pneg %p121
      $region50: #{tpu_custom_call.1} parent=39 // pred_check_branch
        %354 = sbr.rel (%p352) target = $region52
      $region51: #{tpu_custom_call.1} parent=39 // pred_region
        %s355 = sadd.s32 %s23, 1
        %s356 = smul.u32 %s355, 4
        %p357 = scmp.lt.s32.totalorder %s356, 15
        %s358 = scalar_select %p357, %s356, 15
        %s359 = smul.u32 2, %s358
        %p360 = scmp.lt.s32.totalorder %s22, 1
        %s361 = scalar_select %p360, %s22, 1
        %p362 = scmp.lt.s32.totalorder %s359, 31
        %s363 = scalar_select %p362, %s359, 31
        %s364 = smul.addr %s361, 32
        %s365 = sadd.s32 %s363, %s364
        %s366 = smul.addr %s365, 8
        %s367 = scalar_lea.vmem %s2, %s366
        %s368 = sadd.s32 %s23, 1
        %s369 = smul.u32 %s368, 4
        %p370 = scmp.lt.s32.totalorder %s369, 15
        %s371 = scalar_select %p370, %s369, 15
        %s372 = smul.u32 2, %s371
      $region52: #{tpu_custom_call.1} parent=39 // pred_fallthru
        _
    $region40: #{tpu_custom_call.1} parent=5 // pred_fallthru
      _
    %p373 = scmp.le.s32.totalorder 1, %s15
    %p374 = scmp.lt.s32.totalorder %s15, 9
    %p375 = pnand %p373, %p374
    %p376 = pneg %p375
    // Predicated region
    $region53: #{tpu_custom_call.1} parent=5 // pred_check
      _
    $region54: #{tpu_custom_call.1} parent=5 // pred_check_branch
      %378 = sbr.rel (%p375) target = $region56
    $region55: #{tpu_custom_call.1} parent=5 // pred_region
      %s379 = ssub.s32 %s15, 1
      %s380 = smul.u32 8, %s25
      %p381 = scmp.lt.s32.totalorder %s24, 1
      %s382 = scalar_select %p381, %s24, 1
      %p383 = scmp.lt.s32.totalorder %s380, 31
      %s384 = scalar_select %p383, %s380, 31
      %s385 = smul.addr %s382, 32
      %s386 = sadd.s32 %s384, %s385
      %s387 = smul.addr %s386, 8
      %s388 = scalar_lea.vmem %s0, %s387
      %p389 = pneg %p55
      %p390 = pneg %p52
      %s391 = smul.u32 %s25, 4
      %s392 = ssub.s32 %s391, 1
      %p393 = scmp.gt.s32.totalorder %s392, 0
      %s394 = scalar_select %p393, %s392, 0
      %s395 = smul.u32 2, %s394
      %p396 = scmp.lt.s32.totalorder %s24, 1
      %s397 = scalar_select %p396, %s24, 1
      %p398 = scmp.lt.s32.totalorder %s395, 31
      %s399 = scalar_select %p398, %s395, 31
      %s400 = smul.addr %s397, 32
      %s401 = sadd.s32 %s399, %s400
      %s402 = smul.addr %s401, 8
      %s403 = scalar_lea.vmem %s1, %s402
      %p404 = pneg %p91
      %p405 = pneg %p88
      %s406 = sadd.s32 %s25, 1
      %s407 = smul.u32 %s406, 4
      %p408 = scmp.lt.s32.totalorder %s407, 15
      %s409 = scalar_select %p408, %s407, 15
      %s410 = smul.u32 2, %s409
      %p411 = scmp.lt.s32.totalorder %s24, 1
      %s412 = scalar_select %p411, %s24, 1
      %p413 = scmp.lt.s32.totalorder %s410, 31
      %s414 = scalar_select %p413, %s410, 31
      %s415 = smul.addr %s412, 32
      %s416 = sadd.s32 %s414, %s415
      %s417 = smul.addr %s416, 8
      %s418 = scalar_lea.vmem %s2, %s417
      %p419 = pneg %p127
      %p420 = pneg %p124
      %p421 = pneg %p148
      %p422 = pneg %p145
      %p423 = pneg %p169
      %p424 = pneg %p166
      %p425 = pneg %p190
      %p426 = pneg %p187
      %p427 = pneg %p211
      %p428 = pneg %p208
      %p429 = pneg %p232
      %p430 = pneg %p229
      %p431 = pneg %p253
      %p432 = pneg %p250
      %p433 = pneg %p281
      %p434 = pneg %p278
      %s435 = smul.u32 8, %s25
      %p436 = scmp.lt.s32.totalorder %s24, 1
      %s437 = scalar_select %p436, %s24, 1
      %p438 = scmp.lt.s32.totalorder %s435, 31
      %s439 = scalar_select %p438, %s435, 31
      %s440 = smul.addr %s437, 32
      %s441 = sadd.s32 %s439, %s440
      %s442 = smul.addr %s441, 8
      %s443 = scalar_lea.vmem %s9, %s442
      %s444 = smul.u32 8, %s25
      %p445 = scmp.lt.s32.totalorder %s24, 1
      %s446 = scalar_select %p445, %s24, 1
      %p447 = scmp.lt.s32.totalorder %s444, 31
      %s448 = scalar_select %p447, %s444, 31
      %s449 = smul.addr %s446, 32
      %s450 = sadd.s32 %s448, %s449
      %s451 = smul.addr %s450, 8
      %s452 = scalar_lea.vmem %s0, %s451
      %s453 = smul.u32 8, %s25
      %s454 = smul.u32 %s25, 4
      %s455 = ssub.s32 %s454, 1
      %p456 = scmp.gt.s32.totalorder %s455, 0
      %s457 = scalar_select %p456, %s455, 0
      %s458 = smul.u32 2, %s457
      %p459 = scmp.lt.s32.totalorder %s24, 1
      %s460 = scalar_select %p459, %s24, 1
      %p461 = scmp.lt.s32.totalorder %s458, 31
      %s462 = scalar_select %p461, %s458, 31
      %s463 = smul.addr %s460, 32
      %s464 = sadd.s32 %s462, %s463
      %s465 = smul.addr %s464, 8
      %s466 = scalar_lea.vmem %s1, %s465
      %s467 = smul.u32 %s25, 4
      %s468 = ssub.s32 %s467, 1
      %p469 = scmp.gt.s32.totalorder %s468, 0
      %s470 = scalar_select %p469, %s468, 0
      %s471 = smul.u32 2, %s470
      %s472 = sadd.s32 %s25, 1
      %s473 = smul.u32 %s472, 4
      %p474 = scmp.lt.s32.totalorder %s473, 15
      %s475 = scalar_select %p474, %s473, 15
      %s476 = smul.u32 2, %s475
      %p477 = scmp.lt.s32.totalorder %s24, 1
      %s478 = scalar_select %p477, %s24, 1
      %p479 = scmp.lt.s32.totalorder %s476, 31
      %s480 = scalar_select %p479, %s476, 31
      %s481 = smul.addr %s478, 32
      %s482 = sadd.s32 %s480, %s481
      %s483 = smul.addr %s482, 8
      %s484 = scalar_lea.vmem %s2, %s483
      %s485 = sadd.s32 %s25, 1
      %s486 = smul.u32 %s485, 4
      %p487 = scmp.lt.s32.totalorder %s486, 15
      %s488 = scalar_select %p487, %s486, 15
      %s489 = smul.u32 2, %s488
      %s490 = smul.u32 8, %s25
      %p491 = scmp.lt.s32.totalorder %s24, 1
      %s492 = scalar_select %p491, %s24, 1
      %p493 = scmp.lt.s32.totalorder %s490, 31
      %s494 = scalar_select %p493, %s490, 31
      %s495 = smul.addr %s492, 32
      %s496 = sadd.s32 %s494, %s495
      %s497 = smul.addr %s496, 8
      %s498 = scalar_lea.vmem %s9, %s497
      %s499 = smul.u32 8, %s25
      %v500 = vld [vmem:[%s452] sm:$0xff]
      %v501 = vld [vmem:[%s452 + $0x8] sm:$0xff]
      %v502 = vld [vmem:[%s452 + $0x10] sm:$0xff]
      %v503 = vld [vmem:[%s452 + $0x18] sm:$0xff]
      %v504 = vld [vmem:[%s452 + $0x20] sm:$0xff]
      %v505 = vld [vmem:[%s452 + $0x28] sm:$0xff]
      %v506 = vld [vmem:[%s452 + $0x30] sm:$0xff]
      %v507 = vld [vmem:[%s452 + $0x38] sm:$0xff]
      %v508 = vld [vmem:[%s466] sm:$0xff]
      %v509 = vld [vmem:[%s466 + $0x8] sm:$0xff]
      %p510 = scmp.gt.s32.totalorder %s25, 0
      %s511 = scalar_select %p510, 1, 0
      %s512 = scvt.s32.f32 %s511
      %v513 = vstv %s512
      %v514 = vmul.f32 %v508, %v513
      %v515 = vmul.f32 %v509, %v513
      %v516 = vld [vmem:[%s484] sm:$0xff]
      %v517 = vld [vmem:[%s484 + $0x8] sm:$0xff]
      %p518 = scmp.lt.s32.totalorder %s25, 3
      %s519 = scalar_select %p518, 1, 0
      %s520 = scvt.s32.f32 %s519
      %v521 = vstv %s520
      %v522 = vmul.f32 %v516, %v521
      %v523 = vmul.f32 %v517, %v521
      %v524 = vld [vmem:[%s3] sm:$0xf]
      %v525 = vld [vmem:[%s4] sm:$0x1]
      %v527 = vlaneseq
      %v528 = vshrl.u32 %v527, 7
      %v529 = vsub.s32 0, %v528
      %v530 = vrot.slane %v525, %v529
      %vm532 = vcmask 31744
      %v534 = vsel %vm532, %v514, 0
      %v537 = vsel %vm532, %v515, 0
      %v540 = vsel %vm532, %v500, 0
      %v543 = vsel %vm532, %v501, 0
      %v546 = vsel %vm532, %v502, 0
      %v549 = vsel %vm532, %v503, 0
      %v552 = vsel %vm532, %v504, 0
      %v555 = vsel %vm532, %v505, 0
      %v558 = vsel %vm532, %v506, 0
      %v561 = vsel %vm532, %v507, 0
      %v564 = vsel %vm532, %v522, 0
      %v567 = vsel %vm532, %v523, 0
      %vm569 = vcmask 1043456
      %v571 = vsel %vm569, %v524, 0
      %573 = vmatprep.subr.mxu0 0.0
      %574 = vmatpush1.msra.mxu0 %v571
      %575 = vmatprep.subr.mxu0 0.0
      %576 = vmatpush1.msra.mxu0 0.0
      %577 = vmatprep.subr.mxu0 0.0
      %578 = vmatpush1.msra.mxu0 0.0
      %579 = vmatprep.subr.mxu0 0.0
      %580 = vmatpush1.msra.mxu0 0.0
      %581 = vmatprep.subr.mxu0 0.0
      %582 = vmatpush1.msra.mxu0 0.0
      %583 = vmatprep.subr.mxu0 0.0
      %584 = vmatpush1.msra.mxu0 0.0
      %585 = vmatprep.subr.mxu0 0.0
      %586 = vmatpush1.msra.mxu0 0.0
      %587 = vmatprep.subr.mxu0 0.0
      %588 = vmatpush1.msra.mxu0 0.0
      %589 = vmatprep.subr.mxu0 0.0
      %590 = vmatpush1.msra.mxu0 0.0
      %591 = vmatprep.subr.mxu0 0.0
      %592 = vmatpush1.msra.mxu0 0.0
      %593 = vmatprep.subr.mxu0 0.0
      %594 = vmatpush1.msra.mxu0 0.0
      %595 = vmatprep.subr.mxu0 0.0
      %596 = vmatpush1.msra.mxu0 0.0
      %597 = vmatprep.subr.mxu0 0.0
      %598 = vmatpush1.msra.mxu0 0.0
      %599 = vmatprep.subr.mxu0 0.0
      %600 = vmatpush1.msra.mxu0 0.0
      %601 = vmatprep.subr.mxu0 0.0
      %602 = vmatpush1.msra.mxu0 0.0
      %603 = vmatprep.subr.mxu0 0.0
      %604 = vmatpush1.msra.mxu0 0.0
      %605 = vmatprep.subr.mxu0 0.0
      %606 = vmatpush1.msra.mxu0 0.0
      %607 = vmatprep.subr.mxu0 0.0
      %608 = vmatpush1.msra.mxu0 0.0
      %609 = vmatprep.subr.mxu0 0.0
      %610 = vmatpush1.msra.mxu0 0.0
      %611 = vmatprep.subr.mxu0 0.0
      %612 = vmatpush1.msra.mxu0 0.0
      %613 = vmatprep.subr.mxu0 0.0
      %614 = vmatpush1.msra.mxu0 0.0
      %615 = vmatprep.subr.mxu0 0.0
      %616 = vmatpush1.msra.mxu0 0.0
      %617 = vmatprep.subr.mxu0 0.0
      %618 = vmatpush1.msra.mxu0 0.0
      %619 = vmatprep.subr.mxu0 0.0
      %620 = vmatpush1.msra.mxu0 0.0
      %621 = vmatprep.subr.mxu0 0.0
      %622 = vmatpush1.msra.mxu0 0.0
      %623 = vmatprep.subr.mxu0 0.0
      %624 = vmatpush1.msra.mxu0 0.0
      %625 = vmatprep.subr.mxu0 0.0
      %626 = vmatpush1.msra.mxu0 0.0
      %627 = vmatprep.subr.mxu0 0.0
      %628 = vmatpush1.msra.mxu0 0.0
      %629 = vmatprep.subr.mxu0 0.0
      %630 = vmatpush1.msra.mxu0 0.0
      %631 = vmatprep.subr.mxu0 0.0
      %632 = vmatpush1.msra.mxu0 0.0
      %633 = vmatprep.subr.mxu0 0.0
      %634 = vmatpush1.msra.mxu0 0.0
      %635 = vmatprep.subr.mxu0 0.0
      %636 = vmatpush1.msra.mxu0 0.0
      %637 = vmatprep.mubr.f32.mxu0 0.0
      %638 = vmatmul.mubr.f32.gmra.mrb[0].mxu0 %v534
      %v639 = vpop.f32.mrb[0].mxu0
      %v640 = vadd.f32 %v530, %v639
      %v641 = vpop.f32.mrb[0].mxu0
      %642 = vmatprep.mubr.f32.mxu0 0.0
      %643 = vmatmul.mubr.f32.gmra.mrb[0].mxu0 %v537
      %v644 = vpop.f32.mrb[0].mxu0
      %v645 = vadd.f32 %v530, %v644
      %v646 = vpop.f32.mrb[0].mxu0
      %647 = vmatprep.mubr.f32.mxu0 0.0
      %648 = vmatmul.mubr.f32.gmra.mrb[0].mxu0 %v540
      %v649 = vpop.f32.mrb[0].mxu0
      %v650 = vadd.f32 %v530, %v649
      %v651 = vpop.f32.mrb[0].mxu0
      %652 = vmatprep.mubr.f32.mxu0 0.0
      %653 = vmatmul.mubr.f32.gmra.mrb[0].mxu0 %v543
      %v654 = vpop.f32.mrb[0].mxu0
      %v655 = vadd.f32 %v530, %v654
      %v656 = vpop.f32.mrb[0].mxu0
      %657 = vmatprep.mubr.f32.mxu0 0.0
      %658 = vmatmul.mubr.f32.gmra.mrb[0].mxu0 %v546
      %v659 = vpop.f32.mrb[0].mxu0
      %v660 = vadd.f32 %v530, %v659
      %v661 = vpop.f32.mrb[0].mxu0
      %662 = vmatprep.mubr.f32.mxu0 0.0
      %663 = vmatmul.mubr.f32.gmra.mrb[0].mxu0 %v549
      %v664 = vpop.f32.mrb[0].mxu0
      %v665 = vadd.f32 %v530, %v664
      %v666 = vpop.f32.mrb[0].mxu0
      %667 = vmatprep.mubr.f32.mxu0 0.0
      %668 = vmatmul.mubr.f32.gmra.mrb[0].mxu0 %v552
      %v669 = vpop.f32.mrb[0].mxu0
      %v670 = vadd.f32 %v530, %v669
      %v671 = vpop.f32.mrb[0].mxu0
      %672 = vmatprep.mubr.f32.mxu0 0.0
      %673 = vmatmul.mubr.f32.gmra.mrb[0].mxu0 %v555
      %v674 = vpop.f32.mrb[0].mxu0
      %v675 = vadd.f32 %v530, %v674
      %v676 = vpop.f32.mrb[0].mxu0
      %677 = vmatprep.mubr.f32.mxu0 0.0
      %678 = vmatmul.mubr.f32.gmra.mrb[0].mxu0 %v558
      %v679 = vpop.f32.mrb[0].mxu0
      %v680 = vadd.f32 %v530, %v679
      %v681 = vpop.f32.mrb[0].mxu0
      %682 = vmatprep.mubr.f32.mxu0 0.0
      %683 = vmatmul.mubr.f32.gmra.mrb[0].mxu0 %v561
      %v684 = vpop.f32.mrb[0].mxu0
      %v685 = vadd.f32 %v530, %v684
      %v686 = vpop.f32.mrb[0].mxu0
      %687 = vmatprep.mubr.f32.mxu0 0.0
      %688 = vmatmul.mubr.f32.gmra.mrb[0].mxu0 %v564
      %v689 = vpop.f32.mrb[0].mxu0
      %v690 = vadd.f32 %v530, %v689
      %v691 = vpop.f32.mrb[0].mxu0
      %692 = vmatprep.mubr.f32.mxu0 0.0
      %693 = vmatmul.mubr.f32.gmra.mrb[0].mxu0 %v567
      %v694 = vpop.f32.mrb[0].mxu0
      %v695 = vadd.f32 %v530, %v694
      %v696 = vpop.f32.mrb[0].mxu0
      %697 = vdwg.mxu0
      %v698 = vmax.f32 %v640, 0.0
      %v699 = vmax.f32 %v645, 0.0
      %v700 = vmax.f32 %v650, 0.0
      %v701 = vmax.f32 %v655, 0.0
      %v702 = vmax.f32 %v660, 0.0
      %v703 = vmax.f32 %v665, 0.0
      %v704 = vmax.f32 %v670, 0.0
      %v705 = vmax.f32 %v675, 0.0
      %v706 = vmax.f32 %v680, 0.0
      %v707 = vmax.f32 %v685, 0.0
      %v708 = vmax.f32 %v690, 0.0
      %v709 = vmax.f32 %v695, 0.0
      %v710 = vlaneseq
      %v711 = vshrl.u32 %v710, 7
      %v712 = vadd.s32 %v711, 8
      %v713 = vadd.s32 %v711, 16
      %v714 = vadd.s32 %v711, 24
      %v715 = vadd.s32 %v711, 32
      %v716 = vadd.s32 %v711, 40
      %v717 = vadd.s32 %v711, 48
      %v718 = vadd.s32 %v711, 56
      %v719 = vadd.s32 %v711, 64
      %v720 = vadd.s32 %v711, 72
      %v721 = vadd.s32 %v711, 80
      %v722 = vadd.s32 %v711, 88
      %v723 = vand.u32 %v711, 15
      %v724 = vand.u32 %v712, 15
      %v725 = vand.u32 %v713, 15
      %v726 = vand.u32 %v714, 15
      %v727 = vand.u32 %v715, 15
      %v728 = vand.u32 %v716, 15
      %v729 = vand.u32 %v717, 15
      %v730 = vand.u32 %v718, 15
      %v731 = vand.u32 %v719, 15
      %v732 = vand.u32 %v720, 15
      %v733 = vand.u32 %v721, 15
      %v734 = vand.u32 %v722, 15
      %vm735 = vcmp.gt.s32.totalorder %v723, 0
      %vm736 = vcmp.gt.s32.totalorder %v724, 0
      %vm737 = vcmp.gt.s32.totalorder %v725, 0
      %vm738 = vcmp.gt.s32.totalorder %v726, 0
      %vm739 = vcmp.gt.s32.totalorder %v727, 0
      %vm740 = vcmp.gt.s32.totalorder %v728, 0
      %vm741 = vcmp.gt.s32.totalorder %v729, 0
      %vm742 = vcmp.gt.s32.totalorder %v730, 0
      %vm743 = vcmp.gt.s32.totalorder %v731, 0
      %vm744 = vcmp.gt.s32.totalorder %v732, 0
      %vm745 = vcmp.gt.s32.totalorder %v733, 0
      %vm746 = vcmp.gt.s32.totalorder %v734, 0
      %v747 = vsel %vm735, 1, 0
      %v748 = vsel %vm736, 1, 0
      %v749 = vsel %vm737, 1, 0
      %v750 = vsel %vm738, 1, 0
      %v751 = vsel %vm739, 1, 0
      %v752 = vsel %vm740, 1, 0
      %v753 = vsel %vm741, 1, 0
      %v754 = vsel %vm742, 1, 0
      %v755 = vsel %vm743, 1, 0
      %v756 = vsel %vm744, 1, 0
      %v757 = vsel %vm745, 1, 0
      %v758 = vsel %vm746, 1, 0
      %v759 = vcvt.s32.f32 %v747
      %v760 = vcvt.s32.f32 %v748
      %v761 = vcvt.s32.f32 %v749
      %v762 = vcvt.s32.f32 %v750
      %v763 = vcvt.s32.f32 %v751
      %v764 = vcvt.s32.f32 %v752
      %v765 = vcvt.s32.f32 %v753
      %v766 = vcvt.s32.f32 %v754
      %v767 = vcvt.s32.f32 %v755
      %v768 = vcvt.s32.f32 %v756
      %v769 = vcvt.s32.f32 %v757
      %v770 = vcvt.s32.f32 %v758
      %vm771 = vcmp.lt.s32.totalorder %v723, 15
      %vm772 = vcmp.lt.s32.totalorder %v724, 15
      %vm773 = vcmp.lt.s32.totalorder %v725, 15
      %vm774 = vcmp.lt.s32.totalorder %v726, 15
      %vm775 = vcmp.lt.s32.totalorder %v727, 15
      %vm776 = vcmp.lt.s32.totalorder %v728, 15
      %vm777 = vcmp.lt.s32.totalorder %v729, 15
      %vm778 = vcmp.lt.s32.totalorder %v730, 15
      %vm779 = vcmp.lt.s32.totalorder %v731, 15
      %vm780 = vcmp.lt.s32.totalorder %v732, 15
      %vm781 = vcmp.lt.s32.totalorder %v733, 15
      %vm782 = vcmp.lt.s32.totalorder %v734, 15
      %v783 = vsel %vm771, 1, 0
      %v784 = vsel %vm772, 1, 0
      %v785 = vsel %vm773, 1, 0
      %v786 = vsel %vm774, 1, 0
      %v787 = vsel %vm775, 1, 0
      %v788 = vsel %vm776, 1, 0
      %v789 = vsel %vm777, 1, 0
      %v790 = vsel %vm778, 1, 0
      %v791 = vsel %vm779, 1, 0
      %v792 = vsel %vm780, 1, 0
      %v793 = vsel %vm781, 1, 0
      %v794 = vsel %vm782, 1, 0
      %v795 = vcvt.s32.f32 %v783
      %v796 = vcvt.s32.f32 %v784
      %v797 = vcvt.s32.f32 %v785
      %v798 = vcvt.s32.f32 %v786
      %v799 = vcvt.s32.f32 %v787
      %v800 = vcvt.s32.f32 %v788
      %v801 = vcvt.s32.f32 %v789
      %v802 = vcvt.s32.f32 %v790
      %v803 = vcvt.s32.f32 %v791
      %v804 = vcvt.s32.f32 %v792
      %v805 = vcvt.s32.f32 %v793
      %v806 = vcvt.s32.f32 %v794
      %v807 = vrot.slane %v698, 7
      %v808 = vrot.slane %v699, 7
      %v809 = vrot.slane %v700, 7
      %v810 = vrot.slane %v701, 7
      %v811 = vrot.slane %v702, 7
      %v812 = vrot.slane %v703, 7
      %v813 = vrot.slane %v704, 7
      %v814 = vrot.slane %v705, 7
      %v815 = vrot.slane %v706, 7
      %v816 = vrot.slane %v707, 7
      %v817 = vrot.slane %v708, 7
      %v818 = vrot.slane %v709, 7
      %vm819 = vcmp.lt.s32.totalorder %v711, 1
      %v820 = vsel %vm819, %v817, %v818
      %v821 = vsel %vm819, %v816, %v817
      %v822 = vsel %vm819, %v815, %v816
      %v823 = vsel %vm819, %v814, %v815
      %v824 = vsel %vm819, %v813, %v814
      %v825 = vsel %vm819, %v812, %v813
      %v826 = vsel %vm819, %v811, %v812
      %v827 = vsel %vm819, %v810, %v811
      %v828 = vsel %vm819, %v809, %v810
      %v829 = vsel %vm819, %v808, %v809
      %v830 = vsel %vm819, %v807, %v808
      %v831 = vsel %vm819, %v818, %v807
      %v832 = vmul.f32 %v831, %v759
      %v833 = vmul.f32 %v830, %v760
      %v834 = vmul.f32 %v829, %v761
      %v835 = vmul.f32 %v828, %v762
      %v836 = vmul.f32 %v827, %v763
      %v837 = vmul.f32 %v826, %v764
      %v838 = vmul.f32 %v825, %v765
      %v839 = vmul.f32 %v824, %v766
      %v840 = vmul.f32 %v823, %v767
      %v841 = vmul.f32 %v822, %v768
      %v842 = vmul.f32 %v821, %v769
      %v843 = vmul.f32 %v820, %v770
      %v844 = vrot.slane %v698, 1
      %v845 = vrot.slane %v699, 1
      %v846 = vrot.slane %v700, 1
      %v847 = vrot.slane %v701, 1
      %v848 = vrot.slane %v702, 1
      %v849 = vrot.slane %v703, 1
      %v850 = vrot.slane %v704, 1
      %v851 = vrot.slane %v705, 1
      %v852 = vrot.slane %v706, 1
      %v853 = vrot.slane %v707, 1
      %v854 = vrot.slane %v708, 1
      %v855 = vrot.slane %v709, 1
      %vm856 = vcmp.lt.s32.totalorder %v711, 7
      %v857 = vsel %vm856, %v854, %v855
      %v858 = vsel %vm856, %v853, %v854
      %v859 = vsel %vm856, %v852, %v853
      %v860 = vsel %vm856, %v851, %v852
      %v861 = vsel %vm856, %v850, %v851
      %v862 = vsel %vm856, %v849, %v850
      %v863 = vsel %vm856, %v848, %v849
      %v864 = vsel %vm856, %v847, %v848
      %v865 = vsel %vm856, %v846, %v847
      %v866 = vsel %vm856, %v845, %v846
      %v867 = vsel %vm856, %v844, %v845
      %v868 = vsel %vm856, %v855, %v844
      %v869 = vmul.f32 %v867, %v795
      %v870 = vmul.f32 %v866, %v796
      %v871 = vmul.f32 %v865, %v797
      %v872 = vmul.f32 %v864, %v798
      %v873 = vmul.f32 %v863, %v799
      %v874 = vmul.f32 %v862, %v800
      %v875 = vmul.f32 %v861, %v801
      %v876 = vmul.f32 %v860, %v802
      %v877 = vmul.f32 %v859, %v803
      %v878 = vmul.f32 %v858, %v804
      %v879 = vmul.f32 %v857, %v805
      %v880 = vmul.f32 %v868, %v806
      %v881 = vld [vmem:[%s5] sm:$0xff]
      %v882 = vld [vmem:[%s5 + $0x8] sm:$0xff]
      %v883 = vld [vmem:[%s5 + $0x10] sm:$0xff]
      %v884 = vld [vmem:[%s5 + $0x18] sm:$0xff]
      %v885 = vld [vmem:[%s5 + $0x20] sm:$0xff]
      %v886 = vld [vmem:[%s5 + $0x28] sm:$0xff]
      %v887 = vld [vmem:[%s5 + $0x30] sm:$0xff]
      %v888 = vld [vmem:[%s5 + $0x38] sm:$0xff]
      %v889 = vld [vmem:[%s5 + $0x40] sm:$0xff]
      %v890 = vld [vmem:[%s5 + $0x48] sm:$0xff]
      %v891 = vld [vmem:[%s5 + $0x50] sm:$0xff]
      %v892 = vld [vmem:[%s5 + $0x58] sm:$0xff]
      %v893 = vld [vmem:[%s5 + $0x60] sm:$0xff]
      %v894 = vld [vmem:[%s5 + $0x68] sm:$0xff]
      %v895 = vld [vmem:[%s5 + $0x70] sm:$0xff]
      %v896 = vld [vmem:[%s5 + $0x78] sm:$0xff]
      %v897 = vld [vmem:[%s5 + $0x80] sm:$0xff]
      %v898 = vld [vmem:[%s5 + $0x88] sm:$0xff]
      %v899 = vld [vmem:[%s5 + $0x90] sm:$0xff]
      %v900 = vld [vmem:[%s5 + $0x98] sm:$0xff]
      %v901 = vld [vmem:[%s5 + $0xa0] sm:$0xff]
      %v902 = vld [vmem:[%s5 + $0xa8] sm:$0xff]
      %v903 = vld [vmem:[%s5 + $0xb0] sm:$0xff]
      %v904 = vld [vmem:[%s5 + $0xb8] sm:$0xff]
      %v905 = vld [vmem:[%s5 + $0xc0] sm:$0xff]
      %v906 = vld [vmem:[%s5 + $0xc8] sm:$0xff]
      %v907 = vld [vmem:[%s5 + $0xd0] sm:$0xff]
      %v908 = vld [vmem:[%s5 + $0xd8] sm:$0xff]
      %v909 = vld [vmem:[%s5 + $0xe0] sm:$0xff]
      %v910 = vld [vmem:[%s5 + $0xe8] sm:$0xff]
      %v911 = vld [vmem:[%s5 + $0xf0] sm:$0xff]
      %v912 = vld [vmem:[%s5 + $0xf8] sm:$0xff]
      %v913 = vld [vmem:[%s5 + $0x100] sm:$0xff]
      %v914 = vld [vmem:[%s5 + $0x108] sm:$0xff]
      %v915 = vld [vmem:[%s5 + $0x110] sm:$0xff]
      %v916 = vld [vmem:[%s5 + $0x118] sm:$0xff]
      %v917 = vld [vmem:[%s5 + $0x120] sm:$0xff]
      %v918 = vld [vmem:[%s5 + $0x128] sm:$0xff]
      %v919 = vld [vmem:[%s5 + $0x130] sm:$0xff]
      %v920 = vld [vmem:[%s5 + $0x138] sm:$0xff]
      %v921 = vld [vmem:[%s5 + $0x140] sm:$0xff]
      %v922 = vld [vmem:[%s5 + $0x148] sm:$0xff]
      %v923 = vld [vmem:[%s5 + $0x150] sm:$0xff]
      %v924 = vld [vmem:[%s5 + $0x158] sm:$0xff]
      %v925 = vld [vmem:[%s5 + $0x160] sm:$0xff]
      %v926 = vld [vmem:[%s5 + $0x168] sm:$0xff]
      %v927 = vld [vmem:[%s5 + $0x170] sm:$0xff]
      %v928 = vld [vmem:[%s5 + $0x178] sm:$0xff]
      %s929 = scalar_lea.vmem %s5, 384
      %v930 = vld [vmem:[%s929] sm:$0xff]
      %v931 = vld [vmem:[%s929 + $0x8] sm:$0xff]
      %v932 = vld [vmem:[%s929 + $0x10] sm:$0xff]
      %v933 = vld [vmem:[%s929 + $0x18] sm:$0xff]
      %v934 = vld [vmem:[%s929 + $0x20] sm:$0xff]
      %v935 = vld [vmem:[%s929 + $0x28] sm:$0xff]
      %v936 = vld [vmem:[%s929 + $0x30] sm:$0xff]
      %v937 = vld [vmem:[%s929 + $0x38] sm:$0xff]
      %v938 = vld [vmem:[%s929 + $0x40] sm:$0xff]
      %v939 = vld [vmem:[%s929 + $0x48] sm:$0xff]
      %v940 = vld [vmem:[%s929 + $0x50] sm:$0xff]
      %v941 = vld [vmem:[%s929 + $0x58] sm:$0xff]
      %v942 = vld [vmem:[%s929 + $0x60] sm:$0xff]
      %v943 = vld [vmem:[%s929 + $0x68] sm:$0xff]
      %v944 = vld [vmem:[%s929 + $0x70] sm:$0xff]
      %v945 = vld [vmem:[%s929 + $0x78] sm:$0xff]
      %v946 = vld [vmem:[%s929 + $0x80] sm:$0xff]
      %v947 = vld [vmem:[%s929 + $0x88] sm:$0xff]
      %v948 = vld [vmem:[%s929 + $0x90] sm:$0xff]
      %v949 = vld [vmem:[%s929 + $0x98] sm:$0xff]
      %v950 = vld [vmem:[%s929 + $0xa0] sm:$0xff]
      %v951 = vld [vmem:[%s929 + $0xa8] sm:$0xff]
      %v952 = vld [vmem:[%s929 + $0xb0] sm:$0xff]
      %v953 = vld [vmem:[%s929 + $0xb8] sm:$0xff]
      %v954 = vld [vmem:[%s929 + $0xc0] sm:$0xff]
      %v955 = vld [vmem:[%s929 + $0xc8] sm:$0xff]
      %v956 = vld [vmem:[%s929 + $0xd0] sm:$0xff]
      %v957 = vld [vmem:[%s929 + $0xd8] sm:$0xff]
      %v958 = vld [vmem:[%s929 + $0xe0] sm:$0xff]
      %v959 = vld [vmem:[%s929 + $0xe8] sm:$0xff]
      %v960 = vld [vmem:[%s929 + $0xf0] sm:$0xff]
      %v961 = vld [vmem:[%s929 + $0xf8] sm:$0xff]
      %v962 = vld [vmem:[%s929 + $0x100] sm:$0xff]
      %v963 = vld [vmem:[%s929 + $0x108] sm:$0xff]
      %v964 = vld [vmem:[%s929 + $0x110] sm:$0xff]
      %v965 = vld [vmem:[%s929 + $0x118] sm:$0xff]
      %v966 = vld [vmem:[%s929 + $0x120] sm:$0xff]
      %v967 = vld [vmem:[%s929 + $0x128] sm:$0xff]
      %v968 = vld [vmem:[%s929 + $0x130] sm:$0xff]
      %v969 = vld [vmem:[%s929 + $0x138] sm:$0xff]
      %v970 = vld [vmem:[%s929 + $0x140] sm:$0xff]
      %v971 = vld [vmem:[%s929 + $0x148] sm:$0xff]
      %v972 = vld [vmem:[%s929 + $0x150] sm:$0xff]
      %v973 = vld [vmem:[%s929 + $0x158] sm:$0xff]
      %v974 = vld [vmem:[%s929 + $0x160] sm:$0xff]
      %v975 = vld [vmem:[%s929 + $0x168] sm:$0xff]
      %v976 = vld [vmem:[%s929 + $0x170] sm:$0xff]
      %v977 = vld [vmem:[%s929 + $0x178] sm:$0xff]
      %978 = vmatprep.subr.mxu0 0.0
      %979 = vmatpush1.msra.mxu0 %v930
      %980 = vmatprep.subr.mxu0 0.0
      %981 = vmatpush1.msra.mxu0 %v931
      %982 = vmatprep.subr.mxu0 0.0
      %983 = vmatpush1.msra.mxu0 %v932
      %984 = vmatprep.subr.mxu0 0.0
      %985 = vmatpush1.msra.mxu0 %v933
      %986 = vmatprep.subr.mxu0 0.0
      %987 = vmatpush1.msra.mxu0 %v934
      %988 = vmatprep.subr.mxu0 0.0
      %989 = vmatpush1.msra.mxu0 %v935
      %990 = vmatprep.subr.mxu0 0.0
      %991 = vmatpush1.msra.mxu0 %v936
      %992 = vmatprep.subr.mxu0 0.0
      %993 = vmatpush1.msra.mxu0 %v937
      %994 = vmatprep.subr.mxu0 0.0
      %995 = vmatpush1.msra.mxu0 %v938
      %996 = vmatprep.subr.mxu0 0.0
      %997 = vmatpush1.msra.mxu0 %v939
      %998 = vmatprep.subr.mxu0 0.0
      %999 = vmatpush1.msra.mxu0 %v940
      %1000 = vmatprep.subr.mxu0 0.0
      %1001 = vmatpush1.msra.mxu0 %v941
      %1002 = vmatprep.subr.mxu0 0.0
      %1003 = vmatpush1.msra.mxu0 %v942
      %1004 = vmatprep.subr.mxu0 0.0
      %1005 = vmatpush1.msra.mxu0 %v943
      %1006 = vmatprep.subr.mxu0 0.0
      %1007 = vmatpush1.msra.mxu0 %v944
      %1008 = vmatprep.subr.mxu0 0.0
      %1009 = vmatpush1.msra.mxu0 %v945
      %1010 = vmatprep.subr.mxu0 0.0
      %1011 = vmatpush1.msra.mxu0 %v946
      %1012 = vmatprep.subr.mxu0 0.0
      %1013 = vmatpush1.msra.mxu0 %v947
      %1014 = vmatprep.subr.mxu0 0.0
      %1015 = vmatpush1.msra.mxu0 %v948
      %1016 = vmatprep.subr.mxu0 0.0
      %1017 = vmatpush1.msra.mxu0 %v949
      %1018 = vmatprep.subr.mxu0 0.0
      %1019 = vmatpush1.msra.mxu0 %v950
      %1020 = vmatprep.subr.mxu0 0.0
      %1021 = vmatpush1.msra.mxu0 %v951
      %1022 = vmatprep.subr.mxu0 0.0
      %1023 = vmatpush1.msra.mxu0 %v952
      %1024 = vmatprep.subr.mxu0 0.0
      %1025 = vmatpush1.msra.mxu0 %v953
      %1026 = vmatprep.subr.mxu0 0.0
      %1027 = vmatpush1.msra.mxu0 %v954
      %1028 = vmatprep.subr.mxu0 0.0
      %1029 = vmatpush1.msra.mxu0 %v955
      %1030 = vmatprep.subr.mxu0 0.0
      %1031 = vmatpush1.msra.mxu0 %v956
      %1032 = vmatprep.subr.mxu0 0.0
      %1033 = vmatpush1.msra.mxu0 %v957
      %1034 = vmatprep.subr.mxu0 0.0
      %1035 = vmatpush1.msra.mxu0 %v958
      %1036 = vmatprep.subr.mxu0 0.0
      %1037 = vmatpush1.msra.mxu0 %v959
      %1038 = vmatprep.subr.mxu0 0.0
      %1039 = vmatpush1.msra.mxu0 %v960
      %1040 = vmatprep.subr.mxu0 0.0
      %1041 = vmatpush1.msra.mxu0 %v961
      %1042 = vmatprep.mubr.f32.mxu0 %v700
      %1043 = vmatmul.mubr.f32.gmra.mrb[0].mxu0 %v834
      %v1044 = vpop.f32.mrb[0].mxu0
      %v1045 = vadd.f32 0.0, %v1044
      %v1046 = vpop.f32.mrb[0].mxu0
      %1047 = vmatprep.mubr.f32.mxu0 %v701
      %1048 = vmatmul.mubr.f32.gmra.mrb[0].mxu0 %v835
      %v1049 = vpop.f32.mrb[0].mxu0
      %v1050 = vadd.f32 0.0, %v1049
      %v1051 = vpop.f32.mrb[0].mxu0
      %1052 = vmatprep.mubr.f32.mxu0 %v702
      %1053 = vmatmul.mubr.f32.gmra.mrb[0].mxu0 %v836
      %v1054 = vpop.f32.mrb[0].mxu0
      %v1055 = vadd.f32 0.0, %v1054
      %v1056 = vpop.f32.mrb[0].mxu0
      %1057 = vmatprep.mubr.f32.mxu0 %v703
      %1058 = vmatmul.mubr.f32.gmra.mrb[0].mxu0 %v837
      %v1059 = vpop.f32.mrb[0].mxu0
      %v1060 = vadd.f32 0.0, %v1059
      %v1061 = vpop.f32.mrb[0].mxu0
      %1062 = vmatprep.mubr.f32.mxu0 %v704
      %1063 = vmatmul.mubr.f32.gmra.mrb[0].mxu0 %v838
      %v1064 = vpop.f32.mrb[0].mxu0
      %v1065 = vadd.f32 0.0, %v1064
      %v1066 = vpop.f32.mrb[0].mxu0
      %1067 = vmatprep.mubr.f32.mxu0 %v705
      %1068 = vmatmul.mubr.f32.gmra.mrb[0].mxu0 %v839
      %v1069 = vpop.f32.mrb[0].mxu0
      %v1070 = vadd.f32 0.0, %v1069
      %v1071 = vpop.f32.mrb[0].mxu0
      %1072 = vmatprep.mubr.f32.mxu0 %v706
      %1073 = vmatmul.mubr.f32.gmra.mrb[0].mxu0 %v840
      %v1074 = vpop.f32.mrb[0].mxu0
      %v1075 = vadd.f32 0.0, %v1074
      %v1076 = vpop.f32.mrb[0].mxu0
      %1077 = vmatprep.mubr.f32.mxu0 %v707
      %1078 = vmatmul.mubr.f32.gmra.mrb[0].mxu0 %v841
      %v1079 = vpop.f32.mrb[0].mxu0
      %v1080 = vadd.f32 0.0, %v1079
      %v1081 = vpop.f32.mrb[0].mxu0
      %1082 = vdwg.mxu0
      %1083 = vmatprep.subr.mxu0 0.0
      %1084 = vmatpush1.msra.mxu0 %v962
      %1085 = vmatprep.subr.mxu0 0.0
      %1086 = vmatpush1.msra.mxu0 %v963
      %1087 = vmatprep.subr.mxu0 0.0
      %1088 = vmatpush1.msra.mxu0 %v964
      %1089 = vmatprep.subr.mxu0 0.0
      %1090 = vmatpush1.msra.mxu0 %v965
      %1091 = vmatprep.subr.mxu0 0.0
      %1092 = vmatpush1.msra.mxu0 %v966
      %1093 = vmatprep.subr.mxu0 0.0
      %1094 = vmatpush1.msra.mxu0 %v967
      %1095 = vmatprep.subr.mxu0 0.0
      %1096 = vmatpush1.msra.mxu0 %v968
      %1097 = vmatprep.subr.mxu0 0.0
      %1098 = vmatpush1.msra.mxu0 %v969
      %1099 = vmatprep.subr.mxu0 0.0
      %1100 = vmatpush1.msra.mxu0 %v970
      %1101 = vmatprep.subr.mxu0 0.0
      %1102 = vmatpush1.msra.mxu0 %v971
      %1103 = vmatprep.subr.mxu0 0.0
      %1104 = vmatpush1.msra.mxu0 %v972
      %1105 = vmatprep.subr.mxu0 0.0
      %1106 = vmatpush1.msra.mxu0 %v973
      %1107 = vmatprep.subr.mxu0 0.0
      %1108 = vmatpush1.msra.mxu0 %v974
      %1109 = vmatprep.subr.mxu0 0.0
      %1110 = vmatpush1.msra.mxu0 %v975
      %1111 = vmatprep.subr.mxu0 0.0
      %1112 = vmatpush1.msra.mxu0 %v976
      %1113 = vmatprep.subr.mxu0 0.0
      %1114 = vmatpush1.msra.mxu0 %v977
      %1115 = vmatprep.subr.mxu0 0.0
      %1116 = vmatpush1.msra.mxu0 0.0
      %1117 = vmatprep.subr.mxu0 0.0
      %1118 = vmatpush1.msra.mxu0 0.0
      %1119 = vmatprep.subr.mxu0 0.0
      %1120 = vmatpush1.msra.mxu0 0.0
      %1121 = vmatprep.subr.mxu0 0.0
      %1122 = vmatpush1.msra.mxu0 0.0
      %1123 = vmatprep.subr.mxu0 0.0
      %1124 = vmatpush1.msra.mxu0 0.0
      %1125 = vmatprep.subr.mxu0 0.0
      %1126 = vmatpush1.msra.mxu0 0.0
      %1127 = vmatprep.subr.mxu0 0.0
      %1128 = vmatpush1.msra.mxu0 0.0
      %1129 = vmatprep.subr.mxu0 0.0
      %1130 = vmatpush1.msra.mxu0 0.0
      %1131 = vmatprep.subr.mxu0 0.0
      %1132 = vmatpush1.msra.mxu0 0.0
      %1133 = vmatprep.subr.mxu0 0.0
      %1134 = vmatpush1.msra.mxu0 0.0
      %1135 = vmatprep.subr.mxu0 0.0
      %1136 = vmatpush1.msra.mxu0 0.0
      %1137 = vmatprep.subr.mxu0 0.0
      %1138 = vmatpush1.msra.mxu0 0.0
      %1139 = vmatprep.subr.mxu0 0.0
      %1140 = vmatpush1.msra.mxu0 0.0
      %1141 = vmatprep.subr.mxu0 0.0
      %1142 = vmatpush1.msra.mxu0 0.0
      %1143 = vmatprep.subr.mxu0 0.0
      %1144 = vmatpush1.msra.mxu0 0.0
      %1145 = vmatprep.subr.mxu0 0.0
      %1146 = vmatpush1.msra.mxu0 0.0
      %1147 = vmatprep.mubr.f32.mxu0 0.0
      %1148 = vmatmul.mubr.f32.gmra.mrb[0].mxu0 %v871
      %v1149 = vpop.f32.mrb[0].mxu0
      %v1150 = vadd.f32 %v1045, %v1149
      %v1151 = vpop.f32.mrb[0].mxu0
      %1152 = vmatprep.mubr.f32.mxu0 0.0
      %1153 = vmatmul.mubr.f32.gmra.mrb[0].mxu0 %v872
      %v1154 = vpop.f32.mrb[0].mxu0
      %v1155 = vadd.f32 %v1050, %v1154
      %v1156 = vpop.f32.mrb[0].mxu0
      %1157 = vmatprep.mubr.f32.mxu0 0.0
      %1158 = vmatmul.mubr.f32.gmra.mrb[0].mxu0 %v873
      %v1159 = vpop.f32.mrb[0].mxu0
      %v1160 = vadd.f32 %v1055, %v1159
      %v1161 = vpop.f32.mrb[0].mxu0
      %1162 = vmatprep.mubr.f32.mxu0 0.0
      %1163 = vmatmul.mubr.f32.gmra.mrb[0].mxu0 %v874
      %v1164 = vpop.f32.mrb[0].mxu0
      %v1165 = vadd.f32 %v1060, %v1164
      %v1166 = vpop.f32.mrb[0].mxu0
      %1167 = vmatprep.mubr.f32.mxu0 0.0
      %1168 = vmatmul.mubr.f32.gmra.mrb[0].mxu0 %v875
      %v1169 = vpop.f32.mrb[0].mxu0
      %v1170 = vadd.f32 %v1065, %v1169
      %v1171 = vpop.f32.mrb[0].mxu0
      %1172 = vmatprep.mubr.f32.mxu0 0.0
      %1173 = vmatmul.mubr.f32.gmra.mrb[0].mxu0 %v876
      %v1174 = vpop.f32.mrb[0].mxu0
      %v1175 = vadd.f32 %v1070, %v1174
      %v1176 = vpop.f32.mrb[0].mxu0
      %1177 = vmatprep.mubr.f32.mxu0 0.0
      %1178 = vmatmul.mubr.f32.gmra.mrb[0].mxu0 %v877
      %v1179 = vpop.f32.mrb[0].mxu0
      %v1180 = vadd.f32 %v1075, %v1179
      %v1181 = vpop.f32.mrb[0].mxu0
      %1182 = vmatprep.mubr.f32.mxu0 0.0
      %1183 = vmatmul.mubr.f32.gmra.mrb[0].mxu0 %v878
      %v1184 = vpop.f32.mrb[0].mxu0
      %v1185 = vadd.f32 %v1080, %v1184
      %v1186 = vpop.f32.mrb[0].mxu0
      %1187 = vdwg.mxu0
      %1188 = vmatprep.subr.mxu0 0.0
      %1189 = vmatpush1.msra.mxu0 %v881
      %1190 = vmatprep.subr.mxu0 0.0
      %1191 = vmatpush1.msra.mxu0 %v882
      %1192 = vmatprep.subr.mxu0 0.0
      %1193 = vmatpush1.msra.mxu0 %v883
      %1194 = vmatprep.subr.mxu0 0.0
      %1195 = vmatpush1.msra.mxu0 %v884
      %1196 = vmatprep.subr.mxu0 0.0
      %1197 = vmatpush1.msra.mxu0 %v885
      %1198 = vmatprep.subr.mxu0 0.0
      %1199 = vmatpush1.msra.mxu0 %v886
      %1200 = vmatprep.subr.mxu0 0.0
      %1201 = vmatpush1.msra.mxu0 %v887
      %1202 = vmatprep.subr.mxu0 0.0
      %1203 = vmatpush1.msra.mxu0 %v888
      %1204 = vmatprep.subr.mxu0 0.0
      %1205 = vmatpush1.msra.mxu0 %v889
      %1206 = vmatprep.subr.mxu0 0.0
      %1207 = vmatpush1.msra.mxu0 %v890
      %1208 = vmatprep.subr.mxu0 0.0
      %1209 = vmatpush1.msra.mxu0 %v891
      %1210 = vmatprep.subr.mxu0 0.0
      %1211 = vmatpush1.msra.mxu0 %v892
      %1212 = vmatprep.subr.mxu0 0.0
      %1213 = vmatpush1.msra.mxu0 %v893
      %1214 = vmatprep.subr.mxu0 0.0
      %1215 = vmatpush1.msra.mxu0 %v894
      %1216 = vmatprep.subr.mxu0 0.0
      %1217 = vmatpush1.msra.mxu0 %v895
      %1218 = vmatprep.subr.mxu0 0.0
      %1219 = vmatpush1.msra.mxu0 %v896
      %1220 = vmatprep.subr.mxu0 0.0
      %1221 = vmatpush1.msra.mxu0 %v897
      %1222 = vmatprep.subr.mxu0 0.0
      %1223 = vmatpush1.msra.mxu0 %v898
      %1224 = vmatprep.subr.mxu0 0.0
      %1225 = vmatpush1.msra.mxu0 %v899
      %1226 = vmatprep.subr.mxu0 0.0
      %1227 = vmatpush1.msra.mxu0 %v900
      %1228 = vmatprep.subr.mxu0 0.0
      %1229 = vmatpush1.msra.mxu0 %v901
      %1230 = vmatprep.subr.mxu0 0.0
      %1231 = vmatpush1.msra.mxu0 %v902
      %1232 = vmatprep.subr.mxu0 0.0
      %1233 = vmatpush1.msra.mxu0 %v903
      %1234 = vmatprep.subr.mxu0 0.0
      %1235 = vmatpush1.msra.mxu0 %v904
      %1236 = vmatprep.subr.mxu0 0.0
      %1237 = vmatpush1.msra.mxu0 %v905
      %1238 = vmatprep.subr.mxu0 0.0
      %1239 = vmatpush1.msra.mxu0 %v906
      %1240 = vmatprep.subr.mxu0 0.0
      %1241 = vmatpush1.msra.mxu0 %v907
      %1242 = vmatprep.subr.mxu0 0.0
      %1243 = vmatpush1.msra.mxu0 %v908
      %1244 = vmatprep.subr.mxu0 0.0
      %1245 = vmatpush1.msra.mxu0 %v909
      %1246 = vmatprep.subr.mxu0 0.0
      %1247 = vmatpush1.msra.mxu0 %v910
      %1248 = vmatprep.subr.mxu0 0.0
      %1249 = vmatpush1.msra.mxu0 %v911
      %1250 = vmatprep.subr.mxu0 0.0
      %1251 = vmatpush1.msra.mxu0 %v912
      %1252 = vmatprep.mubr.f32.mxu0 %v698
      %1253 = vmatmul.mubr.f32.gmra.mrb[0].mxu0 %v832
      %v1254 = vpop.f32.mrb[0].mxu0
      %v1255 = vadd.f32 %v1150, %v1254
      %v1256 = vpop.f32.mrb[0].mxu0
      %1257 = vmatprep.mubr.f32.mxu0 %v699
      %1258 = vmatmul.mubr.f32.gmra.mrb[0].mxu0 %v833
      %v1259 = vpop.f32.mrb[0].mxu0
      %v1260 = vadd.f32 %v1155, %v1259
      %v1261 = vpop.f32.mrb[0].mxu0
      %1262 = vmatprep.mubr.f32.mxu0 %v700
      %1263 = vmatmul.mubr.f32.gmra.mrb[0].mxu0 %v834
      %v1264 = vpop.f32.mrb[0].mxu0
      %v1265 = vadd.f32 %v1160, %v1264
      %v1266 = vpop.f32.mrb[0].mxu0
      %1267 = vmatprep.mubr.f32.mxu0 %v701
      %1268 = vmatmul.mubr.f32.gmra.mrb[0].mxu0 %v835
      %v1269 = vpop.f32.mrb[0].mxu0
      %v1270 = vadd.f32 %v1165, %v1269
      %v1271 = vpop.f32.mrb[0].mxu0
      %1272 = vmatprep.mubr.f32.mxu0 %v702
      %1273 = vmatmul.mubr.f32.gmra.mrb[0].mxu0 %v836
      %v1274 = vpop.f32.mrb[0].mxu0
      %v1275 = vadd.f32 %v1170, %v1274
      %v1276 = vpop.f32.mrb[0].mxu0
      %1277 = vmatprep.mubr.f32.mxu0 %v703
      %1278 = vmatmul.mubr.f32.gmra.mrb[0].mxu0 %v837
      %v1279 = vpop.f32.mrb[0].mxu0
      %v1280 = vadd.f32 %v1175, %v1279
      %v1281 = vpop.f32.mrb[0].mxu0
      %1282 = vmatprep.mubr.f32.mxu0 %v704
      %1283 = vmatmul.mubr.f32.gmra.mrb[0].mxu0 %v838
      %v1284 = vpop.f32.mrb[0].mxu0
      %v1285 = vadd.f32 %v1180, %v1284
      %v1286 = vpop.f32.mrb[0].mxu0
      %1287 = vmatprep.mubr.f32.mxu0 %v705
      %1288 = vmatmul.mubr.f32.gmra.mrb[0].mxu0 %v839
      %v1289 = vpop.f32.mrb[0].mxu0
      %v1290 = vadd.f32 %v1185, %v1289
      %v1291 = vpop.f32.mrb[0].mxu0
      %1292 = vdwg.mxu0
      %1293 = vmatprep.subr.mxu0 0.0
      %1294 = vmatpush1.msra.mxu0 %v913
      %1295 = vmatprep.subr.mxu0 0.0
      %1296 = vmatpush1.msra.mxu0 %v914
      %1297 = vmatprep.subr.mxu0 0.0
      %1298 = vmatpush1.msra.mxu0 %v915
      %1299 = vmatprep.subr.mxu0 0.0
      %1300 = vmatpush1.msra.mxu0 %v916
      %1301 = vmatprep.subr.mxu0 0.0
      %1302 = vmatpush1.msra.mxu0 %v917
      %1303 = vmatprep.subr.mxu0 0.0
      %1304 = vmatpush1.msra.mxu0 %v918
      %1305 = vmatprep.subr.mxu0 0.0
      %1306 = vmatpush1.msra.mxu0 %v919
      %1307 = vmatprep.subr.mxu0 0.0
      %1308 = vmatpush1.msra.mxu0 %v920
      %1309 = vmatprep.subr.mxu0 0.0
      %1310 = vmatpush1.msra.mxu0 %v921
      %1311 = vmatprep.subr.mxu0 0.0
      %1312 = vmatpush1.msra.mxu0 %v922
      %1313 = vmatprep.subr.mxu0 0.0
      %1314 = vmatpush1.msra.mxu0 %v923
      %1315 = vmatprep.subr.mxu0 0.0
      %1316 = vmatpush1.msra.mxu0 %v924
      %1317 = vmatprep.subr.mxu0 0.0
      %1318 = vmatpush1.msra.mxu0 %v925
      %1319 = vmatprep.subr.mxu0 0.0
      %1320 = vmatpush1.msra.mxu0 %v926
      %1321 = vmatprep.subr.mxu0 0.0
      %1322 = vmatpush1.msra.mxu0 %v927
      %1323 = vmatprep.subr.mxu0 0.0
      %1324 = vmatpush1.msra.mxu0 %v928
      %1325 = vmatprep.subr.mxu0 0.0
      %1326 = vmatpush1.msra.mxu0 0.0
      %1327 = vmatprep.subr.mxu0 0.0
      %1328 = vmatpush1.msra.mxu0 0.0
      %1329 = vmatprep.subr.mxu0 0.0
      %1330 = vmatpush1.msra.mxu0 0.0
      %1331 = vmatprep.subr.mxu0 0.0
      %1332 = vmatpush1.msra.mxu0 0.0
      %1333 = vmatprep.subr.mxu0 0.0
      %1334 = vmatpush1.msra.mxu0 0.0
      %1335 = vmatprep.subr.mxu0 0.0
      %1336 = vmatpush1.msra.mxu0 0.0
      %1337 = vmatprep.subr.mxu0 0.0
      %1338 = vmatpush1.msra.mxu0 0.0
      %1339 = vmatprep.subr.mxu0 0.0
      %1340 = vmatpush1.msra.mxu0 0.0
      %1341 = vmatprep.subr.mxu0 0.0
      %1342 = vmatpush1.msra.mxu0 0.0
      %1343 = vmatprep.subr.mxu0 0.0
      %1344 = vmatpush1.msra.mxu0 0.0
      %1345 = vmatprep.subr.mxu0 0.0
      %1346 = vmatpush1.msra.mxu0 0.0
      %1347 = vmatprep.subr.mxu0 0.0
      %1348 = vmatpush1.msra.mxu0 0.0
      %1349 = vmatprep.subr.mxu0 0.0
      %1350 = vmatpush1.msra.mxu0 0.0
      %1351 = vmatprep.subr.mxu0 0.0
      %1352 = vmatpush1.msra.mxu0 0.0
      %1353 = vmatprep.subr.mxu0 0.0
      %1354 = vmatpush1.msra.mxu0 0.0
      %1355 = vmatprep.subr.mxu0 0.0
      %1356 = vmatpush1.msra.mxu0 0.0
      %1357 = vmatprep.mubr.f32.mxu0 0.0
      %1358 = vmatmul.mubr.f32.gmra.mrb[0].mxu0 %v869
      %v1359 = vpop.f32.mrb[0].mxu0
      %v1360 = vadd.f32 %v1255, %v1359
      %v1361 = vpop.f32.mrb[0].mxu0
      %1362 = vmatprep.mubr.f32.mxu0 0.0
      %1363 = vmatmul.mubr.f32.gmra.mrb[0].mxu0 %v870
      %v1364 = vpop.f32.mrb[0].mxu0
      %v1365 = vadd.f32 %v1260, %v1364
      %v1366 = vpop.f32.mrb[0].mxu0
      %1367 = vmatprep.mubr.f32.mxu0 0.0
      %1368 = vmatmul.mubr.f32.gmra.mrb[0].mxu0 %v871
      %v1369 = vpop.f32.mrb[0].mxu0
      %v1370 = vadd.f32 %v1265, %v1369
      %v1371 = vpop.f32.mrb[0].mxu0
      %1372 = vmatprep.mubr.f32.mxu0 0.0
      %1373 = vmatmul.mubr.f32.gmra.mrb[0].mxu0 %v872
      %v1374 = vpop.f32.mrb[0].mxu0
      %v1375 = vadd.f32 %v1270, %v1374
      %v1376 = vpop.f32.mrb[0].mxu0
      %1377 = vmatprep.mubr.f32.mxu0 0.0
      %1378 = vmatmul.mubr.f32.gmra.mrb[0].mxu0 %v873
      %v1379 = vpop.f32.mrb[0].mxu0
      %v1380 = vadd.f32 %v1275, %v1379
      %v1381 = vpop.f32.mrb[0].mxu0
      %1382 = vmatprep.mubr.f32.mxu0 0.0
      %1383 = vmatmul.mubr.f32.gmra.mrb[0].mxu0 %v874
      %v1384 = vpop.f32.mrb[0].mxu0
      %v1385 = vadd.f32 %v1280, %v1384
      %v1386 = vpop.f32.mrb[0].mxu0
      %1387 = vmatprep.mubr.f32.mxu0 0.0
      %1388 = vmatmul.mubr.f32.gmra.mrb[0].mxu0 %v875
      %v1389 = vpop.f32.mrb[0].mxu0
      %v1390 = vadd.f32 %v1285, %v1389
      %v1391 = vpop.f32.mrb[0].mxu0
      %1392 = vmatprep.mubr.f32.mxu0 0.0
      %1393 = vmatmul.mubr.f32.gmra.mrb[0].mxu0 %v876
      %v1394 = vpop.f32.mrb[0].mxu0
      %v1395 = vadd.f32 %v1290, %v1394
      %v1396 = vpop.f32.mrb[0].mxu0
      %1397 = vdwg.mxu0
      %s1398 = scalar_lea.vmem %s5, 768
      %v1399 = vld [vmem:[%s1398] sm:$0xff]
      %v1400 = vld [vmem:[%s1398 + $0x8] sm:$0xff]
      %v1401 = vld [vmem:[%s1398 + $0x10] sm:$0xff]
      %v1402 = vld [vmem:[%s1398 + $0x18] sm:$0xff]
      %v1403 = vld [vmem:[%s1398 + $0x20] sm:$0xff]
      %v1404 = vld [vmem:[%s1398 + $0x28] sm:$0xff]
      %v1405 = vld [vmem:[%s1398 + $0x30] sm:$0xff]
      %v1406 = vld [vmem:[%s1398 + $0x38] sm:$0xff]
      %v1407 = vld [vmem:[%s1398 + $0x40] sm:$0xff]
      %v1408 = vld [vmem:[%s1398 + $0x48] sm:$0xff]
      %v1409 = vld [vmem:[%s1398 + $0x50] sm:$0xff]
      %v1410 = vld [vmem:[%s1398 + $0x58] sm:$0xff]
      %v1411 = vld [vmem:[%s1398 + $0x60] sm:$0xff]
      %v1412 = vld [vmem:[%s1398 + $0x68] sm:$0xff]
      %v1413 = vld [vmem:[%s1398 + $0x70] sm:$0xff]
      %v1414 = vld [vmem:[%s1398 + $0x78] sm:$0xff]
      %v1415 = vld [vmem:[%s1398 + $0x80] sm:$0xff]
      %v1416 = vld [vmem:[%s1398 + $0x88] sm:$0xff]
      %v1417 = vld [vmem:[%s1398 + $0x90] sm:$0xff]
      %v1418 = vld [vmem:[%s1398 + $0x98] sm:$0xff]
      %v1419 = vld [vmem:[%s1398 + $0xa0] sm:$0xff]
      %v1420 = vld [vmem:[%s1398 + $0xa8] sm:$0xff]
      %v1421 = vld [vmem:[%s1398 + $0xb0] sm:$0xff]
      %v1422 = vld [vmem:[%s1398 + $0xb8] sm:$0xff]
      %v1423 = vld [vmem:[%s1398 + $0xc0] sm:$0xff]
      %v1424 = vld [vmem:[%s1398 + $0xc8] sm:$0xff]
      %v1425 = vld [vmem:[%s1398 + $0xd0] sm:$0xff]
      %v1426 = vld [vmem:[%s1398 + $0xd8] sm:$0xff]
      %v1427 = vld [vmem:[%s1398 + $0xe0] sm:$0xff]
      %v1428 = vld [vmem:[%s1398 + $0xe8] sm:$0xff]
      %v1429 = vld [vmem:[%s1398 + $0xf0] sm:$0xff]
      %v1430 = vld [vmem:[%s1398 + $0xf8] sm:$0xff]
      %v1431 = vld [vmem:[%s1398 + $0x100] sm:$0xff]
      %v1432 = vld [vmem:[%s1398 + $0x108] sm:$0xff]
      %v1433 = vld [vmem:[%s1398 + $0x110] sm:$0xff]
      %v1434 = vld [vmem:[%s1398 + $0x118] sm:$0xff]
      %v1435 = vld [vmem:[%s1398 + $0x120] sm:$0xff]
      %v1436 = vld [vmem:[%s1398 + $0x128] sm:$0xff]
      %v1437 = vld [vmem:[%s1398 + $0x130] sm:$0xff]
      %v1438 = vld [vmem:[%s1398 + $0x138] sm:$0xff]
      %v1439 = vld [vmem:[%s1398 + $0x140] sm:$0xff]
      %v1440 = vld [vmem:[%s1398 + $0x148] sm:$0xff]
      %v1441 = vld [vmem:[%s1398 + $0x150] sm:$0xff]
      %v1442 = vld [vmem:[%s1398 + $0x158] sm:$0xff]
      %v1443 = vld [vmem:[%s1398 + $0x160] sm:$0xff]
      %v1444 = vld [vmem:[%s1398 + $0x168] sm:$0xff]
      %v1445 = vld [vmem:[%s1398 + $0x170] sm:$0xff]
      %v1446 = vld [vmem:[%s1398 + $0x178] sm:$0xff]
      %1447 = vmatprep.subr.mxu0 0.0
      %1448 = vmatpush1.msra.mxu0 %v1399
      %1449 = vmatprep.subr.mxu0 0.0
      %1450 = vmatpush1.msra.mxu0 %v1400
      %1451 = vmatprep.subr.mxu0 0.0
      %1452 = vmatpush1.msra.mxu0 %v1401
      %1453 = vmatprep.subr.mxu0 0.0
      %1454 = vmatpush1.msra.mxu0 %v1402
      %1455 = vmatprep.subr.mxu0 0.0
      %1456 = vmatpush1.msra.mxu0 %v1403
      %1457 = vmatprep.subr.mxu0 0.0
      %1458 = vmatpush1.msra.mxu0 %v1404
      %1459 = vmatprep.subr.mxu0 0.0
      %1460 = vmatpush1.msra.mxu0 %v1405
      %1461 = vmatprep.subr.mxu0 0.0
      %1462 = vmatpush1.msra.mxu0 %v1406
      %1463 = vmatprep.subr.mxu0 0.0
      %1464 = vmatpush1.msra.mxu0 %v1407
      %1465 = vmatprep.subr.mxu0 0.0
      %1466 = vmatpush1.msra.mxu0 %v1408
      %1467 = vmatprep.subr.mxu0 0.0
      %1468 = vmatpush1.msra.mxu0 %v1409
      %1469 = vmatprep.subr.mxu0 0.0
      %1470 = vmatpush1.msra.mxu0 %v1410
      %1471 = vmatprep.subr.mxu0 0.0
      %1472 = vmatpush1.msra.mxu0 %v1411
      %1473 = vmatprep.subr.mxu0 0.0
      %1474 = vmatpush1.msra.mxu0 %v1412
      %1475 = vmatprep.subr.mxu0 0.0
      %1476 = vmatpush1.msra.mxu0 %v1413
      %1477 = vmatprep.subr.mxu0 0.0
      %1478 = vmatpush1.msra.mxu0 %v1414
      %1479 = vmatprep.subr.mxu0 0.0
      %1480 = vmatpush1.msra.mxu0 %v1415
      %1481 = vmatprep.subr.mxu0 0.0
      %1482 = vmatpush1.msra.mxu0 %v1416
      %1483 = vmatprep.subr.mxu0 0.0
      %1484 = vmatpush1.msra.mxu0 %v1417
      %1485 = vmatprep.subr.mxu0 0.0
      %1486 = vmatpush1.msra.mxu0 %v1418
      %1487 = vmatprep.subr.mxu0 0.0
      %1488 = vmatpush1.msra.mxu0 %v1419
      %1489 = vmatprep.subr.mxu0 0.0
      %1490 = vmatpush1.msra.mxu0 %v1420
      %1491 = vmatprep.subr.mxu0 0.0
      %1492 = vmatpush1.msra.mxu0 %v1421
      %1493 = vmatprep.subr.mxu0 0.0
      %1494 = vmatpush1.msra.mxu0 %v1422
      %1495 = vmatprep.subr.mxu0 0.0
      %1496 = vmatpush1.msra.mxu0 %v1423
      %1497 = vmatprep.subr.mxu0 0.0
      %1498 = vmatpush1.msra.mxu0 %v1424
      %1499 = vmatprep.subr.mxu0 0.0
      %1500 = vmatpush1.msra.mxu0 %v1425
      %1501 = vmatprep.subr.mxu0 0.0
      %1502 = vmatpush1.msra.mxu0 %v1426
      %1503 = vmatprep.subr.mxu0 0.0
      %1504 = vmatpush1.msra.mxu0 %v1427
      %1505 = vmatprep.subr.mxu0 0.0
      %1506 = vmatpush1.msra.mxu0 %v1428
      %1507 = vmatprep.subr.mxu0 0.0
      %1508 = vmatpush1.msra.mxu0 %v1429
      %1509 = vmatprep.subr.mxu0 0.0
      %1510 = vmatpush1.msra.mxu0 %v1430
      %1511 = vmatprep.mubr.f32.mxu0 %v702
      %1512 = vmatmul.mubr.f32.gmra.mrb[0].mxu0 %v836
      %v1513 = vpop.f32.mrb[0].mxu0
      %v1514 = vadd.f32 0.0, %v1513
      %v1515 = vpop.f32.mrb[0].mxu0
      %1516 = vmatprep.mubr.f32.mxu0 %v703
      %1517 = vmatmul.mubr.f32.gmra.mrb[0].mxu0 %v837
      %v1518 = vpop.f32.mrb[0].mxu0
      %v1519 = vadd.f32 0.0, %v1518
      %v1520 = vpop.f32.mrb[0].mxu0
      %1521 = vmatprep.mubr.f32.mxu0 %v704
      %1522 = vmatmul.mubr.f32.gmra.mrb[0].mxu0 %v838
      %v1523 = vpop.f32.mrb[0].mxu0
      %v1524 = vadd.f32 0.0, %v1523
      %v1525 = vpop.f32.mrb[0].mxu0
      %1526 = vmatprep.mubr.f32.mxu0 %v705
      %1527 = vmatmul.mubr.f32.gmra.mrb[0].mxu0 %v839
      %v1528 = vpop.f32.mrb[0].mxu0
      %v1529 = vadd.f32 0.0, %v1528
      %v1530 = vpop.f32.mrb[0].mxu0
      %1531 = vmatprep.mubr.f32.mxu0 %v706
      %1532 = vmatmul.mubr.f32.gmra.mrb[0].mxu0 %v840
      %v1533 = vpop.f32.mrb[0].mxu0
      %v1534 = vadd.f32 0.0, %v1533
      %v1535 = vpop.f32.mrb[0].mxu0
      %1536 = vmatprep.mubr.f32.mxu0 %v707
      %1537 = vmatmul.mubr.f32.gmra.mrb[0].mxu0 %v841
      %v1538 = vpop.f32.mrb[0].mxu0
      %v1539 = vadd.f32 0.0, %v1538
      %v1540 = vpop.f32.mrb[0].mxu0
      %1541 = vmatprep.mubr.f32.mxu0 %v708
      %1542 = vmatmul.mubr.f32.gmra.mrb[0].mxu0 %v842
      %v1543 = vpop.f32.mrb[0].mxu0
      %v1544 = vadd.f32 0.0, %v1543
      %v1545 = vpop.f32.mrb[0].mxu0
      %1546 = vmatprep.mubr.f32.mxu0 %v709
      %1547 = vmatmul.mubr.f32.gmra.mrb[0].mxu0 %v843
      %v1548 = vpop.f32.mrb[0].mxu0
      %v1549 = vadd.f32 0.0, %v1548
      %v1550 = vpop.f32.mrb[0].mxu0
      %1551 = vdwg.mxu0
      %1552 = vmatprep.subr.mxu0 0.0
      %1553 = vmatpush1.msra.mxu0 %v1431
      %1554 = vmatprep.subr.mxu0 0.0
      %1555 = vmatpush1.msra.mxu0 %v1432
      %1556 = vmatprep.subr.mxu0 0.0
      %1557 = vmatpush1.msra.mxu0 %v1433
      %1558 = vmatprep.subr.mxu0 0.0
      %1559 = vmatpush1.msra.mxu0 %v1434
      %1560 = vmatprep.subr.mxu0 0.0
      %1561 = vmatpush1.msra.mxu0 %v1435
      %1562 = vmatprep.subr.mxu0 0.0
      %1563 = vmatpush1.msra.mxu0 %v1436
      %1564 = vmatprep.subr.mxu0 0.0
      %1565 = vmatpush1.msra.mxu0 %v1437
      %1566 = vmatprep.subr.mxu0 0.0
      %1567 = vmatpush1.msra.mxu0 %v1438
      %1568 = vmatprep.subr.mxu0 0.0
      %1569 = vmatpush1.msra.mxu0 %v1439
      %1570 = vmatprep.subr.mxu0 0.0
      %1571 = vmatpush1.msra.mxu0 %v1440
      %1572 = vmatprep.subr.mxu0 0.0
      %1573 = vmatpush1.msra.mxu0 %v1441
      %1574 = vmatprep.subr.mxu0 0.0
      %1575 = vmatpush1.msra.mxu0 %v1442
      %1576 = vmatprep.subr.mxu0 0.0
      %1577 = vmatpush1.msra.mxu0 %v1443
      %1578 = vmatprep.subr.mxu0 0.0
      %1579 = vmatpush1.msra.mxu0 %v1444
      %1580 = vmatprep.subr.mxu0 0.0
      %1581 = vmatpush1.msra.mxu0 %v1445
      %1582 = vmatprep.subr.mxu0 0.0
      %1583 = vmatpush1.msra.mxu0 %v1446
      %1584 = vmatprep.subr.mxu0 0.0
      %1585 = vmatpush1.msra.mxu0 0.0
      %1586 = vmatprep.subr.mxu0 0.0
      %1587 = vmatpush1.msra.mxu0 0.0
      %1588 = vmatprep.subr.mxu0 0.0
      %1589 = vmatpush1.msra.mxu0 0.0
      %1590 = vmatprep.subr.mxu0 0.0
      %1591 = vmatpush1.msra.mxu0 0.0
      %1592 = vmatprep.subr.mxu0 0.0
      %1593 = vmatpush1.msra.mxu0 0.0
      %1594 = vmatprep.subr.mxu0 0.0
      %1595 = vmatpush1.msra.mxu0 0.0
      %1596 = vmatprep.subr.mxu0 0.0
      %1597 = vmatpush1.msra.mxu0 0.0
      %1598 = vmatprep.subr.mxu0 0.0
      %1599 = vmatpush1.msra.mxu0 0.0
      %1600 = vmatprep.subr.mxu0 0.0
      %1601 = vmatpush1.msra.mxu0 0.0
      %1602 = vmatprep.subr.mxu0 0.0
      %1603 = vmatpush1.msra.mxu0 0.0
      %1604 = vmatprep.subr.mxu0 0.0
      %1605 = vmatpush1.msra.mxu0 0.0
      %1606 = vmatprep.subr.mxu0 0.0
      %1607 = vmatpush1.msra.mxu0 0.0
      %1608 = vmatprep.subr.mxu0 0.0
      %1609 = vmatpush1.msra.mxu0 0.0
      %1610 = vmatprep.subr.mxu0 0.0
      %1611 = vmatpush1.msra.mxu0 0.0
      %1612 = vmatprep.subr.mxu0 0.0
      %1613 = vmatpush1.msra.mxu0 0.0
      %1614 = vmatprep.subr.mxu0 0.0
      %1615 = vmatpush1.msra.mxu0 0.0
      %1616 = vmatprep.mubr.f32.mxu0 0.0
      %1617 = vmatmul.mubr.f32.gmra.mrb[0].mxu0 %v873
      %v1618 = vpop.f32.mrb[0].mxu0
      %v1619 = vadd.f32 %v1514, %v1618
      %v1620 = vpop.f32.mrb[0].mxu0
      %1621 = vmatprep.mubr.f32.mxu0 0.0
      %1622 = vmatmul.mubr.f32.gmra.mrb[0].mxu0 %v874
      %v1623 = vpop.f32.mrb[0].mxu0
      %v1624 = vadd.f32 %v1519, %v1623
      %v1625 = vpop.f32.mrb[0].mxu0
      %1626 = vmatprep.mubr.f32.mxu0 0.0
      %1627 = vmatmul.mubr.f32.gmra.mrb[0].mxu0 %v875
      %v1628 = vpop.f32.mrb[0].mxu0
      %v1629 = vadd.f32 %v1524, %v1628
      %v1630 = vpop.f32.mrb[0].mxu0
      %1631 = vmatprep.mubr.f32.mxu0 0.0
      %1632 = vmatmul.mubr.f32.gmra.mrb[0].mxu0 %v876
      %v1633 = vpop.f32.mrb[0].mxu0
      %v1634 = vadd.f32 %v1529, %v1633
      %v1635 = vpop.f32.mrb[0].mxu0
      %1636 = vmatprep.mubr.f32.mxu0 0.0
      %1637 = vmatmul.mubr.f32.gmra.mrb[0].mxu0 %v877
      %v1638 = vpop.f32.mrb[0].mxu0
      %v1639 = vadd.f32 %v1534, %v1638
      %v1640 = vpop.f32.mrb[0].mxu0
      %1641 = vmatprep.mubr.f32.mxu0 0.0
      %1642 = vmatmul.mubr.f32.gmra.mrb[0].mxu0 %v878
      %v1643 = vpop.f32.mrb[0].mxu0
      %v1644 = vadd.f32 %v1539, %v1643
      %v1645 = vpop.f32.mrb[0].mxu0
      %1646 = vmatprep.mubr.f32.mxu0 0.0
      %1647 = vmatmul.mubr.f32.gmra.mrb[0].mxu0 %v879
      %v1648 = vpop.f32.mrb[0].mxu0
      %v1649 = vadd.f32 %v1544, %v1648
      %v1650 = vpop.f32.mrb[0].mxu0
      %1651 = vmatprep.mubr.f32.mxu0 0.0
      %1652 = vmatmul.mubr.f32.gmra.mrb[0].mxu0 %v880
      %v1653 = vpop.f32.mrb[0].mxu0
      %v1654 = vadd.f32 %v1549, %v1653
      %v1655 = vpop.f32.mrb[0].mxu0
      %1656 = vdwg.mxu0
      %v1657 = vadd.f32 %v1360, %v1619
      %v1658 = vadd.f32 %v1365, %v1624
      %v1659 = vadd.f32 %v1370, %v1629
      %v1660 = vadd.f32 %v1375, %v1634
      %v1661 = vadd.f32 %v1380, %v1639
      %v1662 = vadd.f32 %v1385, %v1644
      %v1663 = vadd.f32 %v1390, %v1649
      %v1664 = vadd.f32 %v1395, %v1654
      %v1665 = vld [vmem:[%s6] sm:$0x1]
      %v1667 = vlaneseq
      %v1668 = vshrl.u32 %v1667, 7
      %v1669 = vsub.s32 0, %v1668
      %v1670 = vrot.slane %v1665, %v1669
      %v1672 = vadd.f32 %v1657, %v1670
      %v1673 = vadd.f32 %v1658, %v1670
      %v1674 = vadd.f32 %v1659, %v1670
      %v1675 = vadd.f32 %v1660, %v1670
      %v1676 = vadd.f32 %v1661, %v1670
      %v1677 = vadd.f32 %v1662, %v1670
      %v1678 = vadd.f32 %v1663, %v1670
      %v1679 = vadd.f32 %v1664, %v1670
      %v1680 = vmax.f32 %v1672, 0.0
      %v1681 = vmax.f32 %v1673, 0.0
      %v1682 = vmax.f32 %v1674, 0.0
      %v1683 = vmax.f32 %v1675, 0.0
      %v1684 = vmax.f32 %v1676, 0.0
      %v1685 = vmax.f32 %v1677, 0.0
      %v1686 = vmax.f32 %v1678, 0.0
      %v1687 = vmax.f32 %v1679, 0.0
      %v1688 = vld [vmem:[%s7] sm:$0xff]
      %v1689 = vld [vmem:[%s7 + $0x8] sm:$0xff]
      %v1690 = vld [vmem:[%s7 + $0x10] sm:$0xff]
      %v1691 = vld [vmem:[%s7 + $0x18] sm:$0xff]
      %v1692 = vld [vmem:[%s7 + $0x20] sm:$0xff]
      %v1693 = vld [vmem:[%s7 + $0x28] sm:$0xff]
      %v1694 = vld [vmem:[%s7 + $0x30] sm:$0xff]
      %v1695 = vld [vmem:[%s7 + $0x38] sm:$0xff]
      %v1696 = vld [vmem:[%s7 + $0x40] sm:$0xff]
      %v1697 = vld [vmem:[%s7 + $0x48] sm:$0xff]
      %v1698 = vld [vmem:[%s7 + $0x50] sm:$0xff]
      %v1699 = vld [vmem:[%s7 + $0x58] sm:$0xff]
      %v1700 = vld [vmem:[%s7 + $0x60] sm:$0xff]
      %v1701 = vld [vmem:[%s7 + $0x68] sm:$0xff]
      %v1702 = vld [vmem:[%s7 + $0x70] sm:$0xff]
      %v1703 = vld [vmem:[%s7 + $0x78] sm:$0xff]
      %v1704 = vld [vmem:[%s8] sm:$0x1]
      %v1706 = vlaneseq
      %v1707 = vshrl.u32 %v1706, 7
      %v1708 = vsub.s32 0, %v1707
      %v1709 = vrot.slane %v1704, %v1708
      %1711 = vmatprep.subr.mxu0 0.0
      %1712 = vmatpush1.msra.mxu0 %v1688
      %1713 = vmatprep.subr.mxu0 0.0
      %1714 = vmatpush1.msra.mxu0 %v1689
      %1715 = vmatprep.subr.mxu0 0.0
      %1716 = vmatpush1.msra.mxu0 %v1690
      %1717 = vmatprep.subr.mxu0 0.0
      %1718 = vmatpush1.msra.mxu0 %v1691
      %1719 = vmatprep.subr.mxu0 0.0
      %1720 = vmatpush1.msra.mxu0 %v1692
      %1721 = vmatprep.subr.mxu0 0.0
      %1722 = vmatpush1.msra.mxu0 %v1693
      %1723 = vmatprep.subr.mxu0 0.0
      %1724 = vmatpush1.msra.mxu0 %v1694
      %1725 = vmatprep.subr.mxu0 0.0
      %1726 = vmatpush1.msra.mxu0 %v1695
      %1727 = vmatprep.subr.mxu0 0.0
      %1728 = vmatpush1.msra.mxu0 %v1696
      %1729 = vmatprep.subr.mxu0 0.0
      %1730 = vmatpush1.msra.mxu0 %v1697
      %1731 = vmatprep.subr.mxu0 0.0
      %1732 = vmatpush1.msra.mxu0 %v1698
      %1733 = vmatprep.subr.mxu0 0.0
      %1734 = vmatpush1.msra.mxu0 %v1699
      %1735 = vmatprep.subr.mxu0 0.0
      %1736 = vmatpush1.msra.mxu0 %v1700
      %1737 = vmatprep.subr.mxu0 0.0
      %1738 = vmatpush1.msra.mxu0 %v1701
      %1739 = vmatprep.subr.mxu0 0.0
      %1740 = vmatpush1.msra.mxu0 %v1702
      %1741 = vmatprep.subr.mxu0 0.0
      %1742 = vmatpush1.msra.mxu0 %v1703
      %1743 = vmatprep.subr.mxu0 0.0
      %1744 = vmatpush1.msra.mxu0 0.0
      %1745 = vmatprep.subr.mxu0 0.0
      %1746 = vmatpush1.msra.mxu0 0.0
      %1747 = vmatprep.subr.mxu0 0.0
      %1748 = vmatpush1.msra.mxu0 0.0
      %1749 = vmatprep.subr.mxu0 0.0
      %1750 = vmatpush1.msra.mxu0 0.0
      %1751 = vmatprep.subr.mxu0 0.0
      %1752 = vmatpush1.msra.mxu0 0.0
      %1753 = vmatprep.subr.mxu0 0.0
      %1754 = vmatpush1.msra.mxu0 0.0
      %1755 = vmatprep.subr.mxu0 0.0
      %1756 = vmatpush1.msra.mxu0 0.0
      %1757 = vmatprep.subr.mxu0 0.0
      %1758 = vmatpush1.msra.mxu0 0.0
      %1759 = vmatprep.subr.mxu0 0.0
      %1760 = vmatpush1.msra.mxu0 0.0
      %1761 = vmatprep.subr.mxu0 0.0
      %1762 = vmatpush1.msra.mxu0 0.0
      %1763 = vmatprep.subr.mxu0 0.0
      %1764 = vmatpush1.msra.mxu0 0.0
      %1765 = vmatprep.subr.mxu0 0.0
      %1766 = vmatpush1.msra.mxu0 0.0
      %1767 = vmatprep.subr.mxu0 0.0
      %1768 = vmatpush1.msra.mxu0 0.0
      %1769 = vmatprep.subr.mxu0 0.0
      %1770 = vmatpush1.msra.mxu0 0.0
      %1771 = vmatprep.subr.mxu0 0.0
      %1772 = vmatpush1.msra.mxu0 0.0
      %1773 = vmatprep.subr.mxu0 0.0
      %1774 = vmatpush1.msra.mxu0 0.0
      %1775 = vmatprep.mubr.f32.mxu0 0.0
      %1776 = vmatmul.mubr.f32.gmra.mrb[0].mxu0 %v1680
      %v1777 = vpop.f32.mrb[0].mxu0
      %v1778 = vadd.f32 %v1709, %v1777
      %v1779 = vpop.f32.mrb[0].mxu0
      %1780 = vmatprep.mubr.f32.mxu0 0.0
      %1781 = vmatmul.mubr.f32.gmra.mrb[0].mxu0 %v1681
      %v1782 = vpop.f32.mrb[0].mxu0
      %v1783 = vadd.f32 %v1709, %v1782
      %v1784 = vpop.f32.mrb[0].mxu0
      %1785 = vmatprep.mubr.f32.mxu0 0.0
      %1786 = vmatmul.mubr.f32.gmra.mrb[0].mxu0 %v1682
      %v1787 = vpop.f32.mrb[0].mxu0
      %v1788 = vadd.f32 %v1709, %v1787
      %v1789 = vpop.f32.mrb[0].mxu0
      %1790 = vmatprep.mubr.f32.mxu0 0.0
      %1791 = vmatmul.mubr.f32.gmra.mrb[0].mxu0 %v1683
      %v1792 = vpop.f32.mrb[0].mxu0
      %v1793 = vadd.f32 %v1709, %v1792
      %v1794 = vpop.f32.mrb[0].mxu0
      %1795 = vmatprep.mubr.f32.mxu0 0.0
      %1796 = vmatmul.mubr.f32.gmra.mrb[0].mxu0 %v1684
      %v1797 = vpop.f32.mrb[0].mxu0
      %v1798 = vadd.f32 %v1709, %v1797
      %v1799 = vpop.f32.mrb[0].mxu0
      %1800 = vmatprep.mubr.f32.mxu0 0.0
      %1801 = vmatmul.mubr.f32.gmra.mrb[0].mxu0 %v1685
      %v1802 = vpop.f32.mrb[0].mxu0
      %v1803 = vadd.f32 %v1709, %v1802
      %v1804 = vpop.f32.mrb[0].mxu0
      %1805 = vmatprep.mubr.f32.mxu0 0.0
      %1806 = vmatmul.mubr.f32.gmra.mrb[0].mxu0 %v1686
      %v1807 = vpop.f32.mrb[0].mxu0
      %v1808 = vadd.f32 %v1709, %v1807
      %v1809 = vpop.f32.mrb[0].mxu0
      %1810 = vmatprep.mubr.f32.mxu0 0.0
      %1811 = vmatmul.mubr.f32.gmra.mrb[0].mxu0 %v1687
      %v1812 = vpop.f32.mrb[0].mxu0
      %v1813 = vadd.f32 %v1709, %v1812
      %v1814 = vpop.f32.mrb[0].mxu0
      %1815 = vdwg.mxu0
      %v1816 = vadd.f32 %v1778, %v500
      %v1817 = vadd.f32 %v1783, %v501
      %v1818 = vadd.f32 %v1788, %v502
      %v1819 = vadd.f32 %v1793, %v503
      %v1820 = vadd.f32 %v1798, %v504
      %v1821 = vadd.f32 %v1803, %v505
      %v1822 = vadd.f32 %v1808, %v506
      %v1823 = vadd.f32 %v1813, %v507
      %v1824 = vmax.f32 %v1816, 0.0
      %v1825 = vmax.f32 %v1817, 0.0
      %v1826 = vmax.f32 %v1818, 0.0
      %v1827 = vmax.f32 %v1819, 0.0
      %v1828 = vmax.f32 %v1820, 0.0
      %v1829 = vmax.f32 %v1821, 0.0
      %v1830 = vmax.f32 %v1822, 0.0
      %v1831 = vmax.f32 %v1823, 0.0
      %1832 = vst.msk [vmem:[%s498] sm:$0xff] %vm532, %v1824
      %1833 = vst.msk [vmem:[%s498 + $0x8] sm:$0xff] %vm532, %v1825
      %1834 = vst.msk [vmem:[%s498 + $0x10] sm:$0xff] %vm532, %v1826
      %1835 = vst.msk [vmem:[%s498 + $0x18] sm:$0xff] %vm532, %v1827
      %1836 = vst.msk [vmem:[%s498 + $0x20] sm:$0xff] %vm532, %v1828
      %1837 = vst.msk [vmem:[%s498 + $0x28] sm:$0xff] %vm532, %v1829
      %1838 = vst.msk [vmem:[%s498 + $0x30] sm:$0xff] %vm532, %v1830
      %1839 = vst.msk [vmem:[%s498 + $0x38] sm:$0xff] %vm532, %v1831
      %s1840 = smul.u32 8, %s25
      %p1841 = scmp.lt.s32.totalorder %s24, 1
      %s1842 = scalar_select %p1841, %s24, 1
      %p1843 = scmp.lt.s32.totalorder %s1840, 31
      %s1844 = scalar_select %p1843, %s1840, 31
      %s1845 = smul.addr %s1842, 32
      %s1846 = sadd.s32 %s1844, %s1845
      %s1847 = smul.addr %s1846, 8
      %s1848 = scalar_lea.vmem %s9, %s1847
      // Predicated region
      $region57: #{tpu_custom_call.1} parent=55 // pred_check
        %p1849 = pneg %p278
      $region58: #{tpu_custom_call.1} parent=55 // pred_check_branch
        %1851 = sbr.rel (%p1849) target = $region60
      $region59: #{tpu_custom_call.1} parent=55 // pred_region
        %s1852 = smul.u32 8, %s25
      $region60: #{tpu_custom_call.1} parent=55 // pred_fallthru
        _
    $region56: #{tpu_custom_call.1} parent=5 // pred_fallthru
      _
    %p1853 = scmp.le.s32.totalorder 2, %s15
    // Predicated region
    $region61: #{tpu_custom_call.1} parent=5 // pred_check
      %p1854 = pneg %p1853
    $region62: #{tpu_custom_call.1} parent=5 // pred_check_branch
      %1856 = sbr.rel (%p1854) target = $region64
    $region63: #{tpu_custom_call.1} parent=5 // pred_region
      %s1857 = ssub.s32 %s15, 2
      // Predicated region
      $region65: #{tpu_custom_call.1} parent=63 // pred_check
        %p1858 = pneg %p284
      $region66: #{tpu_custom_call.1} parent=63 // pred_check_branch
        %1860 = sbr.rel (%p1858) target = $region68
      $region67: #{tpu_custom_call.1} parent=63 // pred_region
        %s1861 = smul.u32 8, %s27
        %p1862 = scmp.lt.s32.totalorder %s26, 1
        %s1863 = scalar_select %p1862, %s26, 1
        %p1864 = scmp.lt.s32.totalorder %s1861, 31
        %s1865 = scalar_select %p1864, %s1861, 31
        %s1866 = smul.addr %s1863, 32
        %s1867 = sadd.s32 %s1865, %s1866
        %s1868 = smul.addr %s1867, 8
        %s1869 = scalar_lea.vmem %s9, %s1868
      $region68: #{tpu_custom_call.1} parent=63 // pred_fallthru
        _
    $region64: #{tpu_custom_call.1} parent=5 // pred_fallthru
      _
  $region6: #{tpu_custom_call.1} parent=0 // loop_footer
    %s19 = sadd.s32 1, %s15
  $region7: #{tpu_custom_call.1} parent=0 // loop_footer_branch
    %14 = sbr.rel target = $region3
  $region8: #{tpu_custom_call.1} parent=0 // loop_exit
    _

</llo_original>
